<compile_context>
chip_gen: v5e
topology: v5e:2x2
jax: 0.10.0
libtpu: 0.0.40
codegen_flags: <defaults>
</compile_context>

<pallas_src>
import math
import numpy as np
import jax
import jax.numpy as jnp
from jax.experimental import pallas as pl
from jax.experimental.pallas import tpu as pltpu

MXU_DTYPE = jnp.bfloat16  # MXU operand dtype (accumulation stays f32)


def make_attention_kernel(num_heads: int, head_dim: int, block_b: int,
                          seq_pad: int, seq_valid: int):
    H, hd, Bt, N = num_heads, head_dim, block_b, seq_pad
    C = H * hd
    T = Bt * N
    NEG = jnp.float32(-1e30)

    def kernel(x_ref, wq_ref, wk_ref, wv_ref, wp_ref, bp_ref, o_ref, acc_ref):
        # x_ref: (Bt, N, C) bf16; weights bf16; bias f32 (1, C);
        # o_ref: (Bt, N, C); acc_ref: (T, C) f32 VMEM scratch (fused head-merge acc).

        # (Bt, N, C) -> (T, C) is layout-free: wrapper pads N to a multiple of 8.
        x2 = x_ref[...].reshape(T, C)

        # --- full-width QKV projections (scale already folded into W_q) ---
        # bf16 MXU operands, f32 accumulation; cast back to bf16 immediately so the
        # f32 copies never stay live alongside the bf16 ones.
        q = jnp.dot(x2, wq_ref[...], preferred_element_type=jnp.float32).astype(MXU_DTYPE)
        k = jnp.dot(x2, wk_ref[...], preferred_element_type=jnp.float32).astype(MXU_DTYPE)
        v = jnp.dot(x2, wv_ref[...], preferred_element_type=jnp.float32).astype(MXU_DTYPE)
        qb = q.reshape(Bt, N, C)
        kb = k.reshape(Bt, N, C)
        vb = v.reshape(Bt, N, C)

        acc_ref[...] = jnp.zeros((T, C), jnp.float32)

        if seq_valid < N:  # only traced when the wrapper actually padded N
            kmask = jax.lax.broadcasted_iota(jnp.int32, (N, N), 1) < seq_valid

        # --- per-head attention, head merge fused into the output projection ---
        for h in range(H):
            lo = h * hd
            qh = qb[:, :, lo:lo + hd]          # (Bt, N, hd) bf16
            kh = kb[:, :, lo:lo + hd]
            vh = vb[:, :, lo:lo + hd]

            # scores: contract head_dim directly (batched, no explicit transpose)
            s = jnp.einsum("bnd,bmd->bnm", qh, kh,
                           preferred_element_type=jnp.float32)      # (Bt, N, N) f32
            if seq_valid < N:
                s = jnp.where(kmask[None, :, :], s, NEG)

            # numerically-stable softmax statistics in f32, normalization deferred
            s = s - jnp.max(s, axis=-1, keepdims=True)
            p = jnp.exp(s)
            denom = jnp.sum(p, axis=-1, keepdims=True)              # (Bt, N, 1)

            yh = jnp.einsum("bnm,bmd->bnd", p.astype(MXU_DTYPE), vh,
                            preferred_element_type=jnp.float32)     # (Bt, N, hd) f32
            # deferred normalization: (N x hd) multiply instead of (N x N)
            yh = yh * pl.reciprocal(denom, approx=True)

            # fused head merge: project this head straight into the (T, C) accumulator
            acc_ref[...] += jnp.dot(
                yh.reshape(T, hd).astype(MXU_DTYPE),
                wp_ref[lo:lo + hd, :],
                preferred_element_type=jnp.float32)

        out = acc_ref[...] + bp_ref[...]                            # (T, C) + (1, C)
        o_ref[...] = out.reshape(Bt, N, C).astype(o_ref.dtype)

    return kernel


def _vmem_capacity_bytes():
    try:
        return int(pltpu.get_tpu_info().vmem_capacity_bytes)
    except Exception:
        return 64 * 1024 * 1024  # conservative: v7x per-TensorCore VMEM


def _is_multi_tensorcore():
    """Chips whose TensorCores share one JAX device (megacore): v4 / v5p / v7x."""
    try:
        kind = jax.devices()[0].device_kind.lower()
    except Exception:
        return False
    return ("v4" in kind) or ("v5p" in kind) or ("7" in kind)


def _per_step_vmem_bytes(bt, n, c, hd):
    t = bt * n
    io = 2 * t * c * 2 + 2 * t * c * 4        # double-buffered bf16 x in + f32 out blocks
    qkv = 3 * t * c * (4 + 2)                  # q/k/v f32 dot results + bf16 copies
    attn = 2 * bt * n * n * 4 + bt * n * hd * 4  # one head's scores + probs (f32) + P@V
    acc = t * c * 4                            # fused head-merge accumulator scratch
    return io + qkv + attn + acc


def _choose_block_b(B, n_pad, C, hd, budget_bytes, multi_tc):
    # Weights counted double-buffered to stay conservative even if pl.Buffered(1)
    # falls back to the default pipelining.
    w_bytes = 2 * (4 * C * C * 2 + C * 4)
    feasible = []
    for d in range(1, B + 1):
        if B % d:
            continue
        if multi_tc and B >= 2 and B // d < 2:   # keep both TensorCores busy
            continue
        if w_bytes + _per_step_vmem_bytes(d, n_pad, C, hd) <= budget_bytes:
            feasible.append(d)
    if not feasible:
        return 1
    if multi_tc:
        even = [d for d in feasible if (B // d) % 2 == 0]
        if even:
            return max(even)
    return max(feasible)


def attention_pallas(x, w_qkv, w_proj, b_proj, num_heads: int, block_b=None):
    B, N, C = x.shape
    assert C % num_heads == 0
    hd = C // num_heads
    scale = hd ** (-0.5)
    orig_dtype = x.dtype

    # One-time weight prep: split qkv, fold scale into W_q, cast MXU operands to bf16.
    w_q = (w_qkv[:, 0 * C:1 * C] * scale).astype(MXU_DTYPE)
    w_k = w_qkv[:, 1 * C:2 * C].astype(MXU_DTYPE)
    w_v = w_qkv[:, 2 * C:3 * C].astype(MXU_DTYPE)
    w_p = w_proj.astype(MXU_DTYPE)
    b_p = jnp.reshape(b_proj, (1, C)).astype(jnp.float32)

    # Pad N to a multiple of 8 (sublane) so in-kernel reshapes are layout-free;
    # padded key columns are masked inside the kernel, padded query rows sliced off.
    n_pad = ((N + 7) // 8) * 8
    x_in = x.astype(MXU_DTYPE)
    if n_pad != N:
        x_in = jnp.pad(x_in, ((0, 0), (0, n_pad - N), (0, 0)))

    vmem_cap = _vmem_capacity_bytes()
    vmem_limit = int(0.8 * vmem_cap)
    multi_tc = _is_multi_tensorcore()

    if block_b is None:
        block_b = _choose_block_b(B, n_pad, C, hd, int(0.5 * vmem_cap), multi_tc)
    assert B % block_b == 0
    grid = (B // block_b,)

    kernel = make_attention_kernel(num_heads, hd, block_b, n_pad, N)

    def _weight_spec(shape, single_buffer):
        if single_buffer:
            # Constant index_map -> block never changes; single buffer halves its VMEM.
            return pl.BlockSpec(shape, lambda b: (0,) * len(shape),
                                pipeline_mode=pl.Buffered(1))
        return pl.BlockSpec(shape, lambda b: (0,) * len(shape))

    def _build(single_buffer_weights):
        return pl.pallas_call(
            kernel,
            out_shape=jax.ShapeDtypeStruct((B, n_pad, C), orig_dtype),
            grid=grid,
            in_specs=[
                pl.BlockSpec((block_b, n_pad, C), lambda b: (b, 0, 0)),  # x (batch block)
                _weight_spec((C, C), single_buffer_weights),             # W_q (scaled)
                _weight_spec((C, C), single_buffer_weights),             # W_k
                _weight_spec((C, C), single_buffer_weights),             # W_v
                _weight_spec((C, C), single_buffer_weights),             # W_proj
                _weight_spec((1, C), single_buffer_weights),             # b_proj
            ],
            out_specs=pl.BlockSpec((block_b, n_pad, C), lambda b: (b, 0, 0)),
            scratch_shapes=[pltpu.VMEM((block_b * n_pad, C), jnp.float32)],  # fused acc
            compiler_params=pltpu.CompilerParams(
                dimension_semantics=("parallel",),
                vmem_limit_bytes=vmem_limit),
        )

    args = (x_in, w_q, w_k, w_v, w_p, b_p)
    try:
        out = _build(True)(*args)
    except Exception:
        # Fallback if single-buffering via pl.Buffered(1) is unsupported on this stack.
        out = _build(False)(*args)

    if n_pad != N:
        out = out[:, :N, :]
    return out


def attention_ref(x, w_qkv, w_proj, b_proj, num_heads: int, mxu_dtype=None):
    """Pure-JAX reference for the PyTorch Attention forward.

    mxu_dtype=None     -> exact f32 math (module semantics).
    mxu_dtype=bfloat16 -> mirrors the kernel's matmul-operand casts (f32 accumulation).
    """
    B, N, C = x.shape
    hd = C // num_heads
    scale = hd ** (-0.5)
    cast = (lambda a: a) if mxu_dtype is None else (lambda a: a.astype(mxu_dtype))

    w_q = w_qkv[:, 0 * C:1 * C] * scale
    w_k = w_qkv[:, 1 * C:2 * C]
    w_v = w_qkv[:, 2 * C:3 * C]

    x2 = x.reshape(B * N, C)
    q = jnp.dot(cast(x2), cast(w_q), preferred_element_type=jnp.float32).reshape(B, N, num_heads, hd)
    k = jnp.dot(cast(x2), cast(w_k), preferred_element_type=jnp.float32).reshape(B, N, num_heads, hd)
    v = jnp.dot(cast(x2), cast(w_v), preferred_element_type=jnp.float32).reshape(B, N, num_heads, hd)

    s = jnp.einsum("bnhd,bmhd->bhnm", cast(q), cast(k), preferred_element_type=jnp.float32)
    s = s - jnp.max(s, axis=-1, keepdims=True)
    p = jnp.exp(s)
    p = p / jnp.sum(p, axis=-1, keepdims=True)
    y = jnp.einsum("bhnm,bmhd->bnhd", cast(p), cast(v), preferred_element_type=jnp.float32)
    y = y.reshape(B * N, C)
    out = jnp.dot(cast(y), cast(w_proj), preferred_element_type=jnp.float32) + b_proj.reshape(1, C)
    return out.reshape(B, N, C)


if __name__ == "__main__":
    B, N, C = 2, 8, 32
    num_heads = 8          # module default
    dtype = jnp.float32

    key = jax.random.PRNGKey(0)
    kx, kqkv, kproj, kb = jax.random.split(key, 4)

    # deterministic synthetic parameters (qkv_bias=False -> no qkv bias)
    x = jax.random.normal(kx, (B, N, C), dtype)
    w_qkv = jax.random.normal(kqkv, (C, 3 * C), dtype) * (1.0 / math.sqrt(C))
    w_proj = jax.random.normal(kproj, (C, C), dtype) * (1.0 / math.sqrt(C))
    b_proj = jax.random.normal(kb, (1, C), dtype) * 0.02

    out = attention_pallas(x, w_qkv, w_proj, b_proj, num_heads)
    out = jax.block_until_ready(out)
    out_np = np.asarray(out)

    # 1) check against a reference that mirrors the kernel's precision choices
    ref_mx = attention_ref(x, w_qkv, w_proj, b_proj, num_heads, mxu_dtype=MXU_DTYPE)
    np.testing.assert_allclose(out_np, np.asarray(ref_mx), rtol=2e-2, atol=2e-2)

    # 2) check against the exact f32 module semantics (tolerance sized for bf16 operands)
    ref_f32 = attention_ref(x, w_qkv, w_proj, b_proj, num_heads, mxu_dtype=None)
    np.testing.assert_allclose(out_np, np.asarray(ref_f32), rtol=7e-2, atol=7e-2)

    print("KERNEL_OK")
</pallas_src>

<mosaic_0001>
module attributes {stable_mosaic.version = 11 : i64} {
  func.func @kernel(%arg0: i32, %arg1: memref<2x8x32xbf16, #tpu.memory_space<vmem>>, %arg2: memref<32x32xbf16, #tpu.memory_space<vmem>>, %arg3: memref<32x32xbf16, #tpu.memory_space<vmem>>, %arg4: memref<32x32xbf16, #tpu.memory_space<vmem>>, %arg5: memref<32x32xbf16, #tpu.memory_space<vmem>>, %arg6: memref<1x32xf32, #tpu.memory_space<vmem>>, %arg7: memref<2x8x32xf32, #tpu.memory_space<vmem>>, %arg8: memref<16x32xf32, #tpu.memory_space<vmem>>) attributes {dimension_semantics = [#tpu.dimension_semantics<parallel>], iteration_bounds = array<i64: 1>, scalar_prefetch = 0 : i64, scratch_operands = 1 : i64, tpu.core_type = #tpu.core_type<tc>, window_params = [{transform_indices = @transform_0, window_bounds = array<i64: 2, 8, 32>}, {pipeline_mode = #tpu.pipeline_mode<synchronous>, transform_indices = @transform_1, window_bounds = array<i64: 32, 32>}, {pipeline_mode = #tpu.pipeline_mode<synchronous>, transform_indices = @transform_2, window_bounds = array<i64: 32, 32>}, {pipeline_mode = #tpu.pipeline_mode<synchronous>, transform_indices = @transform_3, window_bounds = array<i64: 32, 32>}, {pipeline_mode = #tpu.pipeline_mode<synchronous>, transform_indices = @transform_4, window_bounds = array<i64: 32, 32>}, {pipeline_mode = #tpu.pipeline_mode<synchronous>, transform_indices = @transform_5, window_bounds = array<i64: 1, 32>}, {transform_indices = @transform_6, window_bounds = array<i64: 2, 8, 32>}]} {
    %c0 = arith.constant 0 : index
    %c0_0 = arith.constant 0 : index
    %c0_1 = arith.constant 0 : index
    %0 = vector.load %arg1[%c0, %c0_0, %c0_1] : memref<2x8x32xbf16, #tpu.memory_space<vmem>>, vector<2x8x32xbf16>
    %1 = vector.shape_cast %0 : vector<2x8x32xbf16> to vector<16x32xbf16>
    %c0_2 = arith.constant 0 : index
    %c0_3 = arith.constant 0 : index
    %2 = vector.load %arg2[%c0_2, %c0_3] : memref<32x32xbf16, #tpu.memory_space<vmem>>, vector<32x32xbf16>
    %cst = arith.constant dense<0.000000e+00> : vector<16x32xf32>
    %3 = tpu.matmul %1, %2, %cst {dimension_numbers = #tpu.dot_dimension_numbers<[1], [0], [0], [1], [0, 0, 1, 1], [], []>} : vector<16x32xbf16>, vector<32x32xbf16>, vector<16x32xf32> -> vector<16x32xf32>
    %4 = arith.truncf %3 : vector<16x32xf32> to vector<16x32xbf16>
    %c0_4 = arith.constant 0 : index
    %c0_5 = arith.constant 0 : index
    %5 = vector.load %arg3[%c0_4, %c0_5] : memref<32x32xbf16, #tpu.memory_space<vmem>>, vector<32x32xbf16>
    %cst_6 = arith.constant dense<0.000000e+00> : vector<16x32xf32>
    %6 = tpu.matmul %1, %5, %cst_6 {dimension_numbers = #tpu.dot_dimension_numbers<[1], [0], [0], [1], [0, 0, 1, 1], [], []>} : vector<16x32xbf16>, vector<32x32xbf16>, vector<16x32xf32> -> vector<16x32xf32>
    %7 = arith.truncf %6 : vector<16x32xf32> to vector<16x32xbf16>
    %c0_7 = arith.constant 0 : index
    %c0_8 = arith.constant 0 : index
    %8 = vector.load %arg4[%c0_7, %c0_8] : memref<32x32xbf16, #tpu.memory_space<vmem>>, vector<32x32xbf16>
    %cst_9 = arith.constant dense<0.000000e+00> : vector<16x32xf32>
    %9 = tpu.matmul %1, %8, %cst_9 {dimension_numbers = #tpu.dot_dimension_numbers<[1], [0], [0], [1], [0, 0, 1, 1], [], []>} : vector<16x32xbf16>, vector<32x32xbf16>, vector<16x32xf32> -> vector<16x32xf32>
    %10 = arith.truncf %9 : vector<16x32xf32> to vector<16x32xbf16>
    %11 = vector.shape_cast %4 : vector<16x32xbf16> to vector<2x8x32xbf16>
    %12 = vector.shape_cast %7 : vector<16x32xbf16> to vector<2x8x32xbf16>
    %13 = vector.shape_cast %10 : vector<16x32xbf16> to vector<2x8x32xbf16>
    %cst_10 = arith.constant 0.000000e+00 : f32
    %14 = vector.broadcast %cst_10 : f32 to vector<16x32xf32>
    %c0_11 = arith.constant 0 : index
    %c0_12 = arith.constant 0 : index
    %15 = vector.load %arg8[%c0_11, %c0_12] : memref<16x32xf32, #tpu.memory_space<vmem>>, vector<16x32xf32>
    tpu.vector_store %arg8[%c0_11, %c0_12], %14 {strides = array<i32>} : memref<16x32xf32, #tpu.memory_space<vmem>>, vector<16x32xf32>,
    %16 = vector.extract_strided_slice %11 {offsets = [0, 0, 0], sizes = [2, 8, 4], strides = [1, 1, 1]} : vector<2x8x32xbf16> to vector<2x8x4xbf16>
    %17 = vector.extract_strided_slice %12 {offsets = [0, 0, 0], sizes = [2, 8, 4], strides = [1, 1, 1]} : vector<2x8x32xbf16> to vector<2x8x4xbf16>
    %18 = vector.extract_strided_slice %13 {offsets = [0, 0, 0], sizes = [2, 8, 4], strides = [1, 1, 1]} : vector<2x8x32xbf16> to vector<2x8x4xbf16>
    "tpu.trace_start"() <{level = 10 : i32, message = "bnd,bmd->bnm"}> : () -> ()
    %cst_13 = arith.constant dense<0.000000e+00> : vector<2x8x8xf32>
    %19 = tpu.matmul %16, %17, %cst_13 {dimension_numbers = #tpu.dot_dimension_numbers<[2], [2], [1], [1], [0, 0, 0, 1, 1, 1], [0], [0]>} : vector<2x8x4xbf16>, vector<2x8x4xbf16>, vector<2x8x8xf32> -> vector<2x8x8xf32>
    "tpu.trace_stop"() : () -> ()
    %cst_14 = arith.constant dense<0xFF800000> : vector<2x8xf32>
    %20 = vector.multi_reduction <maximumf>, %19, %cst_14 [2] : vector<2x8x8xf32> to vector<2x8xf32>
    %21 = vector.shape_cast %20 : vector<2x8xf32> to vector<2x8x1xf32>
    %22 = vector.broadcast %21 : vector<2x8x1xf32> to vector<2x8x8xf32>
    %23 = arith.subf %19, %22 : vector<2x8x8xf32>
    %24 = math.exp %23 : vector<2x8x8xf32>
    %cst_15 = arith.constant dense<0.000000e+00> : vector<2x8xf32>
    %25 = vector.multi_reduction <add>, %24, %cst_15 [2] : vector<2x8x8xf32> to vector<2x8xf32>
    %26 = vector.shape_cast %25 : vector<2x8xf32> to vector<2x8x1xf32>
    %27 = arith.truncf %24 : vector<2x8x8xf32> to vector<2x8x8xbf16>
    "tpu.trace_start"() <{level = 10 : i32, message = "bnm,bmd->bnd"}> : () -> ()
    %cst_16 = arith.constant dense<0.000000e+00> : vector<2x8x4xf32>
    %28 = tpu.matmul %27, %18, %cst_16 {dimension_numbers = #tpu.dot_dimension_numbers<[2], [1], [1], [2], [0, 0, 0, 1, 1, 2], [0], [0]>} : vector<2x8x8xbf16>, vector<2x8x4xbf16>, vector<2x8x4xf32> -> vector<2x8x4xf32>
    "tpu.trace_stop"() : () -> ()
    %29 = tpu.reciprocal %26 {approx = true} : vector<2x8x1xf32> -> vector<2x8x1xf32>
    %30 = vector.broadcast %29 : vector<2x8x1xf32> to vector<2x8x4xf32>
    %31 = arith.mulf %28, %30 : vector<2x8x4xf32>
    %c0_17 = arith.constant 0 : index
    %c0_18 = arith.constant 0 : index
    %32 = vector.load %arg8[%c0_17, %c0_18] : memref<16x32xf32, #tpu.memory_space<vmem>>, vector<16x32xf32>
    %33 = vector.shape_cast %31 : vector<2x8x4xf32> to vector<16x4xf32>
    %34 = arith.truncf %33 : vector<16x4xf32> to vector<16x4xbf16>
    %c0_19 = arith.constant 0 : index
    %c0_20 = arith.constant 0 : index
    %35 = vector.load %arg5[%c0_19, %c0_20] : memref<32x32xbf16, #tpu.memory_space<vmem>>, vector<4x32xbf16>
    %cst_21 = arith.constant dense<0.000000e+00> : vector<16x32xf32>
    %36 = tpu.matmul %34, %35, %cst_21 {dimension_numbers = #tpu.dot_dimension_numbers<[1], [0], [0], [1], [0, 0, 1, 1], [], []>} : vector<16x4xbf16>, vector<4x32xbf16>, vector<16x32xf32> -> vector<16x32xf32>
    %37 = arith.addf %32, %36 : vector<16x32xf32>
    %c0_22 = arith.constant 0 : index
    %c0_23 = arith.constant 0 : index
    %38 = vector.load %arg8[%c0_22, %c0_23] : memref<16x32xf32, #tpu.memory_space<vmem>>, vector<16x32xf32>
    tpu.vector_store %arg8[%c0_22, %c0_23], %37 {strides = array<i32>} : memref<16x32xf32, #tpu.memory_space<vmem>>, vector<16x32xf32>,
    %39 = vector.extract_strided_slice %11 {offsets = [0, 0, 4], sizes = [2, 8, 4], strides = [1, 1, 1]} : vector<2x8x32xbf16> to vector<2x8x4xbf16>
    %40 = vector.extract_strided_slice %12 {offsets = [0, 0, 4], sizes = [2, 8, 4], strides = [1, 1, 1]} : vector<2x8x32xbf16> to vector<2x8x4xbf16>
    %41 = vector.extract_strided_slice %13 {offsets = [0, 0, 4], sizes = [2, 8, 4], strides = [1, 1, 1]} : vector<2x8x32xbf16> to vector<2x8x4xbf16>
    "tpu.trace_start"() <{level = 10 : i32, message = "bnd,bmd->bnm"}> : () -> ()
    %cst_24 = arith.constant dense<0.000000e+00> : vector<2x8x8xf32>
    %42 = tpu.matmul %39, %40, %cst_24 {dimension_numbers = #tpu.dot_dimension_numbers<[2], [2], [1], [1], [0, 0, 0, 1, 1, 1], [0], [0]>} : vector<2x8x4xbf16>, vector<2x8x4xbf16>, vector<2x8x8xf32> -> vector<2x8x8xf32>
    "tpu.trace_stop"() : () -> ()
    %cst_25 = arith.constant dense<0xFF800000> : vector<2x8xf32>
    %43 = vector.multi_reduction <maximumf>, %42, %cst_25 [2] : vector<2x8x8xf32> to vector<2x8xf32>
    %44 = vector.shape_cast %43 : vector<2x8xf32> to vector<2x8x1xf32>
    %45 = vector.broadcast %44 : vector<2x8x1xf32> to vector<2x8x8xf32>
    %46 = arith.subf %42, %45 : vector<2x8x8xf32>
    %47 = math.exp %46 : vector<2x8x8xf32>
    %cst_26 = arith.constant dense<0.000000e+00> : vector<2x8xf32>
    %48 = vector.multi_reduction <add>, %47, %cst_26 [2] : vector<2x8x8xf32> to vector<2x8xf32>
    %49 = vector.shape_cast %48 : vector<2x8xf32> to vector<2x8x1xf32>
    %50 = arith.truncf %47 : vector<2x8x8xf32> to vector<2x8x8xbf16>
    "tpu.trace_start"() <{level = 10 : i32, message = "bnm,bmd->bnd"}> : () -> ()
    %cst_27 = arith.constant dense<0.000000e+00> : vector<2x8x4xf32>
    %51 = tpu.matmul %50, %41, %cst_27 {dimension_numbers = #tpu.dot_dimension_numbers<[2], [1], [1], [2], [0, 0, 0, 1, 1, 2], [0], [0]>} : vector<2x8x8xbf16>, vector<2x8x4xbf16>, vector<2x8x4xf32> -> vector<2x8x4xf32>
    "tpu.trace_stop"() : () -> ()
    %52 = tpu.reciprocal %49 {approx = true} : vector<2x8x1xf32> -> vector<2x8x1xf32>
    %53 = vector.broadcast %52 : vector<2x8x1xf32> to vector<2x8x4xf32>
    %54 = arith.mulf %51, %53 : vector<2x8x4xf32>
    %c0_28 = arith.constant 0 : index
    %c0_29 = arith.constant 0 : index
    %55 = vector.load %arg8[%c0_28, %c0_29] : memref<16x32xf32, #tpu.memory_space<vmem>>, vector<16x32xf32>
    %56 = vector.shape_cast %54 : vector<2x8x4xf32> to vector<16x4xf32>
    %57 = arith.truncf %56 : vector<16x4xf32> to vector<16x4xbf16>
    %c4 = arith.constant 4 : index
    %c0_30 = arith.constant 0 : index
    %58 = vector.load %arg5[%c4, %c0_30] : memref<32x32xbf16, #tpu.memory_space<vmem>>, vector<4x32xbf16>
    %cst_31 = arith.constant dense<0.000000e+00> : vector<16x32xf32>
    %59 = tpu.matmul %57, %58, %cst_31 {dimension_numbers = #tpu.dot_dimension_numbers<[1], [0], [0], [1], [0, 0, 1, 1], [], []>} : vector<16x4xbf16>, vector<4x32xbf16>, vector<16x32xf32> -> vector<16x32xf32>
    %60 = arith.addf %55, %59 : vector<16x32xf32>
    %c0_32 = arith.constant 0 : index
    %c0_33 = arith.constant 0 : index
    %61 = vector.load %arg8[%c0_32, %c0_33] : memref<16x32xf32, #tpu.memory_space<vmem>>, vector<16x32xf32>
    tpu.vector_store %arg8[%c0_32, %c0_33], %60 {strides = array<i32>} : memref<16x32xf32, #tpu.memory_space<vmem>>, vector<16x32xf32>,
    %62 = vector.extract_strided_slice %11 {offsets = [0, 0, 8], sizes = [2, 8, 4], strides = [1, 1, 1]} : vector<2x8x32xbf16> to vector<2x8x4xbf16>
    %63 = vector.extract_strided_slice %12 {offsets = [0, 0, 8], sizes = [2, 8, 4], strides = [1, 1, 1]} : vector<2x8x32xbf16> to vector<2x8x4xbf16>
    %64 = vector.extract_strided_slice %13 {offsets = [0, 0, 8], sizes = [2, 8, 4], strides = [1, 1, 1]} : vector<2x8x32xbf16> to vector<2x8x4xbf16>
    "tpu.trace_start"() <{level = 10 : i32, message = "bnd,bmd->bnm"}> : () -> ()
    %cst_34 = arith.constant dense<0.000000e+00> : vector<2x8x8xf32>
    %65 = tpu.matmul %62, %63, %cst_34 {dimension_numbers = #tpu.dot_dimension_numbers<[2], [2], [1], [1], [0, 0, 0, 1, 1, 1], [0], [0]>} : vector<2x8x4xbf16>, vector<2x8x4xbf16>, vector<2x8x8xf32> -> vector<2x8x8xf32>
    "tpu.trace_stop"() : () -> ()
    %cst_35 = arith.constant dense<0xFF800000> : vector<2x8xf32>
    %66 = vector.multi_reduction <maximumf>, %65, %cst_35 [2] : vector<2x8x8xf32> to vector<2x8xf32>
    %67 = vector.shape_cast %66 : vector<2x8xf32> to vector<2x8x1xf32>
    %68 = vector.broadcast %67 : vector<2x8x1xf32> to vector<2x8x8xf32>
    %69 = arith.subf %65, %68 : vector<2x8x8xf32>
    %70 = math.exp %69 : vector<2x8x8xf32>
    %cst_36 = arith.constant dense<0.000000e+00> : vector<2x8xf32>
    %71 = vector.multi_reduction <add>, %70, %cst_36 [2] : vector<2x8x8xf32> to vector<2x8xf32>
    %72 = vector.shape_cast %71 : vector<2x8xf32> to vector<2x8x1xf32>
    %73 = arith.truncf %70 : vector<2x8x8xf32> to vector<2x8x8xbf16>
    "tpu.trace_start"() <{level = 10 : i32, message = "bnm,bmd->bnd"}> : () -> ()
    %cst_37 = arith.constant dense<0.000000e+00> : vector<2x8x4xf32>
    %74 = tpu.matmul %73, %64, %cst_37 {dimension_numbers = #tpu.dot_dimension_numbers<[2], [1], [1], [2], [0, 0, 0, 1, 1, 2], [0], [0]>} : vector<2x8x8xbf16>, vector<2x8x4xbf16>, vector<2x8x4xf32> -> vector<2x8x4xf32>
    "tpu.trace_stop"() : () -> ()
    %75 = tpu.reciprocal %72 {approx = true} : vector<2x8x1xf32> -> vector<2x8x1xf32>
    %76 = vector.broadcast %75 : vector<2x8x1xf32> to vector<2x8x4xf32>
    %77 = arith.mulf %74, %76 : vector<2x8x4xf32>
    %c0_38 = arith.constant 0 : index
    %c0_39 = arith.constant 0 : index
    %78 = vector.load %arg8[%c0_38, %c0_39] : memref<16x32xf32, #tpu.memory_space<vmem>>, vector<16x32xf32>
    %79 = vector.shape_cast %77 : vector<2x8x4xf32> to vector<16x4xf32>
    %80 = arith.truncf %79 : vector<16x4xf32> to vector<16x4xbf16>
    %c8 = arith.constant 8 : index
    %c0_40 = arith.constant 0 : index
    %81 = vector.load %arg5[%c8, %c0_40] : memref<32x32xbf16, #tpu.memory_space<vmem>>, vector<4x32xbf16>
    %cst_41 = arith.constant dense<0.000000e+00> : vector<16x32xf32>
    %82 = tpu.matmul %80, %81, %cst_41 {dimension_numbers = #tpu.dot_dimension_numbers<[1], [0], [0], [1], [0, 0, 1, 1], [], []>} : vector<16x4xbf16>, vector<4x32xbf16>, vector<16x32xf32> -> vector<16x32xf32>
    %83 = arith.addf %78, %82 : vector<16x32xf32>
    %c0_42 = arith.constant 0 : index
    %c0_43 = arith.constant 0 : index
    %84 = vector.load %arg8[%c0_42, %c0_43] : memref<16x32xf32, #tpu.memory_space<vmem>>, vector<16x32xf32>
    tpu.vector_store %arg8[%c0_42, %c0_43], %83 {strides = array<i32>} : memref<16x32xf32, #tpu.memory_space<vmem>>, vector<16x32xf32>,
    %85 = vector.extract_strided_slice %11 {offsets = [0, 0, 12], sizes = [2, 8, 4], strides = [1, 1, 1]} : vector<2x8x32xbf16> to vector<2x8x4xbf16>
    %86 = vector.extract_strided_slice %12 {offsets = [0, 0, 12], sizes = [2, 8, 4], strides = [1, 1, 1]} : vector<2x8x32xbf16> to vector<2x8x4xbf16>
    %87 = vector.extract_strided_slice %13 {offsets = [0, 0, 12], sizes = [2, 8, 4], strides = [1, 1, 1]} : vector<2x8x32xbf16> to vector<2x8x4xbf16>
    "tpu.trace_start"() <{level = 10 : i32, message = "bnd,bmd->bnm"}> : () -> ()
    %cst_44 = arith.constant dense<0.000000e+00> : vector<2x8x8xf32>
    %88 = tpu.matmul %85, %86, %cst_44 {dimension_numbers = #tpu.dot_dimension_numbers<[2], [2], [1], [1], [0, 0, 0, 1, 1, 1], [0], [0]>} : vector<2x8x4xbf16>, vector<2x8x4xbf16>, vector<2x8x8xf32> -> vector<2x8x8xf32>
    "tpu.trace_stop"() : () -> ()
    %cst_45 = arith.constant dense<0xFF800000> : vector<2x8xf32>
    %89 = vector.multi_reduction <maximumf>, %88, %cst_45 [2] : vector<2x8x8xf32> to vector<2x8xf32>
    %90 = vector.shape_cast %89 : vector<2x8xf32> to vector<2x8x1xf32>
    %91 = vector.broadcast %90 : vector<2x8x1xf32> to vector<2x8x8xf32>
    %92 = arith.subf %88, %91 : vector<2x8x8xf32>
    %93 = math.exp %92 : vector<2x8x8xf32>
    %cst_46 = arith.constant dense<0.000000e+00> : vector<2x8xf32>
    %94 = vector.multi_reduction <add>, %93, %cst_46 [2] : vector<2x8x8xf32> to vector<2x8xf32>
    %95 = vector.shape_cast %94 : vector<2x8xf32> to vector<2x8x1xf32>
    %96 = arith.truncf %93 : vector<2x8x8xf32> to vector<2x8x8xbf16>
    "tpu.trace_start"() <{level = 10 : i32, message = "bnm,bmd->bnd"}> : () -> ()
    %cst_47 = arith.constant dense<0.000000e+00> : vector<2x8x4xf32>
    %97 = tpu.matmul %96, %87, %cst_47 {dimension_numbers = #tpu.dot_dimension_numbers<[2], [1], [1], [2], [0, 0, 0, 1, 1, 2], [0], [0]>} : vector<2x8x8xbf16>, vector<2x8x4xbf16>, vector<2x8x4xf32> -> vector<2x8x4xf32>
    "tpu.trace_stop"() : () -> ()
    %98 = tpu.reciprocal %95 {approx = true} : vector<2x8x1xf32> -> vector<2x8x1xf32>
    %99 = vector.broadcast %98 : vector<2x8x1xf32> to vector<2x8x4xf32>
    %100 = arith.mulf %97, %99 : vector<2x8x4xf32>
    %c0_48 = arith.constant 0 : index
    %c0_49 = arith.constant 0 : index
    %101 = vector.load %arg8[%c0_48, %c0_49] : memref<16x32xf32, #tpu.memory_space<vmem>>, vector<16x32xf32>
    %102 = vector.shape_cast %100 : vector<2x8x4xf32> to vector<16x4xf32>
    %103 = arith.truncf %102 : vector<16x4xf32> to vector<16x4xbf16>
    %c12 = arith.constant 12 : index
    %c0_50 = arith.constant 0 : index
    %104 = vector.load %arg5[%c12, %c0_50] : memref<32x32xbf16, #tpu.memory_space<vmem>>, vector<4x32xbf16>
    %cst_51 = arith.constant dense<0.000000e+00> : vector<16x32xf32>
    %105 = tpu.matmul %103, %104, %cst_51 {dimension_numbers = #tpu.dot_dimension_numbers<[1], [0], [0], [1], [0, 0, 1, 1], [], []>} : vector<16x4xbf16>, vector<4x32xbf16>, vector<16x32xf32> -> vector<16x32xf32>
    %106 = arith.addf %101, %105 : vector<16x32xf32>
    %c0_52 = arith.constant 0 : index
    %c0_53 = arith.constant 0 : index
    %107 = vector.load %arg8[%c0_52, %c0_53] : memref<16x32xf32, #tpu.memory_space<vmem>>, vector<16x32xf32>
    tpu.vector_store %arg8[%c0_52, %c0_53], %106 {strides = array<i32>} : memref<16x32xf32, #tpu.memory_space<vmem>>, vector<16x32xf32>,
    %108 = vector.extract_strided_slice %11 {offsets = [0, 0, 16], sizes = [2, 8, 4], strides = [1, 1, 1]} : vector<2x8x32xbf16> to vector<2x8x4xbf16>
    %109 = vector.extract_strided_slice %12 {offsets = [0, 0, 16], sizes = [2, 8, 4], strides = [1, 1, 1]} : vector<2x8x32xbf16> to vector<2x8x4xbf16>
    %110 = vector.extract_strided_slice %13 {offsets = [0, 0, 16], sizes = [2, 8, 4], strides = [1, 1, 1]} : vector<2x8x32xbf16> to vector<2x8x4xbf16>
    "tpu.trace_start"() <{level = 10 : i32, message = "bnd,bmd->bnm"}> : () -> ()
    %cst_54 = arith.constant dense<0.000000e+00> : vector<2x8x8xf32>
    %111 = tpu.matmul %108, %109, %cst_54 {dimension_numbers = #tpu.dot_dimension_numbers<[2], [2], [1], [1], [0, 0, 0, 1, 1, 1], [0], [0]>} : vector<2x8x4xbf16>, vector<2x8x4xbf16>, vector<2x8x8xf32> -> vector<2x8x8xf32>
    "tpu.trace_stop"() : () -> ()
    %cst_55 = arith.constant dense<0xFF800000> : vector<2x8xf32>
    %112 = vector.multi_reduction <maximumf>, %111, %cst_55 [2] : vector<2x8x8xf32> to vector<2x8xf32>
    %113 = vector.shape_cast %112 : vector<2x8xf32> to vector<2x8x1xf32>
    %114 = vector.broadcast %113 : vector<2x8x1xf32> to vector<2x8x8xf32>
    %115 = arith.subf %111, %114 : vector<2x8x8xf32>
    %116 = math.exp %115 : vector<2x8x8xf32>
    %cst_56 = arith.constant dense<0.000000e+00> : vector<2x8xf32>
    %117 = vector.multi_reduction <add>, %116, %cst_56 [2] : vector<2x8x8xf32> to vector<2x8xf32>
    %118 = vector.shape_cast %117 : vector<2x8xf32> to vector<2x8x1xf32>
    %119 = arith.truncf %116 : vector<2x8x8xf32> to vector<2x8x8xbf16>
    "tpu.trace_start"() <{level = 10 : i32, message = "bnm,bmd->bnd"}> : () -> ()
    %cst_57 = arith.constant dense<0.000000e+00> : vector<2x8x4xf32>
    %120 = tpu.matmul %119, %110, %cst_57 {dimension_numbers = #tpu.dot_dimension_numbers<[2], [1], [1], [2], [0, 0, 0, 1, 1, 2], [0], [0]>} : vector<2x8x8xbf16>, vector<2x8x4xbf16>, vector<2x8x4xf32> -> vector<2x8x4xf32>
    "tpu.trace_stop"() : () -> ()
    %121 = tpu.reciprocal %118 {approx = true} : vector<2x8x1xf32> -> vector<2x8x1xf32>
    %122 = vector.broadcast %121 : vector<2x8x1xf32> to vector<2x8x4xf32>
    %123 = arith.mulf %120, %122 : vector<2x8x4xf32>
    %c0_58 = arith.constant 0 : index
    %c0_59 = arith.constant 0 : index
    %124 = vector.load %arg8[%c0_58, %c0_59] : memref<16x32xf32, #tpu.memory_space<vmem>>, vector<16x32xf32>
    %125 = vector.shape_cast %123 : vector<2x8x4xf32> to vector<16x4xf32>
    %126 = arith.truncf %125 : vector<16x4xf32> to vector<16x4xbf16>
    %c16 = arith.constant 16 : index
    %c0_60 = arith.constant 0 : index
    %127 = vector.load %arg5[%c16, %c0_60] : memref<32x32xbf16, #tpu.memory_space<vmem>>, vector<4x32xbf16>
    %cst_61 = arith.constant dense<0.000000e+00> : vector<16x32xf32>
    %128 = tpu.matmul %126, %127, %cst_61 {dimension_numbers = #tpu.dot_dimension_numbers<[1], [0], [0], [1], [0, 0, 1, 1], [], []>} : vector<16x4xbf16>, vector<4x32xbf16>, vector<16x32xf32> -> vector<16x32xf32>
    %129 = arith.addf %124, %128 : vector<16x32xf32>
    %c0_62 = arith.constant 0 : index
    %c0_63 = arith.constant 0 : index
    %130 = vector.load %arg8[%c0_62, %c0_63] : memref<16x32xf32, #tpu.memory_space<vmem>>, vector<16x32xf32>
    tpu.vector_store %arg8[%c0_62, %c0_63], %129 {strides = array<i32>} : memref<16x32xf32, #tpu.memory_space<vmem>>, vector<16x32xf32>,
    %131 = vector.extract_strided_slice %11 {offsets = [0, 0, 20], sizes = [2, 8, 4], strides = [1, 1, 1]} : vector<2x8x32xbf16> to vector<2x8x4xbf16>
    %132 = vector.extract_strided_slice %12 {offsets = [0, 0, 20], sizes = [2, 8, 4], strides = [1, 1, 1]} : vector<2x8x32xbf16> to vector<2x8x4xbf16>
    %133 = vector.extract_strided_slice %13 {offsets = [0, 0, 20], sizes = [2, 8, 4], strides = [1, 1, 1]} : vector<2x8x32xbf16> to vector<2x8x4xbf16>
    "tpu.trace_start"() <{level = 10 : i32, message = "bnd,bmd->bnm"}> : () -> ()
    %cst_64 = arith.constant dense<0.000000e+00> : vector<2x8x8xf32>
    %134 = tpu.matmul %131, %132, %cst_64 {dimension_numbers = #tpu.dot_dimension_numbers<[2], [2], [1], [1], [0, 0, 0, 1, 1, 1], [0], [0]>} : vector<2x8x4xbf16>, vector<2x8x4xbf16>, vector<2x8x8xf32> -> vector<2x8x8xf32>
    "tpu.trace_stop"() : () -> ()
    %cst_65 = arith.constant dense<0xFF800000> : vector<2x8xf32>
    %135 = vector.multi_reduction <maximumf>, %134, %cst_65 [2] : vector<2x8x8xf32> to vector<2x8xf32>
    %136 = vector.shape_cast %135 : vector<2x8xf32> to vector<2x8x1xf32>
    %137 = vector.broadcast %136 : vector<2x8x1xf32> to vector<2x8x8xf32>
    %138 = arith.subf %134, %137 : vector<2x8x8xf32>
    %139 = math.exp %138 : vector<2x8x8xf32>
    %cst_66 = arith.constant dense<0.000000e+00> : vector<2x8xf32>
    %140 = vector.multi_reduction <add>, %139, %cst_66 [2] : vector<2x8x8xf32> to vector<2x8xf32>
    %141 = vector.shape_cast %140 : vector<2x8xf32> to vector<2x8x1xf32>
    %142 = arith.truncf %139 : vector<2x8x8xf32> to vector<2x8x8xbf16>
    "tpu.trace_start"() <{level = 10 : i32, message = "bnm,bmd->bnd"}> : () -> ()
    %cst_67 = arith.constant dense<0.000000e+00> : vector<2x8x4xf32>
    %143 = tpu.matmul %142, %133, %cst_67 {dimension_numbers = #tpu.dot_dimension_numbers<[2], [1], [1], [2], [0, 0, 0, 1, 1, 2], [0], [0]>} : vector<2x8x8xbf16>, vector<2x8x4xbf16>, vector<2x8x4xf32> -> vector<2x8x4xf32>
    "tpu.trace_stop"() : () -> ()
    %144 = tpu.reciprocal %141 {approx = true} : vector<2x8x1xf32> -> vector<2x8x1xf32>
    %145 = vector.broadcast %144 : vector<2x8x1xf32> to vector<2x8x4xf32>
    %146 = arith.mulf %143, %145 : vector<2x8x4xf32>
    %c0_68 = arith.constant 0 : index
    %c0_69 = arith.constant 0 : index
    %147 = vector.load %arg8[%c0_68, %c0_69] : memref<16x32xf32, #tpu.memory_space<vmem>>, vector<16x32xf32>
    %148 = vector.shape_cast %146 : vector<2x8x4xf32> to vector<16x4xf32>
    %149 = arith.truncf %148 : vector<16x4xf32> to vector<16x4xbf16>
    %c20 = arith.constant 20 : index
    %c0_70 = arith.constant 0 : index
    %150 = vector.load %arg5[%c20, %c0_70] : memref<32x32xbf16, #tpu.memory_space<vmem>>, vector<4x32xbf16>
    %cst_71 = arith.constant dense<0.000000e+00> : vector<16x32xf32>
    %151 = tpu.matmul %149, %150, %cst_71 {dimension_numbers = #tpu.dot_dimension_numbers<[1], [0], [0], [1], [0, 0, 1, 1], [], []>} : vector<16x4xbf16>, vector<4x32xbf16>, vector<16x32xf32> -> vector<16x32xf32>
    %152 = arith.addf %147, %151 : vector<16x32xf32>
    %c0_72 = arith.constant 0 : index
    %c0_73 = arith.constant 0 : index
    %153 = vector.load %arg8[%c0_72, %c0_73] : memref<16x32xf32, #tpu.memory_space<vmem>>, vector<16x32xf32>
    tpu.vector_store %arg8[%c0_72, %c0_73], %152 {strides = array<i32>} : memref<16x32xf32, #tpu.memory_space<vmem>>, vector<16x32xf32>,
    %154 = vector.extract_strided_slice %11 {offsets = [0, 0, 24], sizes = [2, 8, 4], strides = [1, 1, 1]} : vector<2x8x32xbf16> to vector<2x8x4xbf16>
    %155 = vector.extract_strided_slice %12 {offsets = [0, 0, 24], sizes = [2, 8, 4], strides = [1, 1, 1]} : vector<2x8x32xbf16> to vector<2x8x4xbf16>
    %156 = vector.extract_strided_slice %13 {offsets = [0, 0, 24], sizes = [2, 8, 4], strides = [1, 1, 1]} : vector<2x8x32xbf16> to vector<2x8x4xbf16>
    "tpu.trace_start"() <{level = 10 : i32, message = "bnd,bmd->bnm"}> : () -> ()
    %cst_74 = arith.constant dense<0.000000e+00> : vector<2x8x8xf32>
    %157 = tpu.matmul %154, %155, %cst_74 {dimension_numbers = #tpu.dot_dimension_numbers<[2], [2], [1], [1], [0, 0, 0, 1, 1, 1], [0], [0]>} : vector<2x8x4xbf16>, vector<2x8x4xbf16>, vector<2x8x8xf32> -> vector<2x8x8xf32>
    "tpu.trace_stop"() : () -> ()
    %cst_75 = arith.constant dense<0xFF800000> : vector<2x8xf32>
    %158 = vector.multi_reduction <maximumf>, %157, %cst_75 [2] : vector<2x8x8xf32> to vector<2x8xf32>
    %159 = vector.shape_cast %158 : vector<2x8xf32> to vector<2x8x1xf32>
    %160 = vector.broadcast %159 : vector<2x8x1xf32> to vector<2x8x8xf32>
    %161 = arith.subf %157, %160 : vector<2x8x8xf32>
    %162 = math.exp %161 : vector<2x8x8xf32>
    %cst_76 = arith.constant dense<0.000000e+00> : vector<2x8xf32>
    %163 = vector.multi_reduction <add>, %162, %cst_76 [2] : vector<2x8x8xf32> to vector<2x8xf32>
    %164 = vector.shape_cast %163 : vector<2x8xf32> to vector<2x8x1xf32>
    %165 = arith.truncf %162 : vector<2x8x8xf32> to vector<2x8x8xbf16>
    "tpu.trace_start"() <{level = 10 : i32, message = "bnm,bmd->bnd"}> : () -> ()
    %cst_77 = arith.constant dense<0.000000e+00> : vector<2x8x4xf32>
    %166 = tpu.matmul %165, %156, %cst_77 {dimension_numbers = #tpu.dot_dimension_numbers<[2], [1], [1], [2], [0, 0, 0, 1, 1, 2], [0], [0]>} : vector<2x8x8xbf16>, vector<2x8x4xbf16>, vector<2x8x4xf32> -> vector<2x8x4xf32>
    "tpu.trace_stop"() : () -> ()
    %167 = tpu.reciprocal %164 {approx = true} : vector<2x8x1xf32> -> vector<2x8x1xf32>
    %168 = vector.broadcast %167 : vector<2x8x1xf32> to vector<2x8x4xf32>
    %169 = arith.mulf %166, %168 : vector<2x8x4xf32>
    %c0_78 = arith.constant 0 : index
    %c0_79 = arith.constant 0 : index
    %170 = vector.load %arg8[%c0_78, %c0_79] : memref<16x32xf32, #tpu.memory_space<vmem>>, vector<16x32xf32>
    %171 = vector.shape_cast %169 : vector<2x8x4xf32> to vector<16x4xf32>
    %172 = arith.truncf %171 : vector<16x4xf32> to vector<16x4xbf16>
    %c24 = arith.constant 24 : index
    %c0_80 = arith.constant 0 : index
    %173 = vector.load %arg5[%c24, %c0_80] : memref<32x32xbf16, #tpu.memory_space<vmem>>, vector<4x32xbf16>
    %cst_81 = arith.constant dense<0.000000e+00> : vector<16x32xf32>
    %174 = tpu.matmul %172, %173, %cst_81 {dimension_numbers = #tpu.dot_dimension_numbers<[1], [0], [0], [1], [0, 0, 1, 1], [], []>} : vector<16x4xbf16>, vector<4x32xbf16>, vector<16x32xf32> -> vector<16x32xf32>
    %175 = arith.addf %170, %174 : vector<16x32xf32>
    %c0_82 = arith.constant 0 : index
    %c0_83 = arith.constant 0 : index
    %176 = vector.load %arg8[%c0_82, %c0_83] : memref<16x32xf32, #tpu.memory_space<vmem>>, vector<16x32xf32>
    tpu.vector_store %arg8[%c0_82, %c0_83], %175 {strides = array<i32>} : memref<16x32xf32, #tpu.memory_space<vmem>>, vector<16x32xf32>,
    %177 = vector.extract_strided_slice %11 {offsets = [0, 0, 28], sizes = [2, 8, 4], strides = [1, 1, 1]} : vector<2x8x32xbf16> to vector<2x8x4xbf16>
    %178 = vector.extract_strided_slice %12 {offsets = [0, 0, 28], sizes = [2, 8, 4], strides = [1, 1, 1]} : vector<2x8x32xbf16> to vector<2x8x4xbf16>
    %179 = vector.extract_strided_slice %13 {offsets = [0, 0, 28], sizes = [2, 8, 4], strides = [1, 1, 1]} : vector<2x8x32xbf16> to vector<2x8x4xbf16>
    "tpu.trace_start"() <{level = 10 : i32, message = "bnd,bmd->bnm"}> : () -> ()
    %cst_84 = arith.constant dense<0.000000e+00> : vector<2x8x8xf32>
    %180 = tpu.matmul %177, %178, %cst_84 {dimension_numbers = #tpu.dot_dimension_numbers<[2], [2], [1], [1], [0, 0, 0, 1, 1, 1], [0], [0]>} : vector<2x8x4xbf16>, vector<2x8x4xbf16>, vector<2x8x8xf32> -> vector<2x8x8xf32>
    "tpu.trace_stop"() : () -> ()
    %cst_85 = arith.constant dense<0xFF800000> : vector<2x8xf32>
    %181 = vector.multi_reduction <maximumf>, %180, %cst_85 [2] : vector<2x8x8xf32> to vector<2x8xf32>
    %182 = vector.shape_cast %181 : vector<2x8xf32> to vector<2x8x1xf32>
    %183 = vector.broadcast %182 : vector<2x8x1xf32> to vector<2x8x8xf32>
    %184 = arith.subf %180, %183 : vector<2x8x8xf32>
    %185 = math.exp %184 : vector<2x8x8xf32>
    %cst_86 = arith.constant dense<0.000000e+00> : vector<2x8xf32>
    %186 = vector.multi_reduction <add>, %185, %cst_86 [2] : vector<2x8x8xf32> to vector<2x8xf32>
    %187 = vector.shape_cast %186 : vector<2x8xf32> to vector<2x8x1xf32>
    %188 = arith.truncf %185 : vector<2x8x8xf32> to vector<2x8x8xbf16>
    "tpu.trace_start"() <{level = 10 : i32, message = "bnm,bmd->bnd"}> : () -> ()
    %cst_87 = arith.constant dense<0.000000e+00> : vector<2x8x4xf32>
    %189 = tpu.matmul %188, %179, %cst_87 {dimension_numbers = #tpu.dot_dimension_numbers<[2], [1], [1], [2], [0, 0, 0, 1, 1, 2], [0], [0]>} : vector<2x8x8xbf16>, vector<2x8x4xbf16>, vector<2x8x4xf32> -> vector<2x8x4xf32>
    "tpu.trace_stop"() : () -> ()
    %190 = tpu.reciprocal %187 {approx = true} : vector<2x8x1xf32> -> vector<2x8x1xf32>
    %191 = vector.broadcast %190 : vector<2x8x1xf32> to vector<2x8x4xf32>
    %192 = arith.mulf %189, %191 : vector<2x8x4xf32>
    %c0_88 = arith.constant 0 : index
    %c0_89 = arith.constant 0 : index
    %193 = vector.load %arg8[%c0_88, %c0_89] : memref<16x32xf32, #tpu.memory_space<vmem>>, vector<16x32xf32>
    %194 = vector.shape_cast %192 : vector<2x8x4xf32> to vector<16x4xf32>
    %195 = arith.truncf %194 : vector<16x4xf32> to vector<16x4xbf16>
    %c28 = arith.constant 28 : index
    %c0_90 = arith.constant 0 : index
    %196 = vector.load %arg5[%c28, %c0_90] : memref<32x32xbf16, #tpu.memory_space<vmem>>, vector<4x32xbf16>
    %cst_91 = arith.constant dense<0.000000e+00> : vector<16x32xf32>
    %197 = tpu.matmul %195, %196, %cst_91 {dimension_numbers = #tpu.dot_dimension_numbers<[1], [0], [0], [1], [0, 0, 1, 1], [], []>} : vector<16x4xbf16>, vector<4x32xbf16>, vector<16x32xf32> -> vector<16x32xf32>
    %198 = arith.addf %193, %197 : vector<16x32xf32>
    %c0_92 = arith.constant 0 : index
    %c0_93 = arith.constant 0 : index
    %199 = vector.load %arg8[%c0_92, %c0_93] : memref<16x32xf32, #tpu.memory_space<vmem>>, vector<16x32xf32>
    tpu.vector_store %arg8[%c0_92, %c0_93], %198 {strides = array<i32>} : memref<16x32xf32, #tpu.memory_space<vmem>>, vector<16x32xf32>,
    %c0_94 = arith.constant 0 : index
    %c0_95 = arith.constant 0 : index
    %200 = vector.load %arg8[%c0_94, %c0_95] : memref<16x32xf32, #tpu.memory_space<vmem>>, vector<16x32xf32>
    %c0_96 = arith.constant 0 : index
    %c0_97 = arith.constant 0 : index
    %201 = vector.load %arg6[%c0_96, %c0_97] : memref<1x32xf32, #tpu.memory_space<vmem>>, vector<1x32xf32>
    %202 = vector.broadcast %201 : vector<1x32xf32> to vector<16x32xf32>
    %203 = arith.addf %200, %202 : vector<16x32xf32>
    %204 = vector.shape_cast %203 : vector<16x32xf32> to vector<2x8x32xf32>
    %c0_98 = arith.constant 0 : index
    %c0_99 = arith.constant 0 : index
    %c0_100 = arith.constant 0 : index
    %205 = vector.load %arg7[%c0_98, %c0_99, %c0_100] : memref<2x8x32xf32, #tpu.memory_space<vmem>>, vector<2x8x32xf32>
    tpu.vector_store %arg7[%c0_98, %c0_99, %c0_100], %204 {strides = array<i32>} : memref<2x8x32xf32, #tpu.memory_space<vmem>>, vector<2x8x32xf32>,
    return
  }
  func.func @transform_0(%arg0: i32) -> (i32, i32, i32) {
    %c0_i32 = arith.constant 0 : i32
    %c0_i32_0 = arith.constant 0 : i32
    %c0_i32_1 = arith.constant 0 : i32
    return %arg0, %c0_i32, %c0_i32_0 : i32, i32, i32
  }
  func.func @transform_1(%arg0: i32) -> (i32, i32) {
    %c0_i32 = arith.constant 0 : i32
    %c0_i32_0 = arith.constant 0 : i32
    %c0_i32_1 = arith.constant 0 : i32
    return %c0_i32, %c0_i32_0 : i32, i32
  }
  func.func @transform_2(%arg0: i32) -> (i32, i32) {
    %c0_i32 = arith.constant 0 : i32
    %c0_i32_0 = arith.constant 0 : i32
    %c0_i32_1 = arith.constant 0 : i32
    return %c0_i32, %c0_i32_0 : i32, i32
  }
  func.func @transform_3(%arg0: i32) -> (i32, i32) {
    %c0_i32 = arith.constant 0 : i32
    %c0_i32_0 = arith.constant 0 : i32
    %c0_i32_1 = arith.constant 0 : i32
    return %c0_i32, %c0_i32_0 : i32, i32
  }
  func.func @transform_4(%arg0: i32) -> (i32, i32) {
    %c0_i32 = arith.constant 0 : i32
    %c0_i32_0 = arith.constant 0 : i32
    %c0_i32_1 = arith.constant 0 : i32
    return %c0_i32, %c0_i32_0 : i32, i32
  }
  func.func @transform_5(%arg0: i32) -> (i32, i32) {
    %c0_i32 = arith.constant 0 : i32
    %c0_i32_0 = arith.constant 0 : i32
    %c0_i32_1 = arith.constant 0 : i32
    return %c0_i32, %c0_i32_0 : i32, i32
  }
  func.func @transform_6(%arg0: i32) -> (i32, i32, i32) {
    %c0_i32 = arith.constant 0 : i32
    %c0_i32_0 = arith.constant 0 : i32
    %c0_i32_1 = arith.constant 0 : i32
    return %arg0, %c0_i32, %c0_i32_0 : i32, i32, i32
  }
}

module attributes {stable_mosaic.version = 11 : i64} {
  func.func @kernel(%arg0: i32, %arg1: memref<2x8x32xbf16, #tpu.memory_space<vmem>>, %arg2: memref<32x32xbf16, #tpu.memory_space<vmem>>, %arg3: memref<32x32xbf16, #tpu.memory_space<vmem>>, %arg4: memref<32x32xbf16, #tpu.memory_space<vmem>>, %arg5: memref<32x32xbf16, #tpu.memory_space<vmem>>, %arg6: memref<1x32xf32, #tpu.memory_space<vmem>>, %arg7: memref<2x8x32xf32, #tpu.memory_space<vmem>>, %arg8: memref<16x32xf32, #tpu.memory_space<vmem>>) attributes {dimension_semantics = [#tpu.dimension_semantics<parallel>], iteration_bounds = array<i64: 1>, scalar_prefetch = 0 : i64, scratch_operands = 1 : i64, tpu.core_type = #tpu.core_type<tc>, window_params = [{transform_indices = @transform_0, window_bounds = array<i64: 2, 8, 32>}, {pipeline_mode = #tpu.pipeline_mode<synchronous>, transform_indices = @transform_1, window_bounds = array<i64: 32, 32>}, {pipeline_mode = #tpu.pipeline_mode<synchronous>, transform_indices = @transform_2, window_bounds = array<i64: 32, 32>}, {pipeline_mode = #tpu.pipeline_mode<synchronous>, transform_indices = @transform_3, window_bounds = array<i64: 32, 32>}, {pipeline_mode = #tpu.pipeline_mode<synchronous>, transform_indices = @transform_4, window_bounds = array<i64: 32, 32>}, {pipeline_mode = #tpu.pipeline_mode<synchronous>, transform_indices = @transform_5, window_bounds = array<i64: 1, 32>}, {transform_indices = @transform_6, window_bounds = array<i64: 2, 8, 32>}]} {
    %c0 = arith.constant 0 : index
    %c0_0 = arith.constant 0 : index
    %c0_1 = arith.constant 0 : index
    %0 = vector.load %arg1[%c0, %c0_0, %c0_1] : memref<2x8x32xbf16, #tpu.memory_space<vmem>>, vector<2x8x32xbf16>
    %1 = vector.shape_cast %0 : vector<2x8x32xbf16> to vector<16x32xbf16>
    %c0_2 = arith.constant 0 : index
    %c0_3 = arith.constant 0 : index
    %2 = vector.load %arg2[%c0_2, %c0_3] : memref<32x32xbf16, #tpu.memory_space<vmem>>, vector<32x32xbf16>
    %cst = arith.constant dense<0.000000e+00> : vector<16x32xf32>
    %3 = tpu.matmul %1, %2, %cst {dimension_numbers = #tpu.dot_dimension_numbers<[1], [0], [0], [1], [0, 0, 1, 1], [], []>} : vector<16x32xbf16>, vector<32x32xbf16>, vector<16x32xf32> -> vector<16x32xf32>
    %4 = arith.truncf %3 : vector<16x32xf32> to vector<16x32xbf16>
    %c0_4 = arith.constant 0 : index
    %c0_5 = arith.constant 0 : index
    %5 = vector.load %arg3[%c0_4, %c0_5] : memref<32x32xbf16, #tpu.memory_space<vmem>>, vector<32x32xbf16>
    %cst_6 = arith.constant dense<0.000000e+00> : vector<16x32xf32>
    %6 = tpu.matmul %1, %5, %cst_6 {dimension_numbers = #tpu.dot_dimension_numbers<[1], [0], [0], [1], [0, 0, 1, 1], [], []>} : vector<16x32xbf16>, vector<32x32xbf16>, vector<16x32xf32> -> vector<16x32xf32>
    %7 = arith.truncf %6 : vector<16x32xf32> to vector<16x32xbf16>
    %c0_7 = arith.constant 0 : index
    %c0_8 = arith.constant 0 : index
    %8 = vector.load %arg4[%c0_7, %c0_8] : memref<32x32xbf16, #tpu.memory_space<vmem>>, vector<32x32xbf16>
    %cst_9 = arith.constant dense<0.000000e+00> : vector<16x32xf32>
    %9 = tpu.matmul %1, %8, %cst_9 {dimension_numbers = #tpu.dot_dimension_numbers<[1], [0], [0], [1], [0, 0, 1, 1], [], []>} : vector<16x32xbf16>, vector<32x32xbf16>, vector<16x32xf32> -> vector<16x32xf32>
    %10 = arith.truncf %9 : vector<16x32xf32> to vector<16x32xbf16>
    %11 = vector.shape_cast %4 : vector<16x32xbf16> to vector<2x8x32xbf16>
    %12 = vector.shape_cast %7 : vector<16x32xbf16> to vector<2x8x32xbf16>
    %13 = vector.shape_cast %10 : vector<16x32xbf16> to vector<2x8x32xbf16>
    %cst_10 = arith.constant 0.000000e+00 : f32
    %14 = vector.broadcast %cst_10 : f32 to vector<16x32xf32>
    %c0_11 = arith.constant 0 : index
    %c0_12 = arith.constant 0 : index
    %15 = vector.load %arg8[%c0_11, %c0_12] : memref<16x32xf32, #tpu.memory_space<vmem>>, vector<16x32xf32>
    tpu.vector_store %arg8[%c0_11, %c0_12], %14 {strides = array<i32>} : memref<16x32xf32, #tpu.memory_space<vmem>>, vector<16x32xf32>,
    %16 = vector.extract_strided_slice %11 {offsets = [0, 0, 0], sizes = [2, 8, 4], strides = [1, 1, 1]} : vector<2x8x32xbf16> to vector<2x8x4xbf16>
    %17 = vector.extract_strided_slice %12 {offsets = [0, 0, 0], sizes = [2, 8, 4], strides = [1, 1, 1]} : vector<2x8x32xbf16> to vector<2x8x4xbf16>
    %18 = vector.extract_strided_slice %13 {offsets = [0, 0, 0], sizes = [2, 8, 4], strides = [1, 1, 1]} : vector<2x8x32xbf16> to vector<2x8x4xbf16>
    "tpu.trace_start"() <{level = 10 : i32, message = "bnd,bmd->bnm"}> : () -> ()
    %cst_13 = arith.constant dense<0.000000e+00> : vector<2x8x8xf32>
    %19 = tpu.matmul %16, %17, %cst_13 {dimension_numbers = #tpu.dot_dimension_numbers<[2], [2], [1], [1], [0, 0, 0, 1, 1, 1], [0], [0]>} : vector<2x8x4xbf16>, vector<2x8x4xbf16>, vector<2x8x8xf32> -> vector<2x8x8xf32>
    "tpu.trace_stop"() : () -> ()
    %cst_14 = arith.constant dense<0xFF800000> : vector<2x8xf32>
    %20 = vector.multi_reduction <maximumf>, %19, %cst_14 [2] : vector<2x8x8xf32> to vector<2x8xf32>
    %21 = vector.shape_cast %20 : vector<2x8xf32> to vector<2x8x1xf32>
    %22 = vector.broadcast %21 : vector<2x8x1xf32> to vector<2x8x8xf32>
    %23 = arith.subf %19, %22 : vector<2x8x8xf32>
    %24 = math.exp %23 : vector<2x8x8xf32>
    %cst_15 = arith.constant dense<0.000000e+00> : vector<2x8xf32>
    %25 = vector.multi_reduction <add>, %24, %cst_15 [2] : vector<2x8x8xf32> to vector<2x8xf32>
    %26 = vector.shape_cast %25 : vector<2x8xf32> to vector<2x8x1xf32>
    %27 = arith.truncf %24 : vector<2x8x8xf32> to vector<2x8x8xbf16>
    "tpu.trace_start"() <{level = 10 : i32, message = "bnm,bmd->bnd"}> : () -> ()
    %cst_16 = arith.constant dense<0.000000e+00> : vector<2x8x4xf32>
    %28 = tpu.matmul %27, %18, %cst_16 {dimension_numbers = #tpu.dot_dimension_numbers<[2], [1], [1], [2], [0, 0, 0, 1, 1, 2], [0], [0]>} : vector<2x8x8xbf16>, vector<2x8x4xbf16>, vector<2x8x4xf32> -> vector<2x8x4xf32>
    "tpu.trace_stop"() : () -> ()
    %29 = tpu.reciprocal %26 {approx = true} : vector<2x8x1xf32> -> vector<2x8x1xf32>
    %30 = vector.broadcast %29 : vector<2x8x1xf32> to vector<2x8x4xf32>
    %31 = arith.mulf %28, %30 : vector<2x8x4xf32>
    %c0_17 = arith.constant 0 : index
    %c0_18 = arith.constant 0 : index
    %32 = vector.load %arg8[%c0_17, %c0_18] : memref<16x32xf32, #tpu.memory_space<vmem>>, vector<16x32xf32>
    %33 = vector.shape_cast %31 : vector<2x8x4xf32> to vector<16x4xf32>
    %34 = arith.truncf %33 : vector<16x4xf32> to vector<16x4xbf16>
    %c0_19 = arith.constant 0 : index
    %c0_20 = arith.constant 0 : index
    %35 = vector.load %arg5[%c0_19, %c0_20] : memref<32x32xbf16, #tpu.memory_space<vmem>>, vector<4x32xbf16>
    %cst_21 = arith.constant dense<0.000000e+00> : vector<16x32xf32>
    %36 = tpu.matmul %34, %35, %cst_21 {dimension_numbers = #tpu.dot_dimension_numbers<[1], [0], [0], [1], [0, 0, 1, 1], [], []>} : vector<16x4xbf16>, vector<4x32xbf16>, vector<16x32xf32> -> vector<16x32xf32>
    %37 = arith.addf %32, %36 : vector<16x32xf32>
    %c0_22 = arith.constant 0 : index
    %c0_23 = arith.constant 0 : index
    %38 = vector.load %arg8[%c0_22, %c0_23] : memref<16x32xf32, #tpu.memory_space<vmem>>, vector<16x32xf32>
    tpu.vector_store %arg8[%c0_22, %c0_23], %37 {strides = array<i32>} : memref<16x32xf32, #tpu.memory_space<vmem>>, vector<16x32xf32>,
    %39 = vector.extract_strided_slice %11 {offsets = [0, 0, 4], sizes = [2, 8, 4], strides = [1, 1, 1]} : vector<2x8x32xbf16> to vector<2x8x4xbf16>
    %40 = vector.extract_strided_slice %12 {offsets = [0, 0, 4], sizes = [2, 8, 4], strides = [1, 1, 1]} : vector<2x8x32xbf16> to vector<2x8x4xbf16>
    %41 = vector.extract_strided_slice %13 {offsets = [0, 0, 4], sizes = [2, 8, 4], strides = [1, 1, 1]} : vector<2x8x32xbf16> to vector<2x8x4xbf16>
    "tpu.trace_start"() <{level = 10 : i32, message = "bnd,bmd->bnm"}> : () -> ()
    %cst_24 = arith.constant dense<0.000000e+00> : vector<2x8x8xf32>
    %42 = tpu.matmul %39, %40, %cst_24 {dimension_numbers = #tpu.dot_dimension_numbers<[2], [2], [1], [1], [0, 0, 0, 1, 1, 1], [0], [0]>} : vector<2x8x4xbf16>, vector<2x8x4xbf16>, vector<2x8x8xf32> -> vector<2x8x8xf32>
    "tpu.trace_stop"() : () -> ()
    %cst_25 = arith.constant dense<0xFF800000> : vector<2x8xf32>
    %43 = vector.multi_reduction <maximumf>, %42, %cst_25 [2] : vector<2x8x8xf32> to vector<2x8xf32>
    %44 = vector.shape_cast %43 : vector<2x8xf32> to vector<2x8x1xf32>
    %45 = vector.broadcast %44 : vector<2x8x1xf32> to vector<2x8x8xf32>
    %46 = arith.subf %42, %45 : vector<2x8x8xf32>
    %47 = math.exp %46 : vector<2x8x8xf32>
    %cst_26 = arith.constant dense<0.000000e+00> : vector<2x8xf32>
    %48 = vector.multi_reduction <add>, %47, %cst_26 [2] : vector<2x8x8xf32> to vector<2x8xf32>
    %49 = vector.shape_cast %48 : vector<2x8xf32> to vector<2x8x1xf32>
    %50 = arith.truncf %47 : vector<2x8x8xf32> to vector<2x8x8xbf16>
    "tpu.trace_start"() <{level = 10 : i32, message = "bnm,bmd->bnd"}> : () -> ()
    %cst_27 = arith.constant dense<0.000000e+00> : vector<2x8x4xf32>
    %51 = tpu.matmul %50, %41, %cst_27 {dimension_numbers = #tpu.dot_dimension_numbers<[2], [1], [1], [2], [0, 0, 0, 1, 1, 2], [0], [0]>} : vector<2x8x8xbf16>, vector<2x8x4xbf16>, vector<2x8x4xf32> -> vector<2x8x4xf32>
    "tpu.trace_stop"() : () -> ()
    %52 = tpu.reciprocal %49 {approx = true} : vector<2x8x1xf32> -> vector<2x8x1xf32>
    %53 = vector.broadcast %52 : vector<2x8x1xf32> to vector<2x8x4xf32>
    %54 = arith.mulf %51, %53 : vector<2x8x4xf32>
    %c0_28 = arith.constant 0 : index
    %c0_29 = arith.constant 0 : index
    %55 = vector.load %arg8[%c0_28, %c0_29] : memref<16x32xf32, #tpu.memory_space<vmem>>, vector<16x32xf32>
    %56 = vector.shape_cast %54 : vector<2x8x4xf32> to vector<16x4xf32>
    %57 = arith.truncf %56 : vector<16x4xf32> to vector<16x4xbf16>
    %c4 = arith.constant 4 : index
    %c0_30 = arith.constant 0 : index
    %58 = vector.load %arg5[%c4, %c0_30] : memref<32x32xbf16, #tpu.memory_space<vmem>>, vector<4x32xbf16>
    %cst_31 = arith.constant dense<0.000000e+00> : vector<16x32xf32>
    %59 = tpu.matmul %57, %58, %cst_31 {dimension_numbers = #tpu.dot_dimension_numbers<[1], [0], [0], [1], [0, 0, 1, 1], [], []>} : vector<16x4xbf16>, vector<4x32xbf16>, vector<16x32xf32> -> vector<16x32xf32>
    %60 = arith.addf %55, %59 : vector<16x32xf32>
    %c0_32 = arith.constant 0 : index
    %c0_33 = arith.constant 0 : index
    %61 = vector.load %arg8[%c0_32, %c0_33] : memref<16x32xf32, #tpu.memory_space<vmem>>, vector<16x32xf32>
    tpu.vector_store %arg8[%c0_32, %c0_33], %60 {strides = array<i32>} : memref<16x32xf32, #tpu.memory_space<vmem>>, vector<16x32xf32>,
    %62 = vector.extract_strided_slice %11 {offsets = [0, 0, 8], sizes = [2, 8, 4], strides = [1, 1, 1]} : vector<2x8x32xbf16> to vector<2x8x4xbf16>
    %63 = vector.extract_strided_slice %12 {offsets = [0, 0, 8], sizes = [2, 8, 4], strides = [1, 1, 1]} : vector<2x8x32xbf16> to vector<2x8x4xbf16>
    %64 = vector.extract_strided_slice %13 {offsets = [0, 0, 8], sizes = [2, 8, 4], strides = [1, 1, 1]} : vector<2x8x32xbf16> to vector<2x8x4xbf16>
    "tpu.trace_start"() <{level = 10 : i32, message = "bnd,bmd->bnm"}> : () -> ()
    %cst_34 = arith.constant dense<0.000000e+00> : vector<2x8x8xf32>
    %65 = tpu.matmul %62, %63, %cst_34 {dimension_numbers = #tpu.dot_dimension_numbers<[2], [2], [1], [1], [0, 0, 0, 1, 1, 1], [0], [0]>} : vector<2x8x4xbf16>, vector<2x8x4xbf16>, vector<2x8x8xf32> -> vector<2x8x8xf32>
    "tpu.trace_stop"() : () -> ()
    %cst_35 = arith.constant dense<0xFF800000> : vector<2x8xf32>
    %66 = vector.multi_reduction <maximumf>, %65, %cst_35 [2] : vector<2x8x8xf32> to vector<2x8xf32>
    %67 = vector.shape_cast %66 : vector<2x8xf32> to vector<2x8x1xf32>
    %68 = vector.broadcast %67 : vector<2x8x1xf32> to vector<2x8x8xf32>
    %69 = arith.subf %65, %68 : vector<2x8x8xf32>
    %70 = math.exp %69 : vector<2x8x8xf32>
    %cst_36 = arith.constant dense<0.000000e+00> : vector<2x8xf32>
    %71 = vector.multi_reduction <add>, %70, %cst_36 [2] : vector<2x8x8xf32> to vector<2x8xf32>
    %72 = vector.shape_cast %71 : vector<2x8xf32> to vector<2x8x1xf32>
    %73 = arith.truncf %70 : vector<2x8x8xf32> to vector<2x8x8xbf16>
    "tpu.trace_start"() <{level = 10 : i32, message = "bnm,bmd->bnd"}> : () -> ()
    %cst_37 = arith.constant dense<0.000000e+00> : vector<2x8x4xf32>
    %74 = tpu.matmul %73, %64, %cst_37 {dimension_numbers = #tpu.dot_dimension_numbers<[2], [1], [1], [2], [0, 0, 0, 1, 1, 2], [0], [0]>} : vector<2x8x8xbf16>, vector<2x8x4xbf16>, vector<2x8x4xf32> -> vector<2x8x4xf32>
    "tpu.trace_stop"() : () -> ()
    %75 = tpu.reciprocal %72 {approx = true} : vector<2x8x1xf32> -> vector<2x8x1xf32>
    %76 = vector.broadcast %75 : vector<2x8x1xf32> to vector<2x8x4xf32>
    %77 = arith.mulf %74, %76 : vector<2x8x4xf32>
    %c0_38 = arith.constant 0 : index
    %c0_39 = arith.constant 0 : index
    %78 = vector.load %arg8[%c0_38, %c0_39] : memref<16x32xf32, #tpu.memory_space<vmem>>, vector<16x32xf32>
    %79 = vector.shape_cast %77 : vector<2x8x4xf32> to vector<16x4xf32>
    %80 = arith.truncf %79 : vector<16x4xf32> to vector<16x4xbf16>
    %c8 = arith.constant 8 : index
    %c0_40 = arith.constant 0 : index
    %81 = vector.load %arg5[%c8, %c0_40] : memref<32x32xbf16, #tpu.memory_space<vmem>>, vector<4x32xbf16>
    %cst_41 = arith.constant dense<0.000000e+00> : vector<16x32xf32>
    %82 = tpu.matmul %80, %81, %cst_41 {dimension_numbers = #tpu.dot_dimension_numbers<[1], [0], [0], [1], [0, 0, 1, 1], [], []>} : vector<16x4xbf16>, vector<4x32xbf16>, vector<16x32xf32> -> vector<16x32xf32>
    %83 = arith.addf %78, %82 : vector<16x32xf32>
    %c0_42 = arith.constant 0 : index
    %c0_43 = arith.constant 0 : index
    %84 = vector.load %arg8[%c0_42, %c0_43] : memref<16x32xf32, #tpu.memory_space<vmem>>, vector<16x32xf32>
    tpu.vector_store %arg8[%c0_42, %c0_43], %83 {strides = array<i32>} : memref<16x32xf32, #tpu.memory_space<vmem>>, vector<16x32xf32>,
    %85 = vector.extract_strided_slice %11 {offsets = [0, 0, 12], sizes = [2, 8, 4], strides = [1, 1, 1]} : vector<2x8x32xbf16> to vector<2x8x4xbf16>
    %86 = vector.extract_strided_slice %12 {offsets = [0, 0, 12], sizes = [2, 8, 4], strides = [1, 1, 1]} : vector<2x8x32xbf16> to vector<2x8x4xbf16>
    %87 = vector.extract_strided_slice %13 {offsets = [0, 0, 12], sizes = [2, 8, 4], strides = [1, 1, 1]} : vector<2x8x32xbf16> to vector<2x8x4xbf16>
    "tpu.trace_start"() <{level = 10 : i32, message = "bnd,bmd->bnm"}> : () -> ()
    %cst_44 = arith.constant dense<0.000000e+00> : vector<2x8x8xf32>
    %88 = tpu.matmul %85, %86, %cst_44 {dimension_numbers = #tpu.dot_dimension_numbers<[2], [2], [1], [1], [0, 0, 0, 1, 1, 1], [0], [0]>} : vector<2x8x4xbf16>, vector<2x8x4xbf16>, vector<2x8x8xf32> -> vector<2x8x8xf32>
    "tpu.trace_stop"() : () -> ()
    %cst_45 = arith.constant dense<0xFF800000> : vector<2x8xf32>
    %89 = vector.multi_reduction <maximumf>, %88, %cst_45 [2] : vector<2x8x8xf32> to vector<2x8xf32>
    %90 = vector.shape_cast %89 : vector<2x8xf32> to vector<2x8x1xf32>
    %91 = vector.broadcast %90 : vector<2x8x1xf32> to vector<2x8x8xf32>
    %92 = arith.subf %88, %91 : vector<2x8x8xf32>
    %93 = math.exp %92 : vector<2x8x8xf32>
    %cst_46 = arith.constant dense<0.000000e+00> : vector<2x8xf32>
    %94 = vector.multi_reduction <add>, %93, %cst_46 [2] : vector<2x8x8xf32> to vector<2x8xf32>
    %95 = vector.shape_cast %94 : vector<2x8xf32> to vector<2x8x1xf32>
    %96 = arith.truncf %93 : vector<2x8x8xf32> to vector<2x8x8xbf16>
    "tpu.trace_start"() <{level = 10 : i32, message = "bnm,bmd->bnd"}> : () -> ()
    %cst_47 = arith.constant dense<0.000000e+00> : vector<2x8x4xf32>
    %97 = tpu.matmul %96, %87, %cst_47 {dimension_numbers = #tpu.dot_dimension_numbers<[2], [1], [1], [2], [0, 0, 0, 1, 1, 2], [0], [0]>} : vector<2x8x8xbf16>, vector<2x8x4xbf16>, vector<2x8x4xf32> -> vector<2x8x4xf32>
    "tpu.trace_stop"() : () -> ()
    %98 = tpu.reciprocal %95 {approx = true} : vector<2x8x1xf32> -> vector<2x8x1xf32>
    %99 = vector.broadcast %98 : vector<2x8x1xf32> to vector<2x8x4xf32>
    %100 = arith.mulf %97, %99 : vector<2x8x4xf32>
    %c0_48 = arith.constant 0 : index
    %c0_49 = arith.constant 0 : index
    %101 = vector.load %arg8[%c0_48, %c0_49] : memref<16x32xf32, #tpu.memory_space<vmem>>, vector<16x32xf32>
    %102 = vector.shape_cast %100 : vector<2x8x4xf32> to vector<16x4xf32>
    %103 = arith.truncf %102 : vector<16x4xf32> to vector<16x4xbf16>
    %c12 = arith.constant 12 : index
    %c0_50 = arith.constant 0 : index
    %104 = vector.load %arg5[%c12, %c0_50] : memref<32x32xbf16, #tpu.memory_space<vmem>>, vector<4x32xbf16>
    %cst_51 = arith.constant dense<0.000000e+00> : vector<16x32xf32>
    %105 = tpu.matmul %103, %104, %cst_51 {dimension_numbers = #tpu.dot_dimension_numbers<[1], [0], [0], [1], [0, 0, 1, 1], [], []>} : vector<16x4xbf16>, vector<4x32xbf16>, vector<16x32xf32> -> vector<16x32xf32>
    %106 = arith.addf %101, %105 : vector<16x32xf32>
    %c0_52 = arith.constant 0 : index
    %c0_53 = arith.constant 0 : index
    %107 = vector.load %arg8[%c0_52, %c0_53] : memref<16x32xf32, #tpu.memory_space<vmem>>, vector<16x32xf32>
    tpu.vector_store %arg8[%c0_52, %c0_53], %106 {strides = array<i32>} : memref<16x32xf32, #tpu.memory_space<vmem>>, vector<16x32xf32>,
    %108 = vector.extract_strided_slice %11 {offsets = [0, 0, 16], sizes = [2, 8, 4], strides = [1, 1, 1]} : vector<2x8x32xbf16> to vector<2x8x4xbf16>
    %109 = vector.extract_strided_slice %12 {offsets = [0, 0, 16], sizes = [2, 8, 4], strides = [1, 1, 1]} : vector<2x8x32xbf16> to vector<2x8x4xbf16>
    %110 = vector.extract_strided_slice %13 {offsets = [0, 0, 16], sizes = [2, 8, 4], strides = [1, 1, 1]} : vector<2x8x32xbf16> to vector<2x8x4xbf16>
    "tpu.trace_start"() <{level = 10 : i32, message = "bnd,bmd->bnm"}> : () -> ()
    %cst_54 = arith.constant dense<0.000000e+00> : vector<2x8x8xf32>
    %111 = tpu.matmul %108, %109, %cst_54 {dimension_numbers = #tpu.dot_dimension_numbers<[2], [2], [1], [1], [0, 0, 0, 1, 1, 1], [0], [0]>} : vector<2x8x4xbf16>, vector<2x8x4xbf16>, vector<2x8x8xf32> -> vector<2x8x8xf32>
    "tpu.trace_stop"() : () -> ()
    %cst_55 = arith.constant dense<0xFF800000> : vector<2x8xf32>
    %112 = vector.multi_reduction <maximumf>, %111, %cst_55 [2] : vector<2x8x8xf32> to vector<2x8xf32>
    %113 = vector.shape_cast %112 : vector<2x8xf32> to vector<2x8x1xf32>
    %114 = vector.broadcast %113 : vector<2x8x1xf32> to vector<2x8x8xf32>
    %115 = arith.subf %111, %114 : vector<2x8x8xf32>
    %116 = math.exp %115 : vector<2x8x8xf32>
    %cst_56 = arith.constant dense<0.000000e+00> : vector<2x8xf32>
    %117 = vector.multi_reduction <add>, %116, %cst_56 [2] : vector<2x8x8xf32> to vector<2x8xf32>
    %118 = vector.shape_cast %117 : vector<2x8xf32> to vector<2x8x1xf32>
    %119 = arith.truncf %116 : vector<2x8x8xf32> to vector<2x8x8xbf16>
    "tpu.trace_start"() <{level = 10 : i32, message = "bnm,bmd->bnd"}> : () -> ()
    %cst_57 = arith.constant dense<0.000000e+00> : vector<2x8x4xf32>
    %120 = tpu.matmul %119, %110, %cst_57 {dimension_numbers = #tpu.dot_dimension_numbers<[2], [1], [1], [2], [0, 0, 0, 1, 1, 2], [0], [0]>} : vector<2x8x8xbf16>, vector<2x8x4xbf16>, vector<2x8x4xf32> -> vector<2x8x4xf32>
    "tpu.trace_stop"() : () -> ()
    %121 = tpu.reciprocal %118 {approx = true} : vector<2x8x1xf32> -> vector<2x8x1xf32>
    %122 = vector.broadcast %121 : vector<2x8x1xf32> to vector<2x8x4xf32>
    %123 = arith.mulf %120, %122 : vector<2x8x4xf32>
    %c0_58 = arith.constant 0 : index
    %c0_59 = arith.constant 0 : index
    %124 = vector.load %arg8[%c0_58, %c0_59] : memref<16x32xf32, #tpu.memory_space<vmem>>, vector<16x32xf32>
    %125 = vector.shape_cast %123 : vector<2x8x4xf32> to vector<16x4xf32>
    %126 = arith.truncf %125 : vector<16x4xf32> to vector<16x4xbf16>
    %c16 = arith.constant 16 : index
    %c0_60 = arith.constant 0 : index
    %127 = vector.load %arg5[%c16, %c0_60] : memref<32x32xbf16, #tpu.memory_space<vmem>>, vector<4x32xbf16>
    %cst_61 = arith.constant dense<0.000000e+00> : vector<16x32xf32>
    %128 = tpu.matmul %126, %127, %cst_61 {dimension_numbers = #tpu.dot_dimension_numbers<[1], [0], [0], [1], [0, 0, 1, 1], [], []>} : vector<16x4xbf16>, vector<4x32xbf16>, vector<16x32xf32> -> vector<16x32xf32>
    %129 = arith.addf %124, %128 : vector<16x32xf32>
    %c0_62 = arith.constant 0 : index
    %c0_63 = arith.constant 0 : index
    %130 = vector.load %arg8[%c0_62, %c0_63] : memref<16x32xf32, #tpu.memory_space<vmem>>, vector<16x32xf32>
    tpu.vector_store %arg8[%c0_62, %c0_63], %129 {strides = array<i32>} : memref<16x32xf32, #tpu.memory_space<vmem>>, vector<16x32xf32>,
    %131 = vector.extract_strided_slice %11 {offsets = [0, 0, 20], sizes = [2, 8, 4], strides = [1, 1, 1]} : vector<2x8x32xbf16> to vector<2x8x4xbf16>
    %132 = vector.extract_strided_slice %12 {offsets = [0, 0, 20], sizes = [2, 8, 4], strides = [1, 1, 1]} : vector<2x8x32xbf16> to vector<2x8x4xbf16>
    %133 = vector.extract_strided_slice %13 {offsets = [0, 0, 20], sizes = [2, 8, 4], strides = [1, 1, 1]} : vector<2x8x32xbf16> to vector<2x8x4xbf16>
    "tpu.trace_start"() <{level = 10 : i32, message = "bnd,bmd->bnm"}> : () -> ()
    %cst_64 = arith.constant dense<0.000000e+00> : vector<2x8x8xf32>
    %134 = tpu.matmul %131, %132, %cst_64 {dimension_numbers = #tpu.dot_dimension_numbers<[2], [2], [1], [1], [0, 0, 0, 1, 1, 1], [0], [0]>} : vector<2x8x4xbf16>, vector<2x8x4xbf16>, vector<2x8x8xf32> -> vector<2x8x8xf32>
    "tpu.trace_stop"() : () -> ()
    %cst_65 = arith.constant dense<0xFF800000> : vector<2x8xf32>
    %135 = vector.multi_reduction <maximumf>, %134, %cst_65 [2] : vector<2x8x8xf32> to vector<2x8xf32>
    %136 = vector.shape_cast %135 : vector<2x8xf32> to vector<2x8x1xf32>
    %137 = vector.broadcast %136 : vector<2x8x1xf32> to vector<2x8x8xf32>
    %138 = arith.subf %134, %137 : vector<2x8x8xf32>
    %139 = math.exp %138 : vector<2x8x8xf32>
    %cst_66 = arith.constant dense<0.000000e+00> : vector<2x8xf32>
    %140 = vector.multi_reduction <add>, %139, %cst_66 [2] : vector<2x8x8xf32> to vector<2x8xf32>
    %141 = vector.shape_cast %140 : vector<2x8xf32> to vector<2x8x1xf32>
    %142 = arith.truncf %139 : vector<2x8x8xf32> to vector<2x8x8xbf16>
    "tpu.trace_start"() <{level = 10 : i32, message = "bnm,bmd->bnd"}> : () -> ()
    %cst_67 = arith.constant dense<0.000000e+00> : vector<2x8x4xf32>
    %143 = tpu.matmul %142, %133, %cst_67 {dimension_numbers = #tpu.dot_dimension_numbers<[2], [1], [1], [2], [0, 0, 0, 1, 1, 2], [0], [0]>} : vector<2x8x8xbf16>, vector<2x8x4xbf16>, vector<2x8x4xf32> -> vector<2x8x4xf32>
    "tpu.trace_stop"() : () -> ()
    %144 = tpu.reciprocal %141 {approx = true} : vector<2x8x1xf32> -> vector<2x8x1xf32>
    %145 = vector.broadcast %144 : vector<2x8x1xf32> to vector<2x8x4xf32>
    %146 = arith.mulf %143, %145 : vector<2x8x4xf32>
    %c0_68 = arith.constant 0 : index
    %c0_69 = arith.constant 0 : index
    %147 = vector.load %arg8[%c0_68, %c0_69] : memref<16x32xf32, #tpu.memory_space<vmem>>, vector<16x32xf32>
    %148 = vector.shape_cast %146 : vector<2x8x4xf32> to vector<16x4xf32>
    %149 = arith.truncf %148 : vector<16x4xf32> to vector<16x4xbf16>
    %c20 = arith.constant 20 : index
    %c0_70 = arith.constant 0 : index
    %150 = vector.load %arg5[%c20, %c0_70] : memref<32x32xbf16, #tpu.memory_space<vmem>>, vector<4x32xbf16>
    %cst_71 = arith.constant dense<0.000000e+00> : vector<16x32xf32>
    %151 = tpu.matmul %149, %150, %cst_71 {dimension_numbers = #tpu.dot_dimension_numbers<[1], [0], [0], [1], [0, 0, 1, 1], [], []>} : vector<16x4xbf16>, vector<4x32xbf16>, vector<16x32xf32> -> vector<16x32xf32>
    %152 = arith.addf %147, %151 : vector<16x32xf32>
    %c0_72 = arith.constant 0 : index
    %c0_73 = arith.constant 0 : index
    %153 = vector.load %arg8[%c0_72, %c0_73] : memref<16x32xf32, #tpu.memory_space<vmem>>, vector<16x32xf32>
    tpu.vector_store %arg8[%c0_72, %c0_73], %152 {strides = array<i32>} : memref<16x32xf32, #tpu.memory_space<vmem>>, vector<16x32xf32>,
    %154 = vector.extract_strided_slice %11 {offsets = [0, 0, 24], sizes = [2, 8, 4], strides = [1, 1, 1]} : vector<2x8x32xbf16> to vector<2x8x4xbf16>
    %155 = vector.extract_strided_slice %12 {offsets = [0, 0, 24], sizes = [2, 8, 4], strides = [1, 1, 1]} : vector<2x8x32xbf16> to vector<2x8x4xbf16>
    %156 = vector.extract_strided_slice %13 {offsets = [0, 0, 24], sizes = [2, 8, 4], strides = [1, 1, 1]} : vector<2x8x32xbf16> to vector<2x8x4xbf16>
    "tpu.trace_start"() <{level = 10 : i32, message = "bnd,bmd->bnm"}> : () -> ()
    %cst_74 = arith.constant dense<0.000000e+00> : vector<2x8x8xf32>
    %157 = tpu.matmul %154, %155, %cst_74 {dimension_numbers = #tpu.dot_dimension_numbers<[2], [2], [1], [1], [0, 0, 0, 1, 1, 1], [0], [0]>} : vector<2x8x4xbf16>, vector<2x8x4xbf16>, vector<2x8x8xf32> -> vector<2x8x8xf32>
    "tpu.trace_stop"() : () -> ()
    %cst_75 = arith.constant dense<0xFF800000> : vector<2x8xf32>
    %158 = vector.multi_reduction <maximumf>, %157, %cst_75 [2] : vector<2x8x8xf32> to vector<2x8xf32>
    %159 = vector.shape_cast %158 : vector<2x8xf32> to vector<2x8x1xf32>
    %160 = vector.broadcast %159 : vector<2x8x1xf32> to vector<2x8x8xf32>
    %161 = arith.subf %157, %160 : vector<2x8x8xf32>
    %162 = math.exp %161 : vector<2x8x8xf32>
    %cst_76 = arith.constant dense<0.000000e+00> : vector<2x8xf32>
    %163 = vector.multi_reduction <add>, %162, %cst_76 [2] : vector<2x8x8xf32> to vector<2x8xf32>
    %164 = vector.shape_cast %163 : vector<2x8xf32> to vector<2x8x1xf32>
    %165 = arith.truncf %162 : vector<2x8x8xf32> to vector<2x8x8xbf16>
    "tpu.trace_start"() <{level = 10 : i32, message = "bnm,bmd->bnd"}> : () -> ()
    %cst_77 = arith.constant dense<0.000000e+00> : vector<2x8x4xf32>
    %166 = tpu.matmul %165, %156, %cst_77 {dimension_numbers = #tpu.dot_dimension_numbers<[2], [1], [1], [2], [0, 0, 0, 1, 1, 2], [0], [0]>} : vector<2x8x8xbf16>, vector<2x8x4xbf16>, vector<2x8x4xf32> -> vector<2x8x4xf32>
    "tpu.trace_stop"() : () -> ()
    %167 = tpu.reciprocal %164 {approx = true} : vector<2x8x1xf32> -> vector<2x8x1xf32>
    %168 = vector.broadcast %167 : vector<2x8x1xf32> to vector<2x8x4xf32>
    %169 = arith.mulf %166, %168 : vector<2x8x4xf32>
    %c0_78 = arith.constant 0 : index
    %c0_79 = arith.constant 0 : index
    %170 = vector.load %arg8[%c0_78, %c0_79] : memref<16x32xf32, #tpu.memory_space<vmem>>, vector<16x32xf32>
    %171 = vector.shape_cast %169 : vector<2x8x4xf32> to vector<16x4xf32>
    %172 = arith.truncf %171 : vector<16x4xf32> to vector<16x4xbf16>
    %c24 = arith.constant 24 : index
    %c0_80 = arith.constant 0 : index
    %173 = vector.load %arg5[%c24, %c0_80] : memref<32x32xbf16, #tpu.memory_space<vmem>>, vector<4x32xbf16>
    %cst_81 = arith.constant dense<0.000000e+00> : vector<16x32xf32>
    %174 = tpu.matmul %172, %173, %cst_81 {dimension_numbers = #tpu.dot_dimension_numbers<[1], [0], [0], [1], [0, 0, 1, 1], [], []>} : vector<16x4xbf16>, vector<4x32xbf16>, vector<16x32xf32> -> vector<16x32xf32>
    %175 = arith.addf %170, %174 : vector<16x32xf32>
    %c0_82 = arith.constant 0 : index
    %c0_83 = arith.constant 0 : index
    %176 = vector.load %arg8[%c0_82, %c0_83] : memref<16x32xf32, #tpu.memory_space<vmem>>, vector<16x32xf32>
    tpu.vector_store %arg8[%c0_82, %c0_83], %175 {strides = array<i32>} : memref<16x32xf32, #tpu.memory_space<vmem>>, vector<16x32xf32>,
    %177 = vector.extract_strided_slice %11 {offsets = [0, 0, 28], sizes = [2, 8, 4], strides = [1, 1, 1]} : vector<2x8x32xbf16> to vector<2x8x4xbf16>
    %178 = vector.extract_strided_slice %12 {offsets = [0, 0, 28], sizes = [2, 8, 4], strides = [1, 1, 1]} : vector<2x8x32xbf16> to vector<2x8x4xbf16>
    %179 = vector.extract_strided_slice %13 {offsets = [0, 0, 28], sizes = [2, 8, 4], strides = [1, 1, 1]} : vector<2x8x32xbf16> to vector<2x8x4xbf16>
    "tpu.trace_start"() <{level = 10 : i32, message = "bnd,bmd->bnm"}> : () -> ()
    %cst_84 = arith.constant dense<0.000000e+00> : vector<2x8x8xf32>
    %180 = tpu.matmul %177, %178, %cst_84 {dimension_numbers = #tpu.dot_dimension_numbers<[2], [2], [1], [1], [0, 0, 0, 1, 1, 1], [0], [0]>} : vector<2x8x4xbf16>, vector<2x8x4xbf16>, vector<2x8x8xf32> -> vector<2x8x8xf32>
    "tpu.trace_stop"() : () -> ()
    %cst_85 = arith.constant dense<0xFF800000> : vector<2x8xf32>
    %181 = vector.multi_reduction <maximumf>, %180, %cst_85 [2] : vector<2x8x8xf32> to vector<2x8xf32>
    %182 = vector.shape_cast %181 : vector<2x8xf32> to vector<2x8x1xf32>
    %183 = vector.broadcast %182 : vector<2x8x1xf32> to vector<2x8x8xf32>
    %184 = arith.subf %180, %183 : vector<2x8x8xf32>
    %185 = math.exp %184 : vector<2x8x8xf32>
    %cst_86 = arith.constant dense<0.000000e+00> : vector<2x8xf32>
    %186 = vector.multi_reduction <add>, %185, %cst_86 [2] : vector<2x8x8xf32> to vector<2x8xf32>
    %187 = vector.shape_cast %186 : vector<2x8xf32> to vector<2x8x1xf32>
    %188 = arith.truncf %185 : vector<2x8x8xf32> to vector<2x8x8xbf16>
    "tpu.trace_start"() <{level = 10 : i32, message = "bnm,bmd->bnd"}> : () -> ()
    %cst_87 = arith.constant dense<0.000000e+00> : vector<2x8x4xf32>
    %189 = tpu.matmul %188, %179, %cst_87 {dimension_numbers = #tpu.dot_dimension_numbers<[2], [1], [1], [2], [0, 0, 0, 1, 1, 2], [0], [0]>} : vector<2x8x8xbf16>, vector<2x8x4xbf16>, vector<2x8x4xf32> -> vector<2x8x4xf32>
    "tpu.trace_stop"() : () -> ()
    %190 = tpu.reciprocal %187 {approx = true} : vector<2x8x1xf32> -> vector<2x8x1xf32>
    %191 = vector.broadcast %190 : vector<2x8x1xf32> to vector<2x8x4xf32>
    %192 = arith.mulf %189, %191 : vector<2x8x4xf32>
    %c0_88 = arith.constant 0 : index
    %c0_89 = arith.constant 0 : index
    %193 = vector.load %arg8[%c0_88, %c0_89] : memref<16x32xf32, #tpu.memory_space<vmem>>, vector<16x32xf32>
    %194 = vector.shape_cast %192 : vector<2x8x4xf32> to vector<16x4xf32>
    %195 = arith.truncf %194 : vector<16x4xf32> to vector<16x4xbf16>
    %c28 = arith.constant 28 : index
    %c0_90 = arith.constant 0 : index
    %196 = vector.load %arg5[%c28, %c0_90] : memref<32x32xbf16, #tpu.memory_space<vmem>>, vector<4x32xbf16>
    %cst_91 = arith.constant dense<0.000000e+00> : vector<16x32xf32>
    %197 = tpu.matmul %195, %196, %cst_91 {dimension_numbers = #tpu.dot_dimension_numbers<[1], [0], [0], [1], [0, 0, 1, 1], [], []>} : vector<16x4xbf16>, vector<4x32xbf16>, vector<16x32xf32> -> vector<16x32xf32>
    %198 = arith.addf %193, %197 : vector<16x32xf32>
    %c0_92 = arith.constant 0 : index
    %c0_93 = arith.constant 0 : index
    %199 = vector.load %arg8[%c0_92, %c0_93] : memref<16x32xf32, #tpu.memory_space<vmem>>, vector<16x32xf32>
    tpu.vector_store %arg8[%c0_92, %c0_93], %198 {strides = array<i32>} : memref<16x32xf32, #tpu.memory_space<vmem>>, vector<16x32xf32>,
    %c0_94 = arith.constant 0 : index
    %c0_95 = arith.constant 0 : index
    %200 = vector.load %arg8[%c0_94, %c0_95] : memref<16x32xf32, #tpu.memory_space<vmem>>, vector<16x32xf32>
    %c0_96 = arith.constant 0 : index
    %c0_97 = arith.constant 0 : index
    %201 = vector.load %arg6[%c0_96, %c0_97] : memref<1x32xf32, #tpu.memory_space<vmem>>, vector<1x32xf32>
    %202 = vector.broadcast %201 : vector<1x32xf32> to vector<16x32xf32>
    %203 = arith.addf %200, %202 : vector<16x32xf32>
    %204 = vector.shape_cast %203 : vector<16x32xf32> to vector<2x8x32xf32>
    %c0_98 = arith.constant 0 : index
    %c0_99 = arith.constant 0 : index
    %c0_100 = arith.constant 0 : index
    %205 = vector.load %arg7[%c0_98, %c0_99, %c0_100] : memref<2x8x32xf32, #tpu.memory_space<vmem>>, vector<2x8x32xf32>
    tpu.vector_store %arg7[%c0_98, %c0_99, %c0_100], %204 {strides = array<i32>} : memref<2x8x32xf32, #tpu.memory_space<vmem>>, vector<2x8x32xf32>,
    return
  }
  func.func @transform_0(%arg0: i32) -> (i32, i32, i32) {
    %c0_i32 = arith.constant 0 : i32
    %c0_i32_0 = arith.constant 0 : i32
    %c0_i32_1 = arith.constant 0 : i32
    return %arg0, %c0_i32, %c0_i32_0 : i32, i32, i32
  }
  func.func @transform_1(%arg0: i32) -> (i32, i32) {
    %c0_i32 = arith.constant 0 : i32
    %c0_i32_0 = arith.constant 0 : i32
    %c0_i32_1 = arith.constant 0 : i32
    return %c0_i32, %c0_i32_0 : i32, i32
  }
  func.func @transform_2(%arg0: i32) -> (i32, i32) {
    %c0_i32 = arith.constant 0 : i32
    %c0_i32_0 = arith.constant 0 : i32
    %c0_i32_1 = arith.constant 0 : i32
    return %c0_i32, %c0_i32_0 : i32, i32
  }
  func.func @transform_3(%arg0: i32) -> (i32, i32) {
    %c0_i32 = arith.constant 0 : i32
    %c0_i32_0 = arith.constant 0 : i32
    %c0_i32_1 = arith.constant 0 : i32
    return %c0_i32, %c0_i32_0 : i32, i32
  }
  func.func @transform_4(%arg0: i32) -> (i32, i32) {
    %c0_i32 = arith.constant 0 : i32
    %c0_i32_0 = arith.constant 0 : i32
    %c0_i32_1 = arith.constant 0 : i32
    return %c0_i32, %c0_i32_0 : i32, i32
  }
  func.func @transform_5(%arg0: i32) -> (i32, i32) {
    %c0_i32 = arith.constant 0 : i32
    %c0_i32_0 = arith.constant 0 : i32
    %c0_i32_1 = arith.constant 0 : i32
    return %c0_i32, %c0_i32_0 : i32, i32
  }
  func.func @transform_6(%arg0: i32) -> (i32, i32, i32) {
    %c0_i32 = arith.constant 0 : i32
    %c0_i32_0 = arith.constant 0 : i32
    %c0_i32_1 = arith.constant 0 : i32
    return %arg0, %c0_i32, %c0_i32_0 : i32, i32, i32
  }
}

</mosaic_0001>

<llo_original>
// kernel: tpu_custom_call.1
$region0: #{tpu_custom_call.1}
  #allocation0 [shape = 'u32[]', space=smem, size = 0x4, offset = 0x4, fixed_abs, tag = 'smem constant byte address 0x4 - core index']
  #allocation1 [shape = 'u32[72,128]{1,0:T(1,128)}', space=vmem, size = 0x9000, scoped, tag = 'internal scratch']
  #allocation2 [shape = 'f32[16,32]{1,0:T(8,128)}', space=vmem, size = 0x2000, scoped, tag = 'scratch operand']
  %s0 = inlined_call_operand.hbm [shape: bf16[2,8,32], index: 0, kind: input, shape index: {}]
  %s1 = inlined_call_operand.hbm [shape: bf16[32,32], index: 1, kind: input, shape index: {}]
  %s2 = inlined_call_operand.hbm [shape: bf16[32,32], index: 2, kind: input, shape index: {}]
  %s3 = inlined_call_operand.hbm [shape: bf16[32,32], index: 3, kind: input, shape index: {}]
  %s4 = inlined_call_operand.hbm [shape: bf16[32,32], index: 4, kind: input, shape index: {}]
  %s5 = inlined_call_operand.vmem [shape: f32[1,32], index: 5, kind: input, shape index: {}]
  %s6 = inlined_call_operand.hbm [shape: f32[2,8,32], index: 6, kind: output, shape index: {}]
  %s7 = sld [smem:[#allocation0]]
  $region54: #{tpu_custom_call.1} parent=0
    _
  %s9 = ssub.s32 1, %s7
  %s10 = scalar_select 0, %s9, %s7
  $region1: #{tpu_custom_call.1} parent=0
    #allocation3 [shape = 'u8[4096]{0}', space=vmem, size = 0x1000, scoped, tag = 'input window, operand 0, single buffered']
    #allocation4 [shape = 's32[1]{0}', space=sflag, size = 0x4, scoped, tag = 'scoped memory for tpu_custom_call.1']
    #allocation5 [shape = 's32[1]{0}', space=sflag, size = 0x4, scoped, tag = 'scoped memory for tpu_custom_call.1']
    #allocation6 [shape = 'u8[8192]{0}', space=vmem, size = 0x2000, scoped, tag = 'input window, operand 1, single buffered']
    #allocation7 [shape = 's32[1]{0}', space=sflag, size = 0x4, scoped, tag = 'scoped memory for tpu_custom_call.1']
    #allocation8 [shape = 'u8[8192]{0}', space=vmem, size = 0x2000, scoped, tag = 'input window, operand 2, single buffered']
    #allocation9 [shape = 'u8[8192]{0}', space=vmem, size = 0x2000, scoped, tag = 'input window, operand 3, single buffered']
    #allocation10 [shape = 's32[1]{0}', space=sflag, size = 0x4, scoped, tag = 'scoped memory for tpu_custom_call.1']
    #allocation11 [shape = 'u8[8192]{0}', space=vmem, size = 0x2000, scoped, tag = 'input window, operand 4, single buffered']
    #allocation12 [shape = 'u8[8192]{0}', space=vmem, size = 0x2000, scoped, tag = 'output window, operand 0, single buffered']
    %11 = vsyncpa [#allocation4], 0
    %12 = vsyncpa [#allocation7], 0
    %13 = vsyncpa [#allocation10], 0
    %14 = vsyncpa [#allocation5], 0
    // Predicated region
    $region2: #{tpu_custom_call.1} parent=1 // pred_check
      _
    $region3: #{tpu_custom_call.1} parent=1 // pred_check_branch
      %16 = sbr.rel (0) target = $region5
    $region4: #{tpu_custom_call.1} parent=1 // pred_region
      %18 = vsyncadd [#allocation4], 0
      %s19 = sshll.u32 %s0, 4
      %s20 = int_to_ptr.hbm [resolvable:$true] %s19
      %s21 = sshll.u32 [#allocation3], 4
      %s22 = int_to_ptr.vmem [resolvable:$true] %s21
      %27 = dma.hbm_to_vmem [thread:$0]  %s20, 128, %s22, [#allocation4], 64, 64, 4
    $region5: #{tpu_custom_call.1} parent=1 // pred_fallthru
      _
    // Predicated region
    $region6: #{tpu_custom_call.1} parent=1 // pred_check
      _
    $region7: #{tpu_custom_call.1} parent=1 // pred_check_branch
      %29 = sbr.rel (0) target = $region9
    $region8: #{tpu_custom_call.1} parent=1 // pred_region
      %31 = vsyncadd [#allocation7], 0
      %s32 = sshll.u32 %s1, 4
      %s33 = int_to_ptr.hbm [resolvable:$true] %s32
      %s34 = sshll.u32 [#allocation6], 4
      %s35 = int_to_ptr.vmem [resolvable:$true] %s34
      %40 = dma.hbm_to_vmem [thread:$0]  %s33, 256, %s35, [#allocation7], 64, 64, 4
    $region9: #{tpu_custom_call.1} parent=1 // pred_fallthru
      _
    // Predicated region
    $region10: #{tpu_custom_call.1} parent=1 // pred_check
      _
    $region11: #{tpu_custom_call.1} parent=1 // pred_check_branch
      %42 = sbr.rel (0) target = $region13
    $region12: #{tpu_custom_call.1} parent=1 // pred_region
      %44 = vsyncadd [#allocation7], 0
      %s45 = sshll.u32 %s2, 4
      %s46 = int_to_ptr.hbm [resolvable:$true] %s45
      %s47 = sshll.u32 [#allocation8], 4
      %s48 = int_to_ptr.vmem [resolvable:$true] %s47
      %53 = dma.hbm_to_vmem [thread:$0]  %s46, 256, %s48, [#allocation7], 64, 64, 4
    $region13: #{tpu_custom_call.1} parent=1 // pred_fallthru
      _
    // Predicated region
    $region14: #{tpu_custom_call.1} parent=1 // pred_check
      _
    $region15: #{tpu_custom_call.1} parent=1 // pred_check_branch
      %55 = sbr.rel (0) target = $region17
    $region16: #{tpu_custom_call.1} parent=1 // pred_region
      %57 = vsyncadd [#allocation10], 0
      %s58 = sshll.u32 %s3, 4
      %s59 = int_to_ptr.hbm [resolvable:$true] %s58
      %s60 = sshll.u32 [#allocation9], 4
      %s61 = int_to_ptr.vmem [resolvable:$true] %s60
      %66 = dma.hbm_to_vmem [thread:$0]  %s59, 256, %s61, [#allocation10], 64, 64, 4
    $region17: #{tpu_custom_call.1} parent=1 // pred_fallthru
      _
    // Predicated region
    $region18: #{tpu_custom_call.1} parent=1 // pred_check
      _
    $region19: #{tpu_custom_call.1} parent=1 // pred_check_branch
      %68 = sbr.rel (0) target = $region21
    $region20: #{tpu_custom_call.1} parent=1 // pred_region
      %70 = vsyncadd [#allocation10], 0
      %s71 = sshll.u32 %s4, 4
      %s72 = int_to_ptr.hbm [resolvable:$true] %s71
      %s73 = sshll.u32 [#allocation11], 4
      %s74 = int_to_ptr.vmem [resolvable:$true] %s73
      %79 = dma.hbm_to_vmem [thread:$0]  %s72, 256, %s74, [#allocation10], 64, 64, 4
    $region21: #{tpu_custom_call.1} parent=1 // pred_fallthru
      _
    // Predicated region
    $region22: #{tpu_custom_call.1} parent=1 // pred_check
      _
    $region23: #{tpu_custom_call.1} parent=1 // pred_check_branch
      %81 = sbr.rel (0) target = $region25
    $region24: #{tpu_custom_call.1} parent=1 // pred_region
      _
    $region25: #{tpu_custom_call.1} parent=1 // pred_fallthru
      _
    // Predicated region
    $region26: #{tpu_custom_call.1} parent=1 // pred_check
      _
    $region27: #{tpu_custom_call.1} parent=1 // pred_check_branch
      %83 = sbr.rel (0) target = $region29
    $region28: #{tpu_custom_call.1} parent=1 // pred_region
      %85 = dma.done [#allocation4], 128
    $region29: #{tpu_custom_call.1} parent=1 // pred_fallthru
      _
    // Predicated region
    $region30: #{tpu_custom_call.1} parent=1 // pred_check
      _
    $region31: #{tpu_custom_call.1} parent=1 // pred_check_branch
      %87 = sbr.rel (0) target = $region33
    $region32: #{tpu_custom_call.1} parent=1 // pred_region
      %89 = dma.done [#allocation7], 256
    $region33: #{tpu_custom_call.1} parent=1 // pred_fallthru
      _
    // Predicated region
    $region34: #{tpu_custom_call.1} parent=1 // pred_check
      _
    $region35: #{tpu_custom_call.1} parent=1 // pred_check_branch
      %91 = sbr.rel (0) target = $region37
    $region36: #{tpu_custom_call.1} parent=1 // pred_region
      %93 = dma.done [#allocation7], 256
    $region37: #{tpu_custom_call.1} parent=1 // pred_fallthru
      _
    // Predicated region
    $region38: #{tpu_custom_call.1} parent=1 // pred_check
      _
    $region39: #{tpu_custom_call.1} parent=1 // pred_check_branch
      %95 = sbr.rel (0) target = $region41
    $region40: #{tpu_custom_call.1} parent=1 // pred_region
      %97 = dma.done [#allocation10], 256
    $region41: #{tpu_custom_call.1} parent=1 // pred_fallthru
      _
    // Predicated region
    $region42: #{tpu_custom_call.1} parent=1 // pred_check
      _
    $region43: #{tpu_custom_call.1} parent=1 // pred_check_branch
      %99 = sbr.rel (0) target = $region45
    $region44: #{tpu_custom_call.1} parent=1 // pred_region
      %101 = dma.done [#allocation10], 256
    $region45: #{tpu_custom_call.1} parent=1 // pred_fallthru
      _
    %v103 = vld [vmem:[#allocation3] sm:$0xf]
    %v104 = vld [vmem:[#allocation3 + $0x4] sm:$0xf]
    %v105 = vld [vmem:[#allocation6] sm:$0xf]
    %v106 = vld [vmem:[#allocation6 + $0x4] sm:$0xf]
    %v107 = vld [vmem:[#allocation6 + $0x8] sm:$0xf]
    %v108 = vld [vmem:[#allocation6 + $0xc] sm:$0xf]
    %v111 = vunpack.c.l.b16 %v103
    %v112 = vunpack.c.l.b16 %v104
    %v113 = vpack.c.b16 %v112, %v111
    %v118 = vunpack.c.l.b16 %v105
    %v119 = vunpack.c.l.b16 %v106
    %v120 = vunpack.c.l.b16 %v107
    %v121 = vunpack.c.l.b16 %v108
    %v122 = vpack.c.b16 %v119, %v118
    %v123 = vpack.c.b16 %v121, %v120
    %vm126 = vcmask 261120
    %v128 = vsel %vm126, %v113, 0
    %130 = vmatpush.bf16.msra.mxu0 0
    %131 = vmatpush.bf16.msra.mxu0 0
    %132 = vmatpush.bf16.msra.mxu0 0
    %133 = vmatpush.bf16.msra.mxu0 0
    %134 = vmatpush.bf16.msra.mxu0 0
    %135 = vmatpush.bf16.msra.mxu0 0
    %136 = vmatpush.bf16.msra.mxu0 %v123
    %137 = vmatpush.bf16.msra.mxu0 %v122
    %138 = vmatmul.bf16.gmra.mxu0 %v128
    %v139 = vpop.f32.mrf.mxu0
    %v140 = vadd.f32 0.0, %v139
    %v141 = vpop.f32.mrf.mxu0
    %v142 = vadd.f32 0.0, %v141
    %143 = vdwg.mxu0
    %v144 = vpack.c.bf16 %v140, %v140
    %v145 = vpack.c.bf16 %v142, %v142
    %v146 = vld [vmem:[#allocation8] sm:$0xf]
    %v147 = vld [vmem:[#allocation8 + $0x4] sm:$0xf]
    %v148 = vld [vmem:[#allocation8 + $0x8] sm:$0xf]
    %v149 = vld [vmem:[#allocation8 + $0xc] sm:$0xf]
    %v154 = vunpack.c.l.b16 %v146
    %v155 = vunpack.c.l.b16 %v147
    %v156 = vunpack.c.l.b16 %v148
    %v157 = vunpack.c.l.b16 %v149
    %v158 = vpack.c.b16 %v155, %v154
    %v159 = vpack.c.b16 %v157, %v156
    %162 = vmatpush.bf16.msra.mxu0 0
    %163 = vmatpush.bf16.msra.mxu0 0
    %164 = vmatpush.bf16.msra.mxu0 0
    %165 = vmatpush.bf16.msra.mxu0 0
    %166 = vmatpush.bf16.msra.mxu0 0
    %167 = vmatpush.bf16.msra.mxu0 0
    %168 = vmatpush.bf16.msra.mxu0 %v159
    %169 = vmatpush.bf16.msra.mxu0 %v158
    %170 = vmatmul.bf16.gmra.mxu0 %v128
    %v171 = vpop.f32.mrf.mxu0
    %v172 = vadd.f32 0.0, %v171
    %v173 = vpop.f32.mrf.mxu0
    %v174 = vadd.f32 0.0, %v173
    %175 = vdwg.mxu0
    %v176 = vpack.c.bf16 %v172, %v172
    %v177 = vpack.c.bf16 %v174, %v174
    %v178 = vld [vmem:[#allocation9] sm:$0xf]
    %v179 = vld [vmem:[#allocation9 + $0x4] sm:$0xf]
    %v180 = vld [vmem:[#allocation9 + $0x8] sm:$0xf]
    %v181 = vld [vmem:[#allocation9 + $0xc] sm:$0xf]
    %v186 = vunpack.c.l.b16 %v178
    %v187 = vunpack.c.l.b16 %v179
    %v188 = vunpack.c.l.b16 %v180
    %v189 = vunpack.c.l.b16 %v181
    %v190 = vpack.c.b16 %v187, %v186
    %v191 = vpack.c.b16 %v189, %v188
    %194 = vmatpush.bf16.msra.mxu0 0
    %195 = vmatpush.bf16.msra.mxu0 0
    %196 = vmatpush.bf16.msra.mxu0 0
    %197 = vmatpush.bf16.msra.mxu0 0
    %198 = vmatpush.bf16.msra.mxu0 0
    %199 = vmatpush.bf16.msra.mxu0 0
    %200 = vmatpush.bf16.msra.mxu0 %v191
    %201 = vmatpush.bf16.msra.mxu0 %v190
    %202 = vmatmul.bf16.gmra.mxu0 %v128
    %v203 = vpop.f32.mrf.mxu0
    %v204 = vadd.f32 0.0, %v203
    %v205 = vpop.f32.mrf.mxu0
    %v206 = vadd.f32 0.0, %v205
    %207 = vdwg.mxu0
    %v208 = vpack.c.bf16 %v204, %v204
    %v209 = vpack.c.bf16 %v206, %v206
    %210 = vst.msk [vmem:[#allocation2] sm:$0xff] %vm126, 0.0
    %211 = vst.msk [vmem:[#allocation2 + $0x8] sm:$0xff] %vm126, 0.0
    %vm212 = vcmask 31744
    %v214 = vsel %vm212, %v144, 0
    %v217 = vsel %vm212, %v176, 0
    %219 = vmatpush.bf16.xpose.msra.mxu0 0
    %220 = vmatpush.bf16.xpose.msra.mxu0 0
    %221 = vmatpush.bf16.xpose.msra.mxu0 0
    %222 = vmatpush.bf16.xpose.msra.mxu0 0
    %223 = vmatpush.bf16.xpose.msra.mxu0 0
    %224 = vmatpush.bf16.xpose.msra.mxu0 0
    %225 = vmatpush.bf16.xpose.msra.mxu0 0
    %226 = vmatpush.bf16.xpose.msra.mxu0 %v217
    %227 = vmatmul.bf16.gmra.mxu0 %v214
    %v228 = vpop.f32.mrf.mxu0
    %v229 = vadd.f32 0.0, %v228
    %v230 = vpop.f32.mrf.mxu0
    %231 = vdwg.mxu0
    %v233 = vsel %vm212, %v145, 0
    %v236 = vsel %vm212, %v177, 0
    %238 = vmatpush.bf16.xpose.msra.mxu0 0
    %239 = vmatpush.bf16.xpose.msra.mxu0 0
    %240 = vmatpush.bf16.xpose.msra.mxu0 0
    %241 = vmatpush.bf16.xpose.msra.mxu0 0
    %242 = vmatpush.bf16.xpose.msra.mxu0 0
    %243 = vmatpush.bf16.xpose.msra.mxu0 0
    %244 = vmatpush.bf16.xpose.msra.mxu0 0
    %245 = vmatpush.bf16.xpose.msra.mxu0 %v236
    %246 = vmatmul.bf16.gmra.mxu0 %v233
    %v247 = vpop.f32.mrf.mxu0
    %v248 = vadd.f32 0.0, %v247
    %v249 = vpop.f32.mrf.mxu0
    %250 = vdwg.mxu0
    %vm251 = vcmask 64512
    %v252 = vsel %vm251, %v229, -inf
    %253 = vmax.xlane.f32.xlu0 %v252
    %v254 = vpop.xlane.xlu0 %253
    %v255 = vsel %vm251, %v248, -inf
    %256 = vmax.xlane.f32.xlu0 %v255
    %v257 = vpop.xlane.xlu0 %256
    %v258 = vsub.f32 %v229, %v254
    %v259 = vsub.f32 %v248, %v257
    %v260 = vmul.f32 %v258, 1.442695
    %v261 = vpow.pop %v260
    %v262 = vmul.f32 %v259, 1.442695
    %v263 = vpow.pop %v262
    %v264 = vsel %vm251, %v261, 0.0
    %265 = vadd.xlane.f32.xlu0 %v264
    %v266 = vpop.xlane.xlu0 %265
    %v267 = vsel %vm251, %v263, 0.0
    %268 = vadd.xlane.f32.xlu0 %v267
    %v269 = vpop.xlane.xlu0 %268
    %v270 = vpack.c.bf16 %v261, %v261
    %v271 = vpack.c.bf16 %v263, %v263
    %v273 = vsel %vm251, %v270, 0
    %vm275 = vcmask 1043456
    %v277 = vsel %vm275, %v208, 0
    %279 = vmatpush.bf16.msra.mxu0 0
    %280 = vmatpush.bf16.msra.mxu0 0
    %281 = vmatpush.bf16.msra.mxu0 0
    %282 = vmatpush.bf16.msra.mxu0 0
    %283 = vmatpush.bf16.msra.mxu0 0
    %284 = vmatpush.bf16.msra.mxu0 0
    %285 = vmatpush.bf16.msra.mxu0 0
    %286 = vmatpush.bf16.msra.mxu0 %v277
    %287 = vmatmul.bf16.gmra.mxu0 %v273
    %v288 = vpop.f32.mrf.mxu0
    %v289 = vadd.f32 0.0, %v288
    %v290 = vpop.f32.mrf.mxu0
    %291 = vdwg.mxu0
    %v293 = vsel %vm251, %v271, 0
    %v296 = vsel %vm275, %v209, 0
    %298 = vmatpush.bf16.msra.mxu0 0
    %299 = vmatpush.bf16.msra.mxu0 0
    %300 = vmatpush.bf16.msra.mxu0 0
    %301 = vmatpush.bf16.msra.mxu0 0
    %302 = vmatpush.bf16.msra.mxu0 0
    %303 = vmatpush.bf16.msra.mxu0 0
    %304 = vmatpush.bf16.msra.mxu0 0
    %305 = vmatpush.bf16.msra.mxu0 %v296
    %306 = vmatmul.bf16.gmra.mxu0 %v293
    %v307 = vpop.f32.mrf.mxu0
    %v308 = vadd.f32 0.0, %v307
    %v309 = vpop.f32.mrf.mxu0
    %310 = vdwg.mxu0
    %v311 = vrcp.pop %v266
    %v312 = vrcp.pop %v269
    %v313 = vmul.f32 %v289, %v311
    %v314 = vmul.f32 %v308, %v312
    %v315 = vld [vmem:[#allocation2] sm:$0xff]
    %v316 = vld [vmem:[#allocation2 + $0x8] sm:$0xff]
    %v317 = vpack.c.bf16 %v314, %v313
    %v318 = vld [vmem:[#allocation11] sm:$0x3]
    %v320 = vsel %vm212, %v317, 0
    %vm322 = vcmask 1041408
    %v324 = vsel %vm322, %v318, 0
    %326 = vmatpush.bf16.msra.mxu0 0
    %327 = vmatpush.bf16.msra.mxu0 0
    %328 = vmatpush.bf16.msra.mxu0 0
    %329 = vmatpush.bf16.msra.mxu0 0
    %330 = vmatpush.bf16.msra.mxu0 0
    %331 = vmatpush.bf16.msra.mxu0 0
    %332 = vmatpush.bf16.msra.mxu0 0
    %333 = vmatpush.bf16.msra.mxu0 %v324
    %334 = vmatmul.bf16.gmra.mxu0 %v320
    %v335 = vpop.f32.mrf.mxu0
    %v336 = vadd.f32 0.0, %v335
    %v337 = vpop.f32.mrf.mxu0
    %v338 = vadd.f32 0.0, %v337
    %339 = vdwg.mxu0
    %v340 = vadd.f32 %v315, %v336
    %v341 = vadd.f32 %v316, %v338
    %342 = vst.msk [vmem:[#allocation2] sm:$0xff] %vm126, %v340
    %343 = vst.msk [vmem:[#allocation2 + $0x8] sm:$0xff] %vm126, %v341
    %v345 = vunpack.c.l.b16 %v144
    %v346 = vpack.c.b16 %v345, %v345
    %347 = vrot.lane.b32.xlu0 %v346, 124
    %v348 = vpop.permute.xlu0 %347
    %v350 = vunpack.c.l.b16 %v176
    %v351 = vpack.c.b16 %v350, %v350
    %352 = vrot.lane.b32.xlu0 %v351, 124
    %v353 = vpop.permute.xlu0 %352
    %v355 = vsel %vm212, %v348, 0
    %v358 = vsel %vm212, %v353, 0
    %360 = vmatpush.bf16.xpose.msra.mxu0 0
    %361 = vmatpush.bf16.xpose.msra.mxu0 0
    %362 = vmatpush.bf16.xpose.msra.mxu0 0
    %363 = vmatpush.bf16.xpose.msra.mxu0 0
    %364 = vmatpush.bf16.xpose.msra.mxu0 0
    %365 = vmatpush.bf16.xpose.msra.mxu0 0
    %366 = vmatpush.bf16.xpose.msra.mxu0 0
    %367 = vmatpush.bf16.xpose.msra.mxu0 %v358
    %368 = vmatmul.bf16.gmra.mxu0 %v355
    %v369 = vpop.f32.mrf.mxu0
    %v370 = vadd.f32 0.0, %v369
    %v371 = vpop.f32.mrf.mxu0
    %372 = vdwg.mxu0
    %v374 = vunpack.c.l.b16 %v145
    %v375 = vpack.c.b16 %v374, %v374
    %376 = vrot.lane.b32.xlu0 %v375, 124
    %v377 = vpop.permute.xlu0 %376
    %v379 = vunpack.c.l.b16 %v177
    %v380 = vpack.c.b16 %v379, %v379
    %381 = vrot.lane.b32.xlu0 %v380, 124
    %v382 = vpop.permute.xlu0 %381
    %v384 = vsel %vm212, %v377, 0
    %v387 = vsel %vm212, %v382, 0
    %389 = vmatpush.bf16.xpose.msra.mxu0 0
    %390 = vmatpush.bf16.xpose.msra.mxu0 0
    %391 = vmatpush.bf16.xpose.msra.mxu0 0
    %392 = vmatpush.bf16.xpose.msra.mxu0 0
    %393 = vmatpush.bf16.xpose.msra.mxu0 0
    %394 = vmatpush.bf16.xpose.msra.mxu0 0
    %395 = vmatpush.bf16.xpose.msra.mxu0 0
    %396 = vmatpush.bf16.xpose.msra.mxu0 %v387
    %397 = vmatmul.bf16.gmra.mxu0 %v384
    %v398 = vpop.f32.mrf.mxu0
    %v399 = vadd.f32 0.0, %v398
    %v400 = vpop.f32.mrf.mxu0
    %401 = vdwg.mxu0
    %v402 = vsel %vm251, %v370, -inf
    %403 = vmax.xlane.f32.xlu0 %v402
    %v404 = vpop.xlane.xlu0 %403
    %v405 = vsel %vm251, %v399, -inf
    %406 = vmax.xlane.f32.xlu0 %v405
    %v407 = vpop.xlane.xlu0 %406
    %v408 = vsub.f32 %v370, %v404
    %v409 = vsub.f32 %v399, %v407
    %v410 = vmul.f32 %v408, 1.442695
    %v411 = vpow.pop %v410
    %v412 = vmul.f32 %v409, 1.442695
    %v413 = vpow.pop %v412
    %v414 = vsel %vm251, %v411, 0.0
    %415 = vadd.xlane.f32.xlu0 %v414
    %v416 = vpop.xlane.xlu0 %415
    %v417 = vsel %vm251, %v413, 0.0
    %418 = vadd.xlane.f32.xlu0 %v417
    %v419 = vpop.xlane.xlu0 %418
    %v420 = vpack.c.bf16 %v411, %v411
    %v421 = vpack.c.bf16 %v413, %v413
    %v423 = vunpack.c.l.b16 %v208
    %v424 = vpack.c.b16 %v423, %v423
    %425 = vrot.lane.b32.xlu0 %v424, 124
    %v426 = vpop.permute.xlu0 %425
    %v428 = vsel %vm251, %v420, 0
    %v431 = vsel %vm275, %v426, 0
    %433 = vmatpush.bf16.msra.mxu0 0
    %434 = vmatpush.bf16.msra.mxu0 0
    %435 = vmatpush.bf16.msra.mxu0 0
    %436 = vmatpush.bf16.msra.mxu0 0
    %437 = vmatpush.bf16.msra.mxu0 0
    %438 = vmatpush.bf16.msra.mxu0 0
    %439 = vmatpush.bf16.msra.mxu0 0
    %440 = vmatpush.bf16.msra.mxu0 %v431
    %441 = vmatmul.bf16.gmra.mxu0 %v428
    %v442 = vpop.f32.mrf.mxu0
    %v443 = vadd.f32 0.0, %v442
    %v444 = vpop.f32.mrf.mxu0
    %445 = vdwg.mxu0
    %v447 = vunpack.c.l.b16 %v209
    %v448 = vpack.c.b16 %v447, %v447
    %449 = vrot.lane.b32.xlu0 %v448, 124
    %v450 = vpop.permute.xlu0 %449
    %v452 = vsel %vm251, %v421, 0
    %v455 = vsel %vm275, %v450, 0
    %457 = vmatpush.bf16.msra.mxu0 0
    %458 = vmatpush.bf16.msra.mxu0 0
    %459 = vmatpush.bf16.msra.mxu0 0
    %460 = vmatpush.bf16.msra.mxu0 0
    %461 = vmatpush.bf16.msra.mxu0 0
    %462 = vmatpush.bf16.msra.mxu0 0
    %463 = vmatpush.bf16.msra.mxu0 0
    %464 = vmatpush.bf16.msra.mxu0 %v455
    %465 = vmatmul.bf16.gmra.mxu0 %v452
    %v466 = vpop.f32.mrf.mxu0
    %v467 = vadd.f32 0.0, %v466
    %v468 = vpop.f32.mrf.mxu0
    %469 = vdwg.mxu0
    %v470 = vrcp.pop %v416
    %v471 = vrcp.pop %v419
    %v472 = vmul.f32 %v443, %v470
    %v473 = vmul.f32 %v467, %v471
    %v474 = vld [vmem:[#allocation2] sm:$0xff]
    %v475 = vld [vmem:[#allocation2 + $0x8] sm:$0xff]
    %v476 = vpack.c.bf16 %v473, %v472
    %v477 = vld [vmem:[#allocation11] sm:$0xc]
    %v479 = vunpack.c.l.b16 %v477
    %v480 = vpack.c.b16 %v479, %v479
    %v481 = vrot.slane %v480, 2
    %v483 = vsel %vm212, %v476, 0
    %v486 = vsel %vm322, %v481, 0
    %488 = vmatpush.bf16.msra.mxu0 0
    %489 = vmatpush.bf16.msra.mxu0 0
    %490 = vmatpush.bf16.msra.mxu0 0
    %491 = vmatpush.bf16.msra.mxu0 0
    %492 = vmatpush.bf16.msra.mxu0 0
    %493 = vmatpush.bf16.msra.mxu0 0
    %494 = vmatpush.bf16.msra.mxu0 0
    %495 = vmatpush.bf16.msra.mxu0 %v486
    %496 = vmatmul.bf16.gmra.mxu0 %v483
    %v497 = vpop.f32.mrf.mxu0
    %v498 = vadd.f32 0.0, %v497
    %v499 = vpop.f32.mrf.mxu0
    %v500 = vadd.f32 0.0, %v499
    %501 = vdwg.mxu0
    %v502 = vadd.f32 %v474, %v498
    %v503 = vadd.f32 %v475, %v500
    %504 = vst.msk [vmem:[#allocation2] sm:$0xff] %vm126, %v502
    %505 = vst.msk [vmem:[#allocation2 + $0x8] sm:$0xff] %vm126, %v503
    %506 = vrot.lane.b32.xlu0 %v346, 120
    %v507 = vpop.permute.xlu0 %506
    %508 = vrot.lane.b32.xlu0 %v351, 120
    %v509 = vpop.permute.xlu0 %508
    %v511 = vsel %vm212, %v507, 0
    %v514 = vsel %vm212, %v509, 0
    %516 = vmatpush.bf16.xpose.msra.mxu0 0
    %517 = vmatpush.bf16.xpose.msra.mxu0 0
    %518 = vmatpush.bf16.xpose.msra.mxu0 0
    %519 = vmatpush.bf16.xpose.msra.mxu0 0
    %520 = vmatpush.bf16.xpose.msra.mxu0 0
    %521 = vmatpush.bf16.xpose.msra.mxu0 0
    %522 = vmatpush.bf16.xpose.msra.mxu0 0
    %523 = vmatpush.bf16.xpose.msra.mxu0 %v514
    %524 = vmatmul.bf16.gmra.mxu0 %v511
    %v525 = vpop.f32.mrf.mxu0
    %v526 = vadd.f32 0.0, %v525
    %v527 = vpop.f32.mrf.mxu0
    %528 = vdwg.mxu0
    %529 = vrot.lane.b32.xlu0 %v375, 120
    %v530 = vpop.permute.xlu0 %529
    %531 = vrot.lane.b32.xlu0 %v380, 120
    %v532 = vpop.permute.xlu0 %531
    %v534 = vsel %vm212, %v530, 0
    %v537 = vsel %vm212, %v532, 0
    %539 = vmatpush.bf16.xpose.msra.mxu0 0
    %540 = vmatpush.bf16.xpose.msra.mxu0 0
    %541 = vmatpush.bf16.xpose.msra.mxu0 0
    %542 = vmatpush.bf16.xpose.msra.mxu0 0
    %543 = vmatpush.bf16.xpose.msra.mxu0 0
    %544 = vmatpush.bf16.xpose.msra.mxu0 0
    %545 = vmatpush.bf16.xpose.msra.mxu0 0
    %546 = vmatpush.bf16.xpose.msra.mxu0 %v537
    %547 = vmatmul.bf16.gmra.mxu0 %v534
    %v548 = vpop.f32.mrf.mxu0
    %v549 = vadd.f32 0.0, %v548
    %v550 = vpop.f32.mrf.mxu0
    %551 = vdwg.mxu0
    %v552 = vsel %vm251, %v526, -inf
    %553 = vmax.xlane.f32.xlu0 %v552
    %v554 = vpop.xlane.xlu0 %553
    %v555 = vsel %vm251, %v549, -inf
    %556 = vmax.xlane.f32.xlu0 %v555
    %v557 = vpop.xlane.xlu0 %556
    %v558 = vsub.f32 %v526, %v554
    %v559 = vsub.f32 %v549, %v557
    %v560 = vmul.f32 %v558, 1.442695
    %v561 = vpow.pop %v560
    %v562 = vmul.f32 %v559, 1.442695
    %v563 = vpow.pop %v562
    %v564 = vsel %vm251, %v561, 0.0
    %565 = vadd.xlane.f32.xlu0 %v564
    %v566 = vpop.xlane.xlu0 %565
    %v567 = vsel %vm251, %v563, 0.0
    %568 = vadd.xlane.f32.xlu0 %v567
    %v569 = vpop.xlane.xlu0 %568
    %v570 = vpack.c.bf16 %v561, %v561
    %v571 = vpack.c.bf16 %v563, %v563
    %572 = vrot.lane.b32.xlu0 %v424, 120
    %v573 = vpop.permute.xlu0 %572
    %v575 = vsel %vm251, %v570, 0
    %v578 = vsel %vm275, %v573, 0
    %580 = vmatpush.bf16.msra.mxu0 0
    %581 = vmatpush.bf16.msra.mxu0 0
    %582 = vmatpush.bf16.msra.mxu0 0
    %583 = vmatpush.bf16.msra.mxu0 0
    %584 = vmatpush.bf16.msra.mxu0 0
    %585 = vmatpush.bf16.msra.mxu0 0
    %586 = vmatpush.bf16.msra.mxu0 0
    %587 = vmatpush.bf16.msra.mxu0 %v578
    %588 = vmatmul.bf16.gmra.mxu0 %v575
    %v589 = vpop.f32.mrf.mxu0
    %v590 = vadd.f32 0.0, %v589
    %v591 = vpop.f32.mrf.mxu0
    %592 = vdwg.mxu0
    %593 = vrot.lane.b32.xlu0 %v448, 120
    %v594 = vpop.permute.xlu0 %593
    %v596 = vsel %vm251, %v571, 0
    %v599 = vsel %vm275, %v594, 0
    %601 = vmatpush.bf16.msra.mxu0 0
    %602 = vmatpush.bf16.msra.mxu0 0
    %603 = vmatpush.bf16.msra.mxu0 0
    %604 = vmatpush.bf16.msra.mxu0 0
    %605 = vmatpush.bf16.msra.mxu0 0
    %606 = vmatpush.bf16.msra.mxu0 0
    %607 = vmatpush.bf16.msra.mxu0 0
    %608 = vmatpush.bf16.msra.mxu0 %v599
    %609 = vmatmul.bf16.gmra.mxu0 %v596
    %v610 = vpop.f32.mrf.mxu0
    %v611 = vadd.f32 0.0, %v610
    %v612 = vpop.f32.mrf.mxu0
    %613 = vdwg.mxu0
    %v614 = vrcp.pop %v566
    %v615 = vrcp.pop %v569
    %v616 = vmul.f32 %v590, %v614
    %v617 = vmul.f32 %v611, %v615
    %v618 = vld [vmem:[#allocation2] sm:$0xff]
    %v619 = vld [vmem:[#allocation2 + $0x8] sm:$0xff]
    %v620 = vpack.c.bf16 %v617, %v616
    %v621 = vld [vmem:[#allocation11 + $0x4] sm:$0x3]
    %v623 = vsel %vm212, %v620, 0
    %v626 = vsel %vm322, %v621, 0
    %628 = vmatpush.bf16.msra.mxu0 0
    %629 = vmatpush.bf16.msra.mxu0 0
    %630 = vmatpush.bf16.msra.mxu0 0
    %631 = vmatpush.bf16.msra.mxu0 0
    %632 = vmatpush.bf16.msra.mxu0 0
    %633 = vmatpush.bf16.msra.mxu0 0
    %634 = vmatpush.bf16.msra.mxu0 0
    %635 = vmatpush.bf16.msra.mxu0 %v626
    %636 = vmatmul.bf16.gmra.mxu0 %v623
    %v637 = vpop.f32.mrf.mxu0
    %v638 = vadd.f32 0.0, %v637
    %v639 = vpop.f32.mrf.mxu0
    %v640 = vadd.f32 0.0, %v639
    %641 = vdwg.mxu0
    %v642 = vadd.f32 %v618, %v638
    %v643 = vadd.f32 %v619, %v640
    %644 = vst.msk [vmem:[#allocation2] sm:$0xff] %vm126, %v642
    %645 = vst.msk [vmem:[#allocation2 + $0x8] sm:$0xff] %vm126, %v643
    %646 = vrot.lane.b32.xlu0 %v346, 116
    %v647 = vpop.permute.xlu0 %646
    %648 = vrot.lane.b32.xlu0 %v351, 116
    %v649 = vpop.permute.xlu0 %648
    %v651 = vsel %vm212, %v647, 0
    %v654 = vsel %vm212, %v649, 0
    %656 = vmatpush.bf16.xpose.msra.mxu0 0
    %657 = vmatpush.bf16.xpose.msra.mxu0 0
    %658 = vmatpush.bf16.xpose.msra.mxu0 0
    %659 = vmatpush.bf16.xpose.msra.mxu0 0
    %660 = vmatpush.bf16.xpose.msra.mxu0 0
    %661 = vmatpush.bf16.xpose.msra.mxu0 0
    %662 = vmatpush.bf16.xpose.msra.mxu0 0
    %663 = vmatpush.bf16.xpose.msra.mxu0 %v654
    %664 = vmatmul.bf16.gmra.mxu0 %v651
    %v665 = vpop.f32.mrf.mxu0
    %v666 = vadd.f32 0.0, %v665
    %v667 = vpop.f32.mrf.mxu0
    %668 = vdwg.mxu0
    %669 = vrot.lane.b32.xlu0 %v375, 116
    %v670 = vpop.permute.xlu0 %669
    %671 = vrot.lane.b32.xlu0 %v380, 116
    %v672 = vpop.permute.xlu0 %671
    %v674 = vsel %vm212, %v670, 0
    %v677 = vsel %vm212, %v672, 0
    %679 = vmatpush.bf16.xpose.msra.mxu0 0
    %680 = vmatpush.bf16.xpose.msra.mxu0 0
    %681 = vmatpush.bf16.xpose.msra.mxu0 0
    %682 = vmatpush.bf16.xpose.msra.mxu0 0
    %683 = vmatpush.bf16.xpose.msra.mxu0 0
    %684 = vmatpush.bf16.xpose.msra.mxu0 0
    %685 = vmatpush.bf16.xpose.msra.mxu0 0
    %686 = vmatpush.bf16.xpose.msra.mxu0 %v677
    %687 = vmatmul.bf16.gmra.mxu0 %v674
    %v688 = vpop.f32.mrf.mxu0
    %v689 = vadd.f32 0.0, %v688
    %v690 = vpop.f32.mrf.mxu0
    %691 = vdwg.mxu0
    %v692 = vsel %vm251, %v666, -inf
    %693 = vmax.xlane.f32.xlu0 %v692
    %v694 = vpop.xlane.xlu0 %693
    %v695 = vsel %vm251, %v689, -inf
    %696 = vmax.xlane.f32.xlu0 %v695
    %v697 = vpop.xlane.xlu0 %696
    %v698 = vsub.f32 %v666, %v694
    %v699 = vsub.f32 %v689, %v697
    %v700 = vmul.f32 %v698, 1.442695
    %v701 = vpow.pop %v700
    %v702 = vmul.f32 %v699, 1.442695
    %v703 = vpow.pop %v702
    %v704 = vsel %vm251, %v701, 0.0
    %705 = vadd.xlane.f32.xlu0 %v704
    %v706 = vpop.xlane.xlu0 %705
    %v707 = vsel %vm251, %v703, 0.0
    %708 = vadd.xlane.f32.xlu0 %v707
    %v709 = vpop.xlane.xlu0 %708
    %v710 = vpack.c.bf16 %v701, %v701
    %v711 = vpack.c.bf16 %v703, %v703
    %712 = vrot.lane.b32.xlu0 %v424, 116
    %v713 = vpop.permute.xlu0 %712
    %v715 = vsel %vm251, %v710, 0
    %v718 = vsel %vm275, %v713, 0
    %720 = vmatpush.bf16.msra.mxu0 0
    %721 = vmatpush.bf16.msra.mxu0 0
    %722 = vmatpush.bf16.msra.mxu0 0
    %723 = vmatpush.bf16.msra.mxu0 0
    %724 = vmatpush.bf16.msra.mxu0 0
    %725 = vmatpush.bf16.msra.mxu0 0
    %726 = vmatpush.bf16.msra.mxu0 0
    %727 = vmatpush.bf16.msra.mxu0 %v718
    %728 = vmatmul.bf16.gmra.mxu0 %v715
    %v729 = vpop.f32.mrf.mxu0
    %v730 = vadd.f32 0.0, %v729
    %v731 = vpop.f32.mrf.mxu0
    %732 = vdwg.mxu0
    %733 = vrot.lane.b32.xlu0 %v448, 116
    %v734 = vpop.permute.xlu0 %733
    %v736 = vsel %vm251, %v711, 0
    %v739 = vsel %vm275, %v734, 0
    %741 = vmatpush.bf16.msra.mxu0 0
    %742 = vmatpush.bf16.msra.mxu0 0
    %743 = vmatpush.bf16.msra.mxu0 0
    %744 = vmatpush.bf16.msra.mxu0 0
    %745 = vmatpush.bf16.msra.mxu0 0
    %746 = vmatpush.bf16.msra.mxu0 0
    %747 = vmatpush.bf16.msra.mxu0 0
    %748 = vmatpush.bf16.msra.mxu0 %v739
    %749 = vmatmul.bf16.gmra.mxu0 %v736
    %v750 = vpop.f32.mrf.mxu0
    %v751 = vadd.f32 0.0, %v750
    %v752 = vpop.f32.mrf.mxu0
    %753 = vdwg.mxu0
    %v754 = vrcp.pop %v706
    %v755 = vrcp.pop %v709
    %v756 = vmul.f32 %v730, %v754
    %v757 = vmul.f32 %v751, %v755
    %v758 = vld [vmem:[#allocation2] sm:$0xff]
    %v759 = vld [vmem:[#allocation2 + $0x8] sm:$0xff]
    %v760 = vpack.c.bf16 %v757, %v756
    %v761 = vld [vmem:[#allocation11 + $0x4] sm:$0xc]
    %v763 = vunpack.c.l.b16 %v761
    %v764 = vpack.c.b16 %v763, %v763
    %v765 = vrot.slane %v764, 2
    %v767 = vsel %vm212, %v760, 0
    %v770 = vsel %vm322, %v765, 0
    %772 = vmatpush.bf16.msra.mxu0 0
    %773 = vmatpush.bf16.msra.mxu0 0
    %774 = vmatpush.bf16.msra.mxu0 0
    %775 = vmatpush.bf16.msra.mxu0 0
    %776 = vmatpush.bf16.msra.mxu0 0
    %777 = vmatpush.bf16.msra.mxu0 0
    %778 = vmatpush.bf16.msra.mxu0 0
    %779 = vmatpush.bf16.msra.mxu0 %v770
    %780 = vmatmul.bf16.gmra.mxu0 %v767
    %v781 = vpop.f32.mrf.mxu0
    %v782 = vadd.f32 0.0, %v781
    %v783 = vpop.f32.mrf.mxu0
    %v784 = vadd.f32 0.0, %v783
    %785 = vdwg.mxu0
    %v786 = vadd.f32 %v758, %v782
    %v787 = vadd.f32 %v759, %v784
    %788 = vst.msk [vmem:[#allocation2] sm:$0xff] %vm126, %v786
    %789 = vst.msk [vmem:[#allocation2 + $0x8] sm:$0xff] %vm126, %v787
    %790 = vrot.lane.b32.xlu0 %v346, 112
    %v791 = vpop.permute.xlu0 %790
    %792 = vrot.lane.b32.xlu0 %v351, 112
    %v793 = vpop.permute.xlu0 %792
    %v795 = vsel %vm212, %v791, 0
    %v798 = vsel %vm212, %v793, 0
    %800 = vmatpush.bf16.xpose.msra.mxu0 0
    %801 = vmatpush.bf16.xpose.msra.mxu0 0
    %802 = vmatpush.bf16.xpose.msra.mxu0 0
    %803 = vmatpush.bf16.xpose.msra.mxu0 0
    %804 = vmatpush.bf16.xpose.msra.mxu0 0
    %805 = vmatpush.bf16.xpose.msra.mxu0 0
    %806 = vmatpush.bf16.xpose.msra.mxu0 0
    %807 = vmatpush.bf16.xpose.msra.mxu0 %v798
    %808 = vmatmul.bf16.gmra.mxu0 %v795
    %v809 = vpop.f32.mrf.mxu0
    %v810 = vadd.f32 0.0, %v809
    %v811 = vpop.f32.mrf.mxu0
    %812 = vdwg.mxu0
    %813 = vrot.lane.b32.xlu0 %v375, 112
    %v814 = vpop.permute.xlu0 %813
    %815 = vrot.lane.b32.xlu0 %v380, 112
    %v816 = vpop.permute.xlu0 %815
    %v818 = vsel %vm212, %v814, 0
    %v821 = vsel %vm212, %v816, 0
    %823 = vmatpush.bf16.xpose.msra.mxu0 0
    %824 = vmatpush.bf16.xpose.msra.mxu0 0
    %825 = vmatpush.bf16.xpose.msra.mxu0 0
    %826 = vmatpush.bf16.xpose.msra.mxu0 0
    %827 = vmatpush.bf16.xpose.msra.mxu0 0
    %828 = vmatpush.bf16.xpose.msra.mxu0 0
    %829 = vmatpush.bf16.xpose.msra.mxu0 0
    %830 = vmatpush.bf16.xpose.msra.mxu0 %v821
    %831 = vmatmul.bf16.gmra.mxu0 %v818
    %v832 = vpop.f32.mrf.mxu0
    %v833 = vadd.f32 0.0, %v832
    %v834 = vpop.f32.mrf.mxu0
    %835 = vdwg.mxu0
    %v836 = vsel %vm251, %v810, -inf
    %837 = vmax.xlane.f32.xlu0 %v836
    %v838 = vpop.xlane.xlu0 %837
    %v839 = vsel %vm251, %v833, -inf
    %840 = vmax.xlane.f32.xlu0 %v839
    %v841 = vpop.xlane.xlu0 %840
    %v842 = vsub.f32 %v810, %v838
    %v843 = vsub.f32 %v833, %v841
    %v844 = vmul.f32 %v842, 1.442695
    %v845 = vpow.pop %v844
    %v846 = vmul.f32 %v843, 1.442695
    %v847 = vpow.pop %v846
    %v848 = vsel %vm251, %v845, 0.0
    %849 = vadd.xlane.f32.xlu0 %v848
    %v850 = vpop.xlane.xlu0 %849
    %v851 = vsel %vm251, %v847, 0.0
    %852 = vadd.xlane.f32.xlu0 %v851
    %v853 = vpop.xlane.xlu0 %852
    %v854 = vpack.c.bf16 %v845, %v845
    %v855 = vpack.c.bf16 %v847, %v847
    %856 = vrot.lane.b32.xlu0 %v424, 112
    %v857 = vpop.permute.xlu0 %856
    %v859 = vsel %vm251, %v854, 0
    %v862 = vsel %vm275, %v857, 0
    %864 = vmatpush.bf16.msra.mxu0 0
    %865 = vmatpush.bf16.msra.mxu0 0
    %866 = vmatpush.bf16.msra.mxu0 0
    %867 = vmatpush.bf16.msra.mxu0 0
    %868 = vmatpush.bf16.msra.mxu0 0
    %869 = vmatpush.bf16.msra.mxu0 0
    %870 = vmatpush.bf16.msra.mxu0 0
    %871 = vmatpush.bf16.msra.mxu0 %v862
    %872 = vmatmul.bf16.gmra.mxu0 %v859
    %v873 = vpop.f32.mrf.mxu0
    %v874 = vadd.f32 0.0, %v873
    %v875 = vpop.f32.mrf.mxu0
    %876 = vdwg.mxu0
    %877 = vrot.lane.b32.xlu0 %v448, 112
    %v878 = vpop.permute.xlu0 %877
    %v880 = vsel %vm251, %v855, 0
    %v883 = vsel %vm275, %v878, 0
    %885 = vmatpush.bf16.msra.mxu0 0
    %886 = vmatpush.bf16.msra.mxu0 0
    %887 = vmatpush.bf16.msra.mxu0 0
    %888 = vmatpush.bf16.msra.mxu0 0
    %889 = vmatpush.bf16.msra.mxu0 0
    %890 = vmatpush.bf16.msra.mxu0 0
    %891 = vmatpush.bf16.msra.mxu0 0
    %892 = vmatpush.bf16.msra.mxu0 %v883
    %893 = vmatmul.bf16.gmra.mxu0 %v880
    %v894 = vpop.f32.mrf.mxu0
    %v895 = vadd.f32 0.0, %v894
    %v896 = vpop.f32.mrf.mxu0
    %897 = vdwg.mxu0
    %v898 = vrcp.pop %v850
    %v899 = vrcp.pop %v853
    %v900 = vmul.f32 %v874, %v898
    %v901 = vmul.f32 %v895, %v899
    %v902 = vld [vmem:[#allocation2] sm:$0xff]
    %v903 = vld [vmem:[#allocation2 + $0x8] sm:$0xff]
    %v904 = vpack.c.bf16 %v901, %v900
    %v905 = vld [vmem:[#allocation11 + $0x8] sm:$0x3]
    %v907 = vsel %vm212, %v904, 0
    %v910 = vsel %vm322, %v905, 0
    %912 = vmatpush.bf16.msra.mxu0 0
    %913 = vmatpush.bf16.msra.mxu0 0
    %914 = vmatpush.bf16.msra.mxu0 0
    %915 = vmatpush.bf16.msra.mxu0 0
    %916 = vmatpush.bf16.msra.mxu0 0
    %917 = vmatpush.bf16.msra.mxu0 0
    %918 = vmatpush.bf16.msra.mxu0 0
    %919 = vmatpush.bf16.msra.mxu0 %v910
    %920 = vmatmul.bf16.gmra.mxu0 %v907
    %v921 = vpop.f32.mrf.mxu0
    %v922 = vadd.f32 0.0, %v921
    %v923 = vpop.f32.mrf.mxu0
    %v924 = vadd.f32 0.0, %v923
    %925 = vdwg.mxu0
    %v926 = vadd.f32 %v902, %v922
    %v927 = vadd.f32 %v903, %v924
    %928 = vst.msk [vmem:[#allocation2] sm:$0xff] %vm126, %v926
    %929 = vst.msk [vmem:[#allocation2 + $0x8] sm:$0xff] %vm126, %v927
    %930 = vrot.lane.b32.xlu0 %v346, 108
    %v931 = vpop.permute.xlu0 %930
    %932 = vrot.lane.b32.xlu0 %v351, 108
    %v933 = vpop.permute.xlu0 %932
    %v935 = vsel %vm212, %v931, 0
    %v938 = vsel %vm212, %v933, 0
    %940 = vmatpush.bf16.xpose.msra.mxu0 0
    %941 = vmatpush.bf16.xpose.msra.mxu0 0
    %942 = vmatpush.bf16.xpose.msra.mxu0 0
    %943 = vmatpush.bf16.xpose.msra.mxu0 0
    %944 = vmatpush.bf16.xpose.msra.mxu0 0
    %945 = vmatpush.bf16.xpose.msra.mxu0 0
    %946 = vmatpush.bf16.xpose.msra.mxu0 0
    %947 = vmatpush.bf16.xpose.msra.mxu0 %v938
    %948 = vmatmul.bf16.gmra.mxu0 %v935
    %v949 = vpop.f32.mrf.mxu0
    %v950 = vadd.f32 0.0, %v949
    %v951 = vpop.f32.mrf.mxu0
    %952 = vdwg.mxu0
    %953 = vrot.lane.b32.xlu0 %v375, 108
    %v954 = vpop.permute.xlu0 %953
    %955 = vrot.lane.b32.xlu0 %v380, 108
    %v956 = vpop.permute.xlu0 %955
    %v958 = vsel %vm212, %v954, 0
    %v961 = vsel %vm212, %v956, 0
    %963 = vmatpush.bf16.xpose.msra.mxu0 0
    %964 = vmatpush.bf16.xpose.msra.mxu0 0
    %965 = vmatpush.bf16.xpose.msra.mxu0 0
    %966 = vmatpush.bf16.xpose.msra.mxu0 0
    %967 = vmatpush.bf16.xpose.msra.mxu0 0
    %968 = vmatpush.bf16.xpose.msra.mxu0 0
    %969 = vmatpush.bf16.xpose.msra.mxu0 0
    %970 = vmatpush.bf16.xpose.msra.mxu0 %v961
    %971 = vmatmul.bf16.gmra.mxu0 %v958
    %v972 = vpop.f32.mrf.mxu0
    %v973 = vadd.f32 0.0, %v972
    %v974 = vpop.f32.mrf.mxu0
    %975 = vdwg.mxu0
    %v976 = vsel %vm251, %v950, -inf
    %977 = vmax.xlane.f32.xlu0 %v976
    %v978 = vpop.xlane.xlu0 %977
    %v979 = vsel %vm251, %v973, -inf
    %980 = vmax.xlane.f32.xlu0 %v979
    %v981 = vpop.xlane.xlu0 %980
    %v982 = vsub.f32 %v950, %v978
    %v983 = vsub.f32 %v973, %v981
    %v984 = vmul.f32 %v982, 1.442695
    %v985 = vpow.pop %v984
    %v986 = vmul.f32 %v983, 1.442695
    %v987 = vpow.pop %v986
    %v988 = vsel %vm251, %v985, 0.0
    %989 = vadd.xlane.f32.xlu0 %v988
    %v990 = vpop.xlane.xlu0 %989
    %v991 = vsel %vm251, %v987, 0.0
    %992 = vadd.xlane.f32.xlu0 %v991
    %v993 = vpop.xlane.xlu0 %992
    %v994 = vpack.c.bf16 %v985, %v985
    %v995 = vpack.c.bf16 %v987, %v987
    %996 = vrot.lane.b32.xlu0 %v424, 108
    %v997 = vpop.permute.xlu0 %996
    %v999 = vsel %vm251, %v994, 0
    %v1002 = vsel %vm275, %v997, 0
    %1004 = vmatpush.bf16.msra.mxu0 0
    %1005 = vmatpush.bf16.msra.mxu0 0
    %1006 = vmatpush.bf16.msra.mxu0 0
    %1007 = vmatpush.bf16.msra.mxu0 0
    %1008 = vmatpush.bf16.msra.mxu0 0
    %1009 = vmatpush.bf16.msra.mxu0 0
    %1010 = vmatpush.bf16.msra.mxu0 0
    %1011 = vmatpush.bf16.msra.mxu0 %v1002
    %1012 = vmatmul.bf16.gmra.mxu0 %v999
    %v1013 = vpop.f32.mrf.mxu0
    %v1014 = vadd.f32 0.0, %v1013
    %v1015 = vpop.f32.mrf.mxu0
    %1016 = vdwg.mxu0
    %1017 = vrot.lane.b32.xlu0 %v448, 108
    %v1018 = vpop.permute.xlu0 %1017
    %v1020 = vsel %vm251, %v995, 0
    %v1023 = vsel %vm275, %v1018, 0
    %1025 = vmatpush.bf16.msra.mxu0 0
    %1026 = vmatpush.bf16.msra.mxu0 0
    %1027 = vmatpush.bf16.msra.mxu0 0
    %1028 = vmatpush.bf16.msra.mxu0 0
    %1029 = vmatpush.bf16.msra.mxu0 0
    %1030 = vmatpush.bf16.msra.mxu0 0
    %1031 = vmatpush.bf16.msra.mxu0 0
    %1032 = vmatpush.bf16.msra.mxu0 %v1023
    %1033 = vmatmul.bf16.gmra.mxu0 %v1020
    %v1034 = vpop.f32.mrf.mxu0
    %v1035 = vadd.f32 0.0, %v1034
    %v1036 = vpop.f32.mrf.mxu0
    %1037 = vdwg.mxu0
    %v1038 = vrcp.pop %v990
    %v1039 = vrcp.pop %v993
    %v1040 = vmul.f32 %v1014, %v1038
    %v1041 = vmul.f32 %v1035, %v1039
    %v1042 = vld [vmem:[#allocation2] sm:$0xff]
    %v1043 = vld [vmem:[#allocation2 + $0x8] sm:$0xff]
    %v1044 = vpack.c.bf16 %v1041, %v1040
    %v1045 = vld [vmem:[#allocation11 + $0x8] sm:$0xc]
    %v1047 = vunpack.c.l.b16 %v1045
    %v1048 = vpack.c.b16 %v1047, %v1047
    %v1049 = vrot.slane %v1048, 2
    %v1051 = vsel %vm212, %v1044, 0
    %v1054 = vsel %vm322, %v1049, 0
    %1056 = vmatpush.bf16.msra.mxu0 0
    %1057 = vmatpush.bf16.msra.mxu0 0
    %1058 = vmatpush.bf16.msra.mxu0 0
    %1059 = vmatpush.bf16.msra.mxu0 0
    %1060 = vmatpush.bf16.msra.mxu0 0
    %1061 = vmatpush.bf16.msra.mxu0 0
    %1062 = vmatpush.bf16.msra.mxu0 0
    %1063 = vmatpush.bf16.msra.mxu0 %v1054
    %1064 = vmatmul.bf16.gmra.mxu0 %v1051
    %v1065 = vpop.f32.mrf.mxu0
    %v1066 = vadd.f32 0.0, %v1065
    %v1067 = vpop.f32.mrf.mxu0
    %v1068 = vadd.f32 0.0, %v1067
    %1069 = vdwg.mxu0
    %v1070 = vadd.f32 %v1042, %v1066
    %v1071 = vadd.f32 %v1043, %v1068
    %1072 = vst.msk [vmem:[#allocation2] sm:$0xff] %vm126, %v1070
    %1073 = vst.msk [vmem:[#allocation2 + $0x8] sm:$0xff] %vm126, %v1071
    %1074 = vrot.lane.b32.xlu0 %v346, 104
    %v1075 = vpop.permute.xlu0 %1074
    %1076 = vrot.lane.b32.xlu0 %v351, 104
    %v1077 = vpop.permute.xlu0 %1076
    %v1079 = vsel %vm212, %v1075, 0
    %v1082 = vsel %vm212, %v1077, 0
    %1084 = vmatpush.bf16.xpose.msra.mxu0 0
    %1085 = vmatpush.bf16.xpose.msra.mxu0 0
    %1086 = vmatpush.bf16.xpose.msra.mxu0 0
    %1087 = vmatpush.bf16.xpose.msra.mxu0 0
    %1088 = vmatpush.bf16.xpose.msra.mxu0 0
    %1089 = vmatpush.bf16.xpose.msra.mxu0 0
    %1090 = vmatpush.bf16.xpose.msra.mxu0 0
    %1091 = vmatpush.bf16.xpose.msra.mxu0 %v1082
    %1092 = vmatmul.bf16.gmra.mxu0 %v1079
    %v1093 = vpop.f32.mrf.mxu0
    %v1094 = vadd.f32 0.0, %v1093
    %v1095 = vpop.f32.mrf.mxu0
    %1096 = vdwg.mxu0
    %1097 = vrot.lane.b32.xlu0 %v375, 104
    %v1098 = vpop.permute.xlu0 %1097
    %1099 = vrot.lane.b32.xlu0 %v380, 104
    %v1100 = vpop.permute.xlu0 %1099
    %v1102 = vsel %vm212, %v1098, 0
    %v1105 = vsel %vm212, %v1100, 0
    %1107 = vmatpush.bf16.xpose.msra.mxu0 0
    %1108 = vmatpush.bf16.xpose.msra.mxu0 0
    %1109 = vmatpush.bf16.xpose.msra.mxu0 0
    %1110 = vmatpush.bf16.xpose.msra.mxu0 0
    %1111 = vmatpush.bf16.xpose.msra.mxu0 0
    %1112 = vmatpush.bf16.xpose.msra.mxu0 0
    %1113 = vmatpush.bf16.xpose.msra.mxu0 0
    %1114 = vmatpush.bf16.xpose.msra.mxu0 %v1105
    %1115 = vmatmul.bf16.gmra.mxu0 %v1102
    %v1116 = vpop.f32.mrf.mxu0
    %v1117 = vadd.f32 0.0, %v1116
    %v1118 = vpop.f32.mrf.mxu0
    %1119 = vdwg.mxu0
    %v1120 = vsel %vm251, %v1094, -inf
    %1121 = vmax.xlane.f32.xlu0 %v1120
    %v1122 = vpop.xlane.xlu0 %1121
    %v1123 = vsel %vm251, %v1117, -inf
    %1124 = vmax.xlane.f32.xlu0 %v1123
    %v1125 = vpop.xlane.xlu0 %1124
    %v1126 = vsub.f32 %v1094, %v1122
    %v1127 = vsub.f32 %v1117, %v1125
    %v1128 = vmul.f32 %v1126, 1.442695
    %v1129 = vpow.pop %v1128
    %v1130 = vmul.f32 %v1127, 1.442695
    %v1131 = vpow.pop %v1130
    %v1132 = vsel %vm251, %v1129, 0.0
    %1133 = vadd.xlane.f32.xlu0 %v1132
    %v1134 = vpop.xlane.xlu0 %1133
    %v1135 = vsel %vm251, %v1131, 0.0
    %1136 = vadd.xlane.f32.xlu0 %v1135
    %v1137 = vpop.xlane.xlu0 %1136
    %v1138 = vpack.c.bf16 %v1129, %v1129
    %v1139 = vpack.c.bf16 %v1131, %v1131
    %1140 = vrot.lane.b32.xlu0 %v424, 104
    %v1141 = vpop.permute.xlu0 %1140
    %v1143 = vsel %vm251, %v1138, 0
    %v1146 = vsel %vm275, %v1141, 0
    %1148 = vmatpush.bf16.msra.mxu0 0
    %1149 = vmatpush.bf16.msra.mxu0 0
    %1150 = vmatpush.bf16.msra.mxu0 0
    %1151 = vmatpush.bf16.msra.mxu0 0
    %1152 = vmatpush.bf16.msra.mxu0 0
    %1153 = vmatpush.bf16.msra.mxu0 0
    %1154 = vmatpush.bf16.msra.mxu0 0
    %1155 = vmatpush.bf16.msra.mxu0 %v1146
    %1156 = vmatmul.bf16.gmra.mxu0 %v1143
    %v1157 = vpop.f32.mrf.mxu0
    %v1158 = vadd.f32 0.0, %v1157
    %v1159 = vpop.f32.mrf.mxu0
    %1160 = vdwg.mxu0
    %1161 = vrot.lane.b32.xlu0 %v448, 104
    %v1162 = vpop.permute.xlu0 %1161
    %v1164 = vsel %vm251, %v1139, 0
    %v1167 = vsel %vm275, %v1162, 0
    %1169 = vmatpush.bf16.msra.mxu0 0
    %1170 = vmatpush.bf16.msra.mxu0 0
    %1171 = vmatpush.bf16.msra.mxu0 0
    %1172 = vmatpush.bf16.msra.mxu0 0
    %1173 = vmatpush.bf16.msra.mxu0 0
    %1174 = vmatpush.bf16.msra.mxu0 0
    %1175 = vmatpush.bf16.msra.mxu0 0
    %1176 = vmatpush.bf16.msra.mxu0 %v1167
    %1177 = vmatmul.bf16.gmra.mxu0 %v1164
    %v1178 = vpop.f32.mrf.mxu0
    %v1179 = vadd.f32 0.0, %v1178
    %v1180 = vpop.f32.mrf.mxu0
    %1181 = vdwg.mxu0
    %v1182 = vrcp.pop %v1134
    %v1183 = vrcp.pop %v1137
    %v1184 = vmul.f32 %v1158, %v1182
    %v1185 = vmul.f32 %v1179, %v1183
    %v1186 = vld [vmem:[#allocation2] sm:$0xff]
    %v1187 = vld [vmem:[#allocation2 + $0x8] sm:$0xff]
    %v1188 = vpack.c.bf16 %v1185, %v1184
    %v1189 = vld [vmem:[#allocation11 + $0xc] sm:$0x3]
    %v1191 = vsel %vm212, %v1188, 0
    %v1194 = vsel %vm322, %v1189, 0
    %1196 = vmatpush.bf16.msra.mxu0 0
    %1197 = vmatpush.bf16.msra.mxu0 0
    %1198 = vmatpush.bf16.msra.mxu0 0
    %1199 = vmatpush.bf16.msra.mxu0 0
    %1200 = vmatpush.bf16.msra.mxu0 0
    %1201 = vmatpush.bf16.msra.mxu0 0
    %1202 = vmatpush.bf16.msra.mxu0 0
    %1203 = vmatpush.bf16.msra.mxu0 %v1194
    %1204 = vmatmul.bf16.gmra.mxu0 %v1191
    %v1205 = vpop.f32.mrf.mxu0
    %v1206 = vadd.f32 0.0, %v1205
    %v1207 = vpop.f32.mrf.mxu0
    %v1208 = vadd.f32 0.0, %v1207
    %1209 = vdwg.mxu0
    %v1210 = vadd.f32 %v1186, %v1206
    %v1211 = vadd.f32 %v1187, %v1208
    %1212 = vst.msk [vmem:[#allocation2] sm:$0xff] %vm126, %v1210
    %1213 = vst.msk [vmem:[#allocation2 + $0x8] sm:$0xff] %vm126, %v1211
    %1214 = vrot.lane.b32.xlu0 %v346, 100
    %v1215 = vpop.permute.xlu0 %1214
    %1216 = vrot.lane.b32.xlu0 %v351, 100
    %v1217 = vpop.permute.xlu0 %1216
    %v1219 = vsel %vm212, %v1215, 0
    %v1222 = vsel %vm212, %v1217, 0
    %1224 = vmatpush.bf16.xpose.msra.mxu0 0
    %1225 = vmatpush.bf16.xpose.msra.mxu0 0
    %1226 = vmatpush.bf16.xpose.msra.mxu0 0
    %1227 = vmatpush.bf16.xpose.msra.mxu0 0
    %1228 = vmatpush.bf16.xpose.msra.mxu0 0
    %1229 = vmatpush.bf16.xpose.msra.mxu0 0
    %1230 = vmatpush.bf16.xpose.msra.mxu0 0
    %1231 = vmatpush.bf16.xpose.msra.mxu0 %v1222
    %1232 = vmatmul.bf16.gmra.mxu0 %v1219
    %v1233 = vpop.f32.mrf.mxu0
    %v1234 = vadd.f32 0.0, %v1233
    %v1235 = vpop.f32.mrf.mxu0
    %1236 = vdwg.mxu0
    %1237 = vrot.lane.b32.xlu0 %v375, 100
    %v1238 = vpop.permute.xlu0 %1237
    %1239 = vrot.lane.b32.xlu0 %v380, 100
    %v1240 = vpop.permute.xlu0 %1239
    %v1242 = vsel %vm212, %v1238, 0
    %v1245 = vsel %vm212, %v1240, 0
    %1247 = vmatpush.bf16.xpose.msra.mxu0 0
    %1248 = vmatpush.bf16.xpose.msra.mxu0 0
    %1249 = vmatpush.bf16.xpose.msra.mxu0 0
    %1250 = vmatpush.bf16.xpose.msra.mxu0 0
    %1251 = vmatpush.bf16.xpose.msra.mxu0 0
    %1252 = vmatpush.bf16.xpose.msra.mxu0 0
    %1253 = vmatpush.bf16.xpose.msra.mxu0 0
    %1254 = vmatpush.bf16.xpose.msra.mxu0 %v1245
    %1255 = vmatmul.bf16.gmra.mxu0 %v1242
    %v1256 = vpop.f32.mrf.mxu0
    %v1257 = vadd.f32 0.0, %v1256
    %v1258 = vpop.f32.mrf.mxu0
    %1259 = vdwg.mxu0
    %v1260 = vsel %vm251, %v1234, -inf
    %1261 = vmax.xlane.f32.xlu0 %v1260
    %v1262 = vpop.xlane.xlu0 %1261
    %v1263 = vsel %vm251, %v1257, -inf
    %1264 = vmax.xlane.f32.xlu0 %v1263
    %v1265 = vpop.xlane.xlu0 %1264
    %v1266 = vsub.f32 %v1234, %v1262
    %v1267 = vsub.f32 %v1257, %v1265
    %v1268 = vmul.f32 %v1266, 1.442695
    %v1269 = vpow.pop %v1268
    %v1270 = vmul.f32 %v1267, 1.442695
    %v1271 = vpow.pop %v1270
    %v1272 = vsel %vm251, %v1269, 0.0
    %1273 = vadd.xlane.f32.xlu0 %v1272
    %v1274 = vpop.xlane.xlu0 %1273
    %v1275 = vsel %vm251, %v1271, 0.0
    %1276 = vadd.xlane.f32.xlu0 %v1275
    %v1277 = vpop.xlane.xlu0 %1276
    %v1278 = vpack.c.bf16 %v1269, %v1269
    %v1279 = vpack.c.bf16 %v1271, %v1271
    %1280 = vrot.lane.b32.xlu0 %v424, 100
    %v1281 = vpop.permute.xlu0 %1280
    %v1283 = vsel %vm251, %v1278, 0
    %v1286 = vsel %vm275, %v1281, 0
    %1288 = vmatpush.bf16.msra.mxu0 0
    %1289 = vmatpush.bf16.msra.mxu0 0
    %1290 = vmatpush.bf16.msra.mxu0 0
    %1291 = vmatpush.bf16.msra.mxu0 0
    %1292 = vmatpush.bf16.msra.mxu0 0
    %1293 = vmatpush.bf16.msra.mxu0 0
    %1294 = vmatpush.bf16.msra.mxu0 0
    %1295 = vmatpush.bf16.msra.mxu0 %v1286
    %1296 = vmatmul.bf16.gmra.mxu0 %v1283
    %v1297 = vpop.f32.mrf.mxu0
    %v1298 = vadd.f32 0.0, %v1297
    %v1299 = vpop.f32.mrf.mxu0
    %1300 = vdwg.mxu0
    %1301 = vrot.lane.b32.xlu0 %v448, 100
    %v1302 = vpop.permute.xlu0 %1301
    %v1304 = vsel %vm251, %v1279, 0
    %v1307 = vsel %vm275, %v1302, 0
    %1309 = vmatpush.bf16.msra.mxu0 0
    %1310 = vmatpush.bf16.msra.mxu0 0
    %1311 = vmatpush.bf16.msra.mxu0 0
    %1312 = vmatpush.bf16.msra.mxu0 0
    %1313 = vmatpush.bf16.msra.mxu0 0
    %1314 = vmatpush.bf16.msra.mxu0 0
    %1315 = vmatpush.bf16.msra.mxu0 0
    %1316 = vmatpush.bf16.msra.mxu0 %v1307
    %1317 = vmatmul.bf16.gmra.mxu0 %v1304
    %v1318 = vpop.f32.mrf.mxu0
    %v1319 = vadd.f32 0.0, %v1318
    %v1320 = vpop.f32.mrf.mxu0
    %1321 = vdwg.mxu0
    %v1322 = vrcp.pop %v1274
    %v1323 = vrcp.pop %v1277
    %v1324 = vmul.f32 %v1298, %v1322
    %v1325 = vmul.f32 %v1319, %v1323
    %v1326 = vld [vmem:[#allocation2] sm:$0xff]
    %v1327 = vld [vmem:[#allocation2 + $0x8] sm:$0xff]
    %v1328 = vpack.c.bf16 %v1325, %v1324
    %v1329 = vld [vmem:[#allocation11 + $0xc] sm:$0xc]
    %v1331 = vunpack.c.l.b16 %v1329
    %v1332 = vpack.c.b16 %v1331, %v1331
    %v1333 = vrot.slane %v1332, 2
    %v1335 = vsel %vm212, %v1328, 0
    %v1338 = vsel %vm322, %v1333, 0
    %1340 = vmatpush.bf16.msra.mxu0 0
    %1341 = vmatpush.bf16.msra.mxu0 0
    %1342 = vmatpush.bf16.msra.mxu0 0
    %1343 = vmatpush.bf16.msra.mxu0 0
    %1344 = vmatpush.bf16.msra.mxu0 0
    %1345 = vmatpush.bf16.msra.mxu0 0
    %1346 = vmatpush.bf16.msra.mxu0 0
    %1347 = vmatpush.bf16.msra.mxu0 %v1338
    %1348 = vmatmul.bf16.gmra.mxu0 %v1335
    %v1349 = vpop.f32.mrf.mxu0
    %v1350 = vadd.f32 0.0, %v1349
    %v1351 = vpop.f32.mrf.mxu0
    %v1352 = vadd.f32 0.0, %v1351
    %1353 = vdwg.mxu0
    %v1354 = vadd.f32 %v1326, %v1350
    %v1355 = vadd.f32 %v1327, %v1352
    %1356 = vst.msk [vmem:[#allocation2] sm:$0xff] %vm126, %v1354
    %1357 = vst.msk [vmem:[#allocation2 + $0x8] sm:$0xff] %vm126, %v1355
    %v1358 = vld [vmem:[#allocation2] sm:$0xff]
    %v1359 = vld [vmem:[#allocation2 + $0x8] sm:$0xff]
    %v1360 = vld [vmem:[%s5] sm:$0x1]
    %v1362 = vperm.slane %v1360, 0
    %v1364 = vadd.f32 %v1358, %v1362
    %v1365 = vadd.f32 %v1359, %v1362
    %1366 = vst.msk [vmem:[#allocation12] sm:$0xff] %vm126, %v1364
    %1367 = vst.msk [vmem:[#allocation12 + $0x8] sm:$0xff] %vm126, %v1365
    // Predicated region
    $region46: #{tpu_custom_call.1} parent=1 // pred_check
      _
    $region47: #{tpu_custom_call.1} parent=1 // pred_check_branch
      %1369 = sbr.rel (0) target = $region49
    $region48: #{tpu_custom_call.1} parent=1 // pred_region
      %1371 = vsyncadd [#allocation5], 0
      %s1372 = sshll.u32 [#allocation12], 4
      %s1373 = int_to_ptr.vmem [resolvable:$true] %s1372
      %s1374 = sshll.u32 %s6, 4
      %s1375 = int_to_ptr.hbm [resolvable:$true] %s1374
      %1380 = dma.vmem_to_hbm [thread:$0]  %s1373, 256, %s1375, [#allocation5], 128, 128, 8
    $region49: #{tpu_custom_call.1} parent=1 // pred_fallthru
      _
    // Predicated region
    $region50: #{tpu_custom_call.1} parent=1 // pred_check
      _
    $region51: #{tpu_custom_call.1} parent=1 // pred_check_branch
      %1382 = sbr.rel (0) target = $region53
    $region52: #{tpu_custom_call.1} parent=1 // pred_region
      %1384 = dma.done [#allocation5], 256
    $region53: #{tpu_custom_call.1} parent=1 // pred_fallthru
      _
    %1385 = vsyncpa [#allocation4], 1
    %1386 = vsyncpa [#allocation7], 1
    %1387 = vsyncpa [#allocation10], 1
    %1388 = vsyncpa [#allocation5], 1

// kernel: tpu_custom_call.1
$region0: #{tpu_custom_call.1}
  #allocation0 [shape = 'u32[]', space=smem, size = 0x4, offset = 0x4, fixed_abs, tag = 'smem constant byte address 0x4 - core index']
  #allocation1 [shape = 'u32[72,128]{1,0:T(1,128)}', space=vmem, size = 0x9000, scoped, tag = 'internal scratch']
  #allocation2 [shape = 'f32[16,32]{1,0:T(8,128)}', space=vmem, size = 0x2000, scoped, tag = 'scratch operand']
  %s0 = inlined_call_operand.hbm [shape: bf16[2,8,32], index: 0, kind: input, shape index: {}]
  %s1 = inlined_call_operand.hbm [shape: bf16[32,32], index: 1, kind: input, shape index: {}]
  %s2 = inlined_call_operand.hbm [shape: bf16[32,32], index: 2, kind: input, shape index: {}]
  %s3 = inlined_call_operand.hbm [shape: bf16[32,32], index: 3, kind: input, shape index: {}]
  %s4 = inlined_call_operand.hbm [shape: bf16[32,32], index: 4, kind: input, shape index: {}]
  %s5 = inlined_call_operand.vmem [shape: f32[1,32], index: 5, kind: input, shape index: {}]
  %s6 = inlined_call_operand.hbm [shape: f32[2,8,32], index: 6, kind: output, shape index: {}]
  %s7 = sld [smem:[#allocation0]]
  $region54: #{tpu_custom_call.1} parent=0
    _
  %s9 = ssub.s32 1, %s7
  %s10 = scalar_select 0, %s9, %s7
  $region1: #{tpu_custom_call.1} parent=0
    #allocation3 [shape = 'u8[4096]{0}', space=vmem, size = 0x1000, scoped, tag = 'input window, operand 0, single buffered']
    #allocation4 [shape = 's32[1]{0}', space=sflag, size = 0x4, scoped, tag = 'scoped memory for tpu_custom_call.1']
    #allocation5 [shape = 's32[1]{0}', space=sflag, size = 0x4, scoped, tag = 'scoped memory for tpu_custom_call.1']
    #allocation6 [shape = 'u8[8192]{0}', space=vmem, size = 0x2000, scoped, tag = 'input window, operand 1, single buffered']
    #allocation7 [shape = 's32[1]{0}', space=sflag, size = 0x4, scoped, tag = 'scoped memory for tpu_custom_call.1']
    #allocation8 [shape = 'u8[8192]{0}', space=vmem, size = 0x2000, scoped, tag = 'input window, operand 2, single buffered']
    #allocation9 [shape = 'u8[8192]{0}', space=vmem, size = 0x2000, scoped, tag = 'input window, operand 3, single buffered']
    #allocation10 [shape = 's32[1]{0}', space=sflag, size = 0x4, scoped, tag = 'scoped memory for tpu_custom_call.1']
    #allocation11 [shape = 'u8[8192]{0}', space=vmem, size = 0x2000, scoped, tag = 'input window, operand 4, single buffered']
    #allocation12 [shape = 'u8[8192]{0}', space=vmem, size = 0x2000, scoped, tag = 'output window, operand 0, single buffered']
    %11 = vsyncpa [#allocation4], 0
    %12 = vsyncpa [#allocation7], 0
    %13 = vsyncpa [#allocation10], 0
    %14 = vsyncpa [#allocation5], 0
    // Predicated region
    $region2: #{tpu_custom_call.1} parent=1 // pred_check
      _
    $region3: #{tpu_custom_call.1} parent=1 // pred_check_branch
      %16 = sbr.rel (0) target = $region5
    $region4: #{tpu_custom_call.1} parent=1 // pred_region
      %18 = vsyncadd [#allocation4], 0
      %s19 = sshll.u32 %s0, 4
      %s20 = int_to_ptr.hbm [resolvable:$true] %s19
      %s21 = sshll.u32 [#allocation3], 4
      %s22 = int_to_ptr.vmem [resolvable:$true] %s21
      %27 = dma.hbm_to_vmem [thread:$0]  %s20, 128, %s22, [#allocation4], 64, 64, 4
    $region5: #{tpu_custom_call.1} parent=1 // pred_fallthru
      _
    // Predicated region
    $region6: #{tpu_custom_call.1} parent=1 // pred_check
      _
    $region7: #{tpu_custom_call.1} parent=1 // pred_check_branch
      %29 = sbr.rel (0) target = $region9
    $region8: #{tpu_custom_call.1} parent=1 // pred_region
      %31 = vsyncadd [#allocation7], 0
      %s32 = sshll.u32 %s1, 4
      %s33 = int_to_ptr.hbm [resolvable:$true] %s32
      %s34 = sshll.u32 [#allocation6], 4
      %s35 = int_to_ptr.vmem [resolvable:$true] %s34
      %40 = dma.hbm_to_vmem [thread:$0]  %s33, 256, %s35, [#allocation7], 64, 64, 4
    $region9: #{tpu_custom_call.1} parent=1 // pred_fallthru
      _
    // Predicated region
    $region10: #{tpu_custom_call.1} parent=1 // pred_check
      _
    $region11: #{tpu_custom_call.1} parent=1 // pred_check_branch
      %42 = sbr.rel (0) target = $region13
    $region12: #{tpu_custom_call.1} parent=1 // pred_region
      %44 = vsyncadd [#allocation7], 0
      %s45 = sshll.u32 %s2, 4
      %s46 = int_to_ptr.hbm [resolvable:$true] %s45
      %s47 = sshll.u32 [#allocation8], 4
      %s48 = int_to_ptr.vmem [resolvable:$true] %s47
      %53 = dma.hbm_to_vmem [thread:$0]  %s46, 256, %s48, [#allocation7], 64, 64, 4
    $region13: #{tpu_custom_call.1} parent=1 // pred_fallthru
      _
    // Predicated region
    $region14: #{tpu_custom_call.1} parent=1 // pred_check
      _
    $region15: #{tpu_custom_call.1} parent=1 // pred_check_branch
      %55 = sbr.rel (0) target = $region17
    $region16: #{tpu_custom_call.1} parent=1 // pred_region
      %57 = vsyncadd [#allocation10], 0
      %s58 = sshll.u32 %s3, 4
      %s59 = int_to_ptr.hbm [resolvable:$true] %s58
      %s60 = sshll.u32 [#allocation9], 4
      %s61 = int_to_ptr.vmem [resolvable:$true] %s60
      %66 = dma.hbm_to_vmem [thread:$0]  %s59, 256, %s61, [#allocation10], 64, 64, 4
    $region17: #{tpu_custom_call.1} parent=1 // pred_fallthru
      _
    // Predicated region
    $region18: #{tpu_custom_call.1} parent=1 // pred_check
      _
    $region19: #{tpu_custom_call.1} parent=1 // pred_check_branch
      %68 = sbr.rel (0) target = $region21
    $region20: #{tpu_custom_call.1} parent=1 // pred_region
      %70 = vsyncadd [#allocation10], 0
      %s71 = sshll.u32 %s4, 4
      %s72 = int_to_ptr.hbm [resolvable:$true] %s71
      %s73 = sshll.u32 [#allocation11], 4
      %s74 = int_to_ptr.vmem [resolvable:$true] %s73
      %79 = dma.hbm_to_vmem [thread:$0]  %s72, 256, %s74, [#allocation10], 64, 64, 4
    $region21: #{tpu_custom_call.1} parent=1 // pred_fallthru
      _
    // Predicated region
    $region22: #{tpu_custom_call.1} parent=1 // pred_check
      _
    $region23: #{tpu_custom_call.1} parent=1 // pred_check_branch
      %81 = sbr.rel (0) target = $region25
    $region24: #{tpu_custom_call.1} parent=1 // pred_region
      _
    $region25: #{tpu_custom_call.1} parent=1 // pred_fallthru
      _
    // Predicated region
    $region26: #{tpu_custom_call.1} parent=1 // pred_check
      _
    $region27: #{tpu_custom_call.1} parent=1 // pred_check_branch
      %83 = sbr.rel (0) target = $region29
    $region28: #{tpu_custom_call.1} parent=1 // pred_region
      %85 = dma.done [#allocation4], 128
    $region29: #{tpu_custom_call.1} parent=1 // pred_fallthru
      _
    // Predicated region
    $region30: #{tpu_custom_call.1} parent=1 // pred_check
      _
    $region31: #{tpu_custom_call.1} parent=1 // pred_check_branch
      %87 = sbr.rel (0) target = $region33
    $region32: #{tpu_custom_call.1} parent=1 // pred_region
      %89 = dma.done [#allocation7], 256
    $region33: #{tpu_custom_call.1} parent=1 // pred_fallthru
      _
    // Predicated region
    $region34: #{tpu_custom_call.1} parent=1 // pred_check
      _
    $region35: #{tpu_custom_call.1} parent=1 // pred_check_branch
      %91 = sbr.rel (0) target = $region37
    $region36: #{tpu_custom_call.1} parent=1 // pred_region
      %93 = dma.done [#allocation7], 256
    $region37: #{tpu_custom_call.1} parent=1 // pred_fallthru
      _
    // Predicated region
    $region38: #{tpu_custom_call.1} parent=1 // pred_check
      _
    $region39: #{tpu_custom_call.1} parent=1 // pred_check_branch
      %95 = sbr.rel (0) target = $region41
    $region40: #{tpu_custom_call.1} parent=1 // pred_region
      %97 = dma.done [#allocation10], 256
    $region41: #{tpu_custom_call.1} parent=1 // pred_fallthru
      _
    // Predicated region
    $region42: #{tpu_custom_call.1} parent=1 // pred_check
      _
    $region43: #{tpu_custom_call.1} parent=1 // pred_check_branch
      %99 = sbr.rel (0) target = $region45
    $region44: #{tpu_custom_call.1} parent=1 // pred_region
      %101 = dma.done [#allocation10], 256
    $region45: #{tpu_custom_call.1} parent=1 // pred_fallthru
      _
    %v103 = vld [vmem:[#allocation3] sm:$0xf]
    %v104 = vld [vmem:[#allocation3 + $0x4] sm:$0xf]
    %v105 = vld [vmem:[#allocation6] sm:$0xf]
    %v106 = vld [vmem:[#allocation6 + $0x4] sm:$0xf]
    %v107 = vld [vmem:[#allocation6 + $0x8] sm:$0xf]
    %v108 = vld [vmem:[#allocation6 + $0xc] sm:$0xf]
    %v111 = vunpack.c.l.b16 %v103
    %v112 = vunpack.c.l.b16 %v104
    %v113 = vpack.c.b16 %v112, %v111
    %v118 = vunpack.c.l.b16 %v105
    %v119 = vunpack.c.l.b16 %v106
    %v120 = vunpack.c.l.b16 %v107
    %v121 = vunpack.c.l.b16 %v108
    %v122 = vpack.c.b16 %v119, %v118
    %v123 = vpack.c.b16 %v121, %v120
    %vm126 = vcmask 261120
    %v128 = vsel %vm126, %v113, 0
    %130 = vmatpush.bf16.msra.mxu0 0
    %131 = vmatpush.bf16.msra.mxu0 0
    %132 = vmatpush.bf16.msra.mxu0 0
    %133 = vmatpush.bf16.msra.mxu0 0
    %134 = vmatpush.bf16.msra.mxu0 0
    %135 = vmatpush.bf16.msra.mxu0 0
    %136 = vmatpush.bf16.msra.mxu0 %v123
    %137 = vmatpush.bf16.msra.mxu0 %v122
    %138 = vmatmul.bf16.gmra.mxu0 %v128
    %v139 = vpop.f32.mrf.mxu0
    %v140 = vadd.f32 0.0, %v139
    %v141 = vpop.f32.mrf.mxu0
    %v142 = vadd.f32 0.0, %v141
    %143 = vdwg.mxu0
    %v144 = vpack.c.bf16 %v140, %v140
    %v145 = vpack.c.bf16 %v142, %v142
    %v146 = vld [vmem:[#allocation8] sm:$0xf]
    %v147 = vld [vmem:[#allocation8 + $0x4] sm:$0xf]
    %v148 = vld [vmem:[#allocation8 + $0x8] sm:$0xf]
    %v149 = vld [vmem:[#allocation8 + $0xc] sm:$0xf]
    %v154 = vunpack.c.l.b16 %v146
    %v155 = vunpack.c.l.b16 %v147
    %v156 = vunpack.c.l.b16 %v148
    %v157 = vunpack.c.l.b16 %v149
    %v158 = vpack.c.b16 %v155, %v154
    %v159 = vpack.c.b16 %v157, %v156
    %162 = vmatpush.bf16.msra.mxu0 0
    %163 = vmatpush.bf16.msra.mxu0 0
    %164 = vmatpush.bf16.msra.mxu0 0
    %165 = vmatpush.bf16.msra.mxu0 0
    %166 = vmatpush.bf16.msra.mxu0 0
    %167 = vmatpush.bf16.msra.mxu0 0
    %168 = vmatpush.bf16.msra.mxu0 %v159
    %169 = vmatpush.bf16.msra.mxu0 %v158
    %170 = vmatmul.bf16.gmra.mxu0 %v128
    %v171 = vpop.f32.mrf.mxu0
    %v172 = vadd.f32 0.0, %v171
    %v173 = vpop.f32.mrf.mxu0
    %v174 = vadd.f32 0.0, %v173
    %175 = vdwg.mxu0
    %v176 = vpack.c.bf16 %v172, %v172
    %v177 = vpack.c.bf16 %v174, %v174
    %v178 = vld [vmem:[#allocation9] sm:$0xf]
    %v179 = vld [vmem:[#allocation9 + $0x4] sm:$0xf]
    %v180 = vld [vmem:[#allocation9 + $0x8] sm:$0xf]
    %v181 = vld [vmem:[#allocation9 + $0xc] sm:$0xf]
    %v186 = vunpack.c.l.b16 %v178
    %v187 = vunpack.c.l.b16 %v179
    %v188 = vunpack.c.l.b16 %v180
    %v189 = vunpack.c.l.b16 %v181
    %v190 = vpack.c.b16 %v187, %v186
    %v191 = vpack.c.b16 %v189, %v188
    %194 = vmatpush.bf16.msra.mxu0 0
    %195 = vmatpush.bf16.msra.mxu0 0
    %196 = vmatpush.bf16.msra.mxu0 0
    %197 = vmatpush.bf16.msra.mxu0 0
    %198 = vmatpush.bf16.msra.mxu0 0
    %199 = vmatpush.bf16.msra.mxu0 0
    %200 = vmatpush.bf16.msra.mxu0 %v191
    %201 = vmatpush.bf16.msra.mxu0 %v190
    %202 = vmatmul.bf16.gmra.mxu0 %v128
    %v203 = vpop.f32.mrf.mxu0
    %v204 = vadd.f32 0.0, %v203
    %v205 = vpop.f32.mrf.mxu0
    %v206 = vadd.f32 0.0, %v205
    %207 = vdwg.mxu0
    %v208 = vpack.c.bf16 %v204, %v204
    %v209 = vpack.c.bf16 %v206, %v206
    %210 = vst.msk [vmem:[#allocation2] sm:$0xff] %vm126, 0.0
    %211 = vst.msk [vmem:[#allocation2 + $0x8] sm:$0xff] %vm126, 0.0
    %vm212 = vcmask 31744
    %v214 = vsel %vm212, %v144, 0
    %v217 = vsel %vm212, %v176, 0
    %219 = vmatpush.bf16.xpose.msra.mxu0 0
    %220 = vmatpush.bf16.xpose.msra.mxu0 0
    %221 = vmatpush.bf16.xpose.msra.mxu0 0
    %222 = vmatpush.bf16.xpose.msra.mxu0 0
    %223 = vmatpush.bf16.xpose.msra.mxu0 0
    %224 = vmatpush.bf16.xpose.msra.mxu0 0
    %225 = vmatpush.bf16.xpose.msra.mxu0 0
    %226 = vmatpush.bf16.xpose.msra.mxu0 %v217
    %227 = vmatmul.bf16.gmra.mxu0 %v214
    %v228 = vpop.f32.mrf.mxu0
    %v229 = vadd.f32 0.0, %v228
    %v230 = vpop.f32.mrf.mxu0
    %231 = vdwg.mxu0
    %v233 = vsel %vm212, %v145, 0
    %v236 = vsel %vm212, %v177, 0
    %238 = vmatpush.bf16.xpose.msra.mxu0 0
    %239 = vmatpush.bf16.xpose.msra.mxu0 0
    %240 = vmatpush.bf16.xpose.msra.mxu0 0
    %241 = vmatpush.bf16.xpose.msra.mxu0 0
    %242 = vmatpush.bf16.xpose.msra.mxu0 0
    %243 = vmatpush.bf16.xpose.msra.mxu0 0
    %244 = vmatpush.bf16.xpose.msra.mxu0 0
    %245 = vmatpush.bf16.xpose.msra.mxu0 %v236
    %246 = vmatmul.bf16.gmra.mxu0 %v233
    %v247 = vpop.f32.mrf.mxu0
    %v248 = vadd.f32 0.0, %v247
    %v249 = vpop.f32.mrf.mxu0
    %250 = vdwg.mxu0
    %vm251 = vcmask 64512
    %v252 = vsel %vm251, %v229, -inf
    %253 = vmax.xlane.f32.xlu0 %v252
    %v254 = vpop.xlane.xlu0 %253
    %v255 = vsel %vm251, %v248, -inf
    %256 = vmax.xlane.f32.xlu0 %v255
    %v257 = vpop.xlane.xlu0 %256
    %v258 = vsub.f32 %v229, %v254
    %v259 = vsub.f32 %v248, %v257
    %v260 = vmul.f32 %v258, 1.442695
    %v261 = vpow.pop %v260
    %v262 = vmul.f32 %v259, 1.442695
    %v263 = vpow.pop %v262
    %v264 = vsel %vm251, %v261, 0.0
    %265 = vadd.xlane.f32.xlu0 %v264
    %v266 = vpop.xlane.xlu0 %265
    %v267 = vsel %vm251, %v263, 0.0
    %268 = vadd.xlane.f32.xlu0 %v267
    %v269 = vpop.xlane.xlu0 %268
    %v270 = vpack.c.bf16 %v261, %v261
    %v271 = vpack.c.bf16 %v263, %v263
    %v273 = vsel %vm251, %v270, 0
    %vm275 = vcmask 1043456
    %v277 = vsel %vm275, %v208, 0
    %279 = vmatpush.bf16.msra.mxu0 0
    %280 = vmatpush.bf16.msra.mxu0 0
    %281 = vmatpush.bf16.msra.mxu0 0
    %282 = vmatpush.bf16.msra.mxu0 0
    %283 = vmatpush.bf16.msra.mxu0 0
    %284 = vmatpush.bf16.msra.mxu0 0
    %285 = vmatpush.bf16.msra.mxu0 0
    %286 = vmatpush.bf16.msra.mxu0 %v277
    %287 = vmatmul.bf16.gmra.mxu0 %v273
    %v288 = vpop.f32.mrf.mxu0
    %v289 = vadd.f32 0.0, %v288
    %v290 = vpop.f32.mrf.mxu0
    %291 = vdwg.mxu0
    %v293 = vsel %vm251, %v271, 0
    %v296 = vsel %vm275, %v209, 0
    %298 = vmatpush.bf16.msra.mxu0 0
    %299 = vmatpush.bf16.msra.mxu0 0
    %300 = vmatpush.bf16.msra.mxu0 0
    %301 = vmatpush.bf16.msra.mxu0 0
    %302 = vmatpush.bf16.msra.mxu0 0
    %303 = vmatpush.bf16.msra.mxu0 0
    %304 = vmatpush.bf16.msra.mxu0 0
    %305 = vmatpush.bf16.msra.mxu0 %v296
    %306 = vmatmul.bf16.gmra.mxu0 %v293
    %v307 = vpop.f32.mrf.mxu0
    %v308 = vadd.f32 0.0, %v307
    %v309 = vpop.f32.mrf.mxu0
    %310 = vdwg.mxu0
    %v311 = vrcp.pop %v266
    %v312 = vrcp.pop %v269
    %v313 = vmul.f32 %v289, %v311
    %v314 = vmul.f32 %v308, %v312
    %v315 = vld [vmem:[#allocation2] sm:$0xff]
    %v316 = vld [vmem:[#allocation2 + $0x8] sm:$0xff]
    %v317 = vpack.c.bf16 %v314, %v313
    %v318 = vld [vmem:[#allocation11] sm:$0x3]
    %v320 = vsel %vm212, %v317, 0
    %vm322 = vcmask 1041408
    %v324 = vsel %vm322, %v318, 0
    %326 = vmatpush.bf16.msra.mxu0 0
    %327 = vmatpush.bf16.msra.mxu0 0
    %328 = vmatpush.bf16.msra.mxu0 0
    %329 = vmatpush.bf16.msra.mxu0 0
    %330 = vmatpush.bf16.msra.mxu0 0
    %331 = vmatpush.bf16.msra.mxu0 0
    %332 = vmatpush.bf16.msra.mxu0 0
    %333 = vmatpush.bf16.msra.mxu0 %v324
    %334 = vmatmul.bf16.gmra.mxu0 %v320
    %v335 = vpop.f32.mrf.mxu0
    %v336 = vadd.f32 0.0, %v335
    %v337 = vpop.f32.mrf.mxu0
    %v338 = vadd.f32 0.0, %v337
    %339 = vdwg.mxu0
    %v340 = vadd.f32 %v315, %v336
    %v341 = vadd.f32 %v316, %v338
    %342 = vst.msk [vmem:[#allocation2] sm:$0xff] %vm126, %v340
    %343 = vst.msk [vmem:[#allocation2 + $0x8] sm:$0xff] %vm126, %v341
    %v345 = vunpack.c.l.b16 %v144
    %v346 = vpack.c.b16 %v345, %v345
    %347 = vrot.lane.b32.xlu0 %v346, 124
    %v348 = vpop.permute.xlu0 %347
    %v350 = vunpack.c.l.b16 %v176
    %v351 = vpack.c.b16 %v350, %v350
    %352 = vrot.lane.b32.xlu0 %v351, 124
    %v353 = vpop.permute.xlu0 %352
    %v355 = vsel %vm212, %v348, 0
    %v358 = vsel %vm212, %v353, 0
    %360 = vmatpush.bf16.xpose.msra.mxu0 0
    %361 = vmatpush.bf16.xpose.msra.mxu0 0
    %362 = vmatpush.bf16.xpose.msra.mxu0 0
    %363 = vmatpush.bf16.xpose.msra.mxu0 0
    %364 = vmatpush.bf16.xpose.msra.mxu0 0
    %365 = vmatpush.bf16.xpose.msra.mxu0 0
    %366 = vmatpush.bf16.xpose.msra.mxu0 0
    %367 = vmatpush.bf16.xpose.msra.mxu0 %v358
    %368 = vmatmul.bf16.gmra.mxu0 %v355
    %v369 = vpop.f32.mrf.mxu0
    %v370 = vadd.f32 0.0, %v369
    %v371 = vpop.f32.mrf.mxu0
    %372 = vdwg.mxu0
    %v374 = vunpack.c.l.b16 %v145
    %v375 = vpack.c.b16 %v374, %v374
    %376 = vrot.lane.b32.xlu0 %v375, 124
    %v377 = vpop.permute.xlu0 %376
    %v379 = vunpack.c.l.b16 %v177
    %v380 = vpack.c.b16 %v379, %v379
    %381 = vrot.lane.b32.xlu0 %v380, 124
    %v382 = vpop.permute.xlu0 %381
    %v384 = vsel %vm212, %v377, 0
    %v387 = vsel %vm212, %v382, 0
    %389 = vmatpush.bf16.xpose.msra.mxu0 0
    %390 = vmatpush.bf16.xpose.msra.mxu0 0
    %391 = vmatpush.bf16.xpose.msra.mxu0 0
    %392 = vmatpush.bf16.xpose.msra.mxu0 0
    %393 = vmatpush.bf16.xpose.msra.mxu0 0
    %394 = vmatpush.bf16.xpose.msra.mxu0 0
    %395 = vmatpush.bf16.xpose.msra.mxu0 0
    %396 = vmatpush.bf16.xpose.msra.mxu0 %v387
    %397 = vmatmul.bf16.gmra.mxu0 %v384
    %v398 = vpop.f32.mrf.mxu0
    %v399 = vadd.f32 0.0, %v398
    %v400 = vpop.f32.mrf.mxu0
    %401 = vdwg.mxu0
    %v402 = vsel %vm251, %v370, -inf
    %403 = vmax.xlane.f32.xlu0 %v402
    %v404 = vpop.xlane.xlu0 %403
    %v405 = vsel %vm251, %v399, -inf
    %406 = vmax.xlane.f32.xlu0 %v405
    %v407 = vpop.xlane.xlu0 %406
    %v408 = vsub.f32 %v370, %v404
    %v409 = vsub.f32 %v399, %v407
    %v410 = vmul.f32 %v408, 1.442695
    %v411 = vpow.pop %v410
    %v412 = vmul.f32 %v409, 1.442695
    %v413 = vpow.pop %v412
    %v414 = vsel %vm251, %v411, 0.0
    %415 = vadd.xlane.f32.xlu0 %v414
    %v416 = vpop.xlane.xlu0 %415
    %v417 = vsel %vm251, %v413, 0.0
    %418 = vadd.xlane.f32.xlu0 %v417
    %v419 = vpop.xlane.xlu0 %418
    %v420 = vpack.c.bf16 %v411, %v411
    %v421 = vpack.c.bf16 %v413, %v413
    %v423 = vunpack.c.l.b16 %v208
    %v424 = vpack.c.b16 %v423, %v423
    %425 = vrot.lane.b32.xlu0 %v424, 124
    %v426 = vpop.permute.xlu0 %425
    %v428 = vsel %vm251, %v420, 0
    %v431 = vsel %vm275, %v426, 0
    %433 = vmatpush.bf16.msra.mxu0 0
    %434 = vmatpush.bf16.msra.mxu0 0
    %435 = vmatpush.bf16.msra.mxu0 0
    %436 = vmatpush.bf16.msra.mxu0 0
    %437 = vmatpush.bf16.msra.mxu0 0
    %438 = vmatpush.bf16.msra.mxu0 0
    %439 = vmatpush.bf16.msra.mxu0 0
    %440 = vmatpush.bf16.msra.mxu0 %v431
    %441 = vmatmul.bf16.gmra.mxu0 %v428
    %v442 = vpop.f32.mrf.mxu0
    %v443 = vadd.f32 0.0, %v442
    %v444 = vpop.f32.mrf.mxu0
    %445 = vdwg.mxu0
    %v447 = vunpack.c.l.b16 %v209
    %v448 = vpack.c.b16 %v447, %v447
    %449 = vrot.lane.b32.xlu0 %v448, 124
    %v450 = vpop.permute.xlu0 %449
    %v452 = vsel %vm251, %v421, 0
    %v455 = vsel %vm275, %v450, 0
    %457 = vmatpush.bf16.msra.mxu0 0
    %458 = vmatpush.bf16.msra.mxu0 0
    %459 = vmatpush.bf16.msra.mxu0 0
    %460 = vmatpush.bf16.msra.mxu0 0
    %461 = vmatpush.bf16.msra.mxu0 0
    %462 = vmatpush.bf16.msra.mxu0 0
    %463 = vmatpush.bf16.msra.mxu0 0
    %464 = vmatpush.bf16.msra.mxu0 %v455
    %465 = vmatmul.bf16.gmra.mxu0 %v452
    %v466 = vpop.f32.mrf.mxu0
    %v467 = vadd.f32 0.0, %v466
    %v468 = vpop.f32.mrf.mxu0
    %469 = vdwg.mxu0
    %v470 = vrcp.pop %v416
    %v471 = vrcp.pop %v419
    %v472 = vmul.f32 %v443, %v470
    %v473 = vmul.f32 %v467, %v471
    %v474 = vld [vmem:[#allocation2] sm:$0xff]
    %v475 = vld [vmem:[#allocation2 + $0x8] sm:$0xff]
    %v476 = vpack.c.bf16 %v473, %v472
    %v477 = vld [vmem:[#allocation11] sm:$0xc]
    %v479 = vunpack.c.l.b16 %v477
    %v480 = vpack.c.b16 %v479, %v479
    %v481 = vrot.slane %v480, 2
    %v483 = vsel %vm212, %v476, 0
    %v486 = vsel %vm322, %v481, 0
    %488 = vmatpush.bf16.msra.mxu0 0
    %489 = vmatpush.bf16.msra.mxu0 0
    %490 = vmatpush.bf16.msra.mxu0 0
    %491 = vmatpush.bf16.msra.mxu0 0
    %492 = vmatpush.bf16.msra.mxu0 0
    %493 = vmatpush.bf16.msra.mxu0 0
    %494 = vmatpush.bf16.msra.mxu0 0
    %495 = vmatpush.bf16.msra.mxu0 %v486
    %496 = vmatmul.bf16.gmra.mxu0 %v483
    %v497 = vpop.f32.mrf.mxu0
    %v498 = vadd.f32 0.0, %v497
    %v499 = vpop.f32.mrf.mxu0
    %v500 = vadd.f32 0.0, %v499
    %501 = vdwg.mxu0
    %v502 = vadd.f32 %v474, %v498
    %v503 = vadd.f32 %v475, %v500
    %504 = vst.msk [vmem:[#allocation2] sm:$0xff] %vm126, %v502
    %505 = vst.msk [vmem:[#allocation2 + $0x8] sm:$0xff] %vm126, %v503
    %506 = vrot.lane.b32.xlu0 %v346, 120
    %v507 = vpop.permute.xlu0 %506
    %508 = vrot.lane.b32.xlu0 %v351, 120
    %v509 = vpop.permute.xlu0 %508
    %v511 = vsel %vm212, %v507, 0
    %v514 = vsel %vm212, %v509, 0
    %516 = vmatpush.bf16.xpose.msra.mxu0 0
    %517 = vmatpush.bf16.xpose.msra.mxu0 0
    %518 = vmatpush.bf16.xpose.msra.mxu0 0
    %519 = vmatpush.bf16.xpose.msra.mxu0 0
    %520 = vmatpush.bf16.xpose.msra.mxu0 0
    %521 = vmatpush.bf16.xpose.msra.mxu0 0
    %522 = vmatpush.bf16.xpose.msra.mxu0 0
    %523 = vmatpush.bf16.xpose.msra.mxu0 %v514
    %524 = vmatmul.bf16.gmra.mxu0 %v511
    %v525 = vpop.f32.mrf.mxu0
    %v526 = vadd.f32 0.0, %v525
    %v527 = vpop.f32.mrf.mxu0
    %528 = vdwg.mxu0
    %529 = vrot.lane.b32.xlu0 %v375, 120
    %v530 = vpop.permute.xlu0 %529
    %531 = vrot.lane.b32.xlu0 %v380, 120
    %v532 = vpop.permute.xlu0 %531
    %v534 = vsel %vm212, %v530, 0
    %v537 = vsel %vm212, %v532, 0
    %539 = vmatpush.bf16.xpose.msra.mxu0 0
    %540 = vmatpush.bf16.xpose.msra.mxu0 0
    %541 = vmatpush.bf16.xpose.msra.mxu0 0
    %542 = vmatpush.bf16.xpose.msra.mxu0 0
    %543 = vmatpush.bf16.xpose.msra.mxu0 0
    %544 = vmatpush.bf16.xpose.msra.mxu0 0
    %545 = vmatpush.bf16.xpose.msra.mxu0 0
    %546 = vmatpush.bf16.xpose.msra.mxu0 %v537
    %547 = vmatmul.bf16.gmra.mxu0 %v534
    %v548 = vpop.f32.mrf.mxu0
    %v549 = vadd.f32 0.0, %v548
    %v550 = vpop.f32.mrf.mxu0
    %551 = vdwg.mxu0
    %v552 = vsel %vm251, %v526, -inf
    %553 = vmax.xlane.f32.xlu0 %v552
    %v554 = vpop.xlane.xlu0 %553
    %v555 = vsel %vm251, %v549, -inf
    %556 = vmax.xlane.f32.xlu0 %v555
    %v557 = vpop.xlane.xlu0 %556
    %v558 = vsub.f32 %v526, %v554
    %v559 = vsub.f32 %v549, %v557
    %v560 = vmul.f32 %v558, 1.442695
    %v561 = vpow.pop %v560
    %v562 = vmul.f32 %v559, 1.442695
    %v563 = vpow.pop %v562
    %v564 = vsel %vm251, %v561, 0.0
    %565 = vadd.xlane.f32.xlu0 %v564
    %v566 = vpop.xlane.xlu0 %565
    %v567 = vsel %vm251, %v563, 0.0
    %568 = vadd.xlane.f32.xlu0 %v567
    %v569 = vpop.xlane.xlu0 %568
    %v570 = vpack.c.bf16 %v561, %v561
    %v571 = vpack.c.bf16 %v563, %v563
    %572 = vrot.lane.b32.xlu0 %v424, 120
    %v573 = vpop.permute.xlu0 %572
    %v575 = vsel %vm251, %v570, 0
    %v578 = vsel %vm275, %v573, 0
    %580 = vmatpush.bf16.msra.mxu0 0
    %581 = vmatpush.bf16.msra.mxu0 0
    %582 = vmatpush.bf16.msra.mxu0 0
    %583 = vmatpush.bf16.msra.mxu0 0
    %584 = vmatpush.bf16.msra.mxu0 0
    %585 = vmatpush.bf16.msra.mxu0 0
    %586 = vmatpush.bf16.msra.mxu0 0
    %587 = vmatpush.bf16.msra.mxu0 %v578
    %588 = vmatmul.bf16.gmra.mxu0 %v575
    %v589 = vpop.f32.mrf.mxu0
    %v590 = vadd.f32 0.0, %v589
    %v591 = vpop.f32.mrf.mxu0
    %592 = vdwg.mxu0
    %593 = vrot.lane.b32.xlu0 %v448, 120
    %v594 = vpop.permute.xlu0 %593
    %v596 = vsel %vm251, %v571, 0
    %v599 = vsel %vm275, %v594, 0
    %601 = vmatpush.bf16.msra.mxu0 0
    %602 = vmatpush.bf16.msra.mxu0 0
    %603 = vmatpush.bf16.msra.mxu0 0
    %604 = vmatpush.bf16.msra.mxu0 0
    %605 = vmatpush.bf16.msra.mxu0 0
    %606 = vmatpush.bf16.msra.mxu0 0
    %607 = vmatpush.bf16.msra.mxu0 0
    %608 = vmatpush.bf16.msra.mxu0 %v599
    %609 = vmatmul.bf16.gmra.mxu0 %v596
    %v610 = vpop.f32.mrf.mxu0
    %v611 = vadd.f32 0.0, %v610
    %v612 = vpop.f32.mrf.mxu0
    %613 = vdwg.mxu0
    %v614 = vrcp.pop %v566
    %v615 = vrcp.pop %v569
    %v616 = vmul.f32 %v590, %v614
    %v617 = vmul.f32 %v611, %v615
    %v618 = vld [vmem:[#allocation2] sm:$0xff]
    %v619 = vld [vmem:[#allocation2 + $0x8] sm:$0xff]
    %v620 = vpack.c.bf16 %v617, %v616
    %v621 = vld [vmem:[#allocation11 + $0x4] sm:$0x3]
    %v623 = vsel %vm212, %v620, 0
    %v626 = vsel %vm322, %v621, 0
    %628 = vmatpush.bf16.msra.mxu0 0
    %629 = vmatpush.bf16.msra.mxu0 0
    %630 = vmatpush.bf16.msra.mxu0 0
    %631 = vmatpush.bf16.msra.mxu0 0
    %632 = vmatpush.bf16.msra.mxu0 0
    %633 = vmatpush.bf16.msra.mxu0 0
    %634 = vmatpush.bf16.msra.mxu0 0
    %635 = vmatpush.bf16.msra.mxu0 %v626
    %636 = vmatmul.bf16.gmra.mxu0 %v623
    %v637 = vpop.f32.mrf.mxu0
    %v638 = vadd.f32 0.0, %v637
    %v639 = vpop.f32.mrf.mxu0
    %v640 = vadd.f32 0.0, %v639
    %641 = vdwg.mxu0
    %v642 = vadd.f32 %v618, %v638
    %v643 = vadd.f32 %v619, %v640
    %644 = vst.msk [vmem:[#allocation2] sm:$0xff] %vm126, %v642
    %645 = vst.msk [vmem:[#allocation2 + $0x8] sm:$0xff] %vm126, %v643
    %646 = vrot.lane.b32.xlu0 %v346, 116
    %v647 = vpop.permute.xlu0 %646
    %648 = vrot.lane.b32.xlu0 %v351, 116
    %v649 = vpop.permute.xlu0 %648
    %v651 = vsel %vm212, %v647, 0
    %v654 = vsel %vm212, %v649, 0
    %656 = vmatpush.bf16.xpose.msra.mxu0 0
    %657 = vmatpush.bf16.xpose.msra.mxu0 0
    %658 = vmatpush.bf16.xpose.msra.mxu0 0
    %659 = vmatpush.bf16.xpose.msra.mxu0 0
    %660 = vmatpush.bf16.xpose.msra.mxu0 0
    %661 = vmatpush.bf16.xpose.msra.mxu0 0
    %662 = vmatpush.bf16.xpose.msra.mxu0 0
    %663 = vmatpush.bf16.xpose.msra.mxu0 %v654
    %664 = vmatmul.bf16.gmra.mxu0 %v651
    %v665 = vpop.f32.mrf.mxu0
    %v666 = vadd.f32 0.0, %v665
    %v667 = vpop.f32.mrf.mxu0
    %668 = vdwg.mxu0
    %669 = vrot.lane.b32.xlu0 %v375, 116
    %v670 = vpop.permute.xlu0 %669
    %671 = vrot.lane.b32.xlu0 %v380, 116
    %v672 = vpop.permute.xlu0 %671
    %v674 = vsel %vm212, %v670, 0
    %v677 = vsel %vm212, %v672, 0
    %679 = vmatpush.bf16.xpose.msra.mxu0 0
    %680 = vmatpush.bf16.xpose.msra.mxu0 0
    %681 = vmatpush.bf16.xpose.msra.mxu0 0
    %682 = vmatpush.bf16.xpose.msra.mxu0 0
    %683 = vmatpush.bf16.xpose.msra.mxu0 0
    %684 = vmatpush.bf16.xpose.msra.mxu0 0
    %685 = vmatpush.bf16.xpose.msra.mxu0 0
    %686 = vmatpush.bf16.xpose.msra.mxu0 %v677
    %687 = vmatmul.bf16.gmra.mxu0 %v674
    %v688 = vpop.f32.mrf.mxu0
    %v689 = vadd.f32 0.0, %v688
    %v690 = vpop.f32.mrf.mxu0
    %691 = vdwg.mxu0
    %v692 = vsel %vm251, %v666, -inf
    %693 = vmax.xlane.f32.xlu0 %v692
    %v694 = vpop.xlane.xlu0 %693
    %v695 = vsel %vm251, %v689, -inf
    %696 = vmax.xlane.f32.xlu0 %v695
    %v697 = vpop.xlane.xlu0 %696
    %v698 = vsub.f32 %v666, %v694
    %v699 = vsub.f32 %v689, %v697
    %v700 = vmul.f32 %v698, 1.442695
    %v701 = vpow.pop %v700
    %v702 = vmul.f32 %v699, 1.442695
    %v703 = vpow.pop %v702
    %v704 = vsel %vm251, %v701, 0.0
    %705 = vadd.xlane.f32.xlu0 %v704
    %v706 = vpop.xlane.xlu0 %705
    %v707 = vsel %vm251, %v703, 0.0
    %708 = vadd.xlane.f32.xlu0 %v707
    %v709 = vpop.xlane.xlu0 %708
    %v710 = vpack.c.bf16 %v701, %v701
    %v711 = vpack.c.bf16 %v703, %v703
    %712 = vrot.lane.b32.xlu0 %v424, 116
    %v713 = vpop.permute.xlu0 %712
    %v715 = vsel %vm251, %v710, 0
    %v718 = vsel %vm275, %v713, 0
    %720 = vmatpush.bf16.msra.mxu0 0
    %721 = vmatpush.bf16.msra.mxu0 0
    %722 = vmatpush.bf16.msra.mxu0 0
    %723 = vmatpush.bf16.msra.mxu0 0
    %724 = vmatpush.bf16.msra.mxu0 0
    %725 = vmatpush.bf16.msra.mxu0 0
    %726 = vmatpush.bf16.msra.mxu0 0
    %727 = vmatpush.bf16.msra.mxu0 %v718
    %728 = vmatmul.bf16.gmra.mxu0 %v715
    %v729 = vpop.f32.mrf.mxu0
    %v730 = vadd.f32 0.0, %v729
    %v731 = vpop.f32.mrf.mxu0
    %732 = vdwg.mxu0
    %733 = vrot.lane.b32.xlu0 %v448, 116
    %v734 = vpop.permute.xlu0 %733
    %v736 = vsel %vm251, %v711, 0
    %v739 = vsel %vm275, %v734, 0
    %741 = vmatpush.bf16.msra.mxu0 0
    %742 = vmatpush.bf16.msra.mxu0 0
    %743 = vmatpush.bf16.msra.mxu0 0
    %744 = vmatpush.bf16.msra.mxu0 0
    %745 = vmatpush.bf16.msra.mxu0 0
    %746 = vmatpush.bf16.msra.mxu0 0
    %747 = vmatpush.bf16.msra.mxu0 0
    %748 = vmatpush.bf16.msra.mxu0 %v739
    %749 = vmatmul.bf16.gmra.mxu0 %v736
    %v750 = vpop.f32.mrf.mxu0
    %v751 = vadd.f32 0.0, %v750
    %v752 = vpop.f32.mrf.mxu0
    %753 = vdwg.mxu0
    %v754 = vrcp.pop %v706
    %v755 = vrcp.pop %v709
    %v756 = vmul.f32 %v730, %v754
    %v757 = vmul.f32 %v751, %v755
    %v758 = vld [vmem:[#allocation2] sm:$0xff]
    %v759 = vld [vmem:[#allocation2 + $0x8] sm:$0xff]
    %v760 = vpack.c.bf16 %v757, %v756
    %v761 = vld [vmem:[#allocation11 + $0x4] sm:$0xc]
    %v763 = vunpack.c.l.b16 %v761
    %v764 = vpack.c.b16 %v763, %v763
    %v765 = vrot.slane %v764, 2
    %v767 = vsel %vm212, %v760, 0
    %v770 = vsel %vm322, %v765, 0
    %772 = vmatpush.bf16.msra.mxu0 0
    %773 = vmatpush.bf16.msra.mxu0 0
    %774 = vmatpush.bf16.msra.mxu0 0
    %775 = vmatpush.bf16.msra.mxu0 0
    %776 = vmatpush.bf16.msra.mxu0 0
    %777 = vmatpush.bf16.msra.mxu0 0
    %778 = vmatpush.bf16.msra.mxu0 0
    %779 = vmatpush.bf16.msra.mxu0 %v770
    %780 = vmatmul.bf16.gmra.mxu0 %v767
    %v781 = vpop.f32.mrf.mxu0
    %v782 = vadd.f32 0.0, %v781
    %v783 = vpop.f32.mrf.mxu0
    %v784 = vadd.f32 0.0, %v783
    %785 = vdwg.mxu0
    %v786 = vadd.f32 %v758, %v782
    %v787 = vadd.f32 %v759, %v784
    %788 = vst.msk [vmem:[#allocation2] sm:$0xff] %vm126, %v786
    %789 = vst.msk [vmem:[#allocation2 + $0x8] sm:$0xff] %vm126, %v787
    %790 = vrot.lane.b32.xlu0 %v346, 112
    %v791 = vpop.permute.xlu0 %790
    %792 = vrot.lane.b32.xlu0 %v351, 112
    %v793 = vpop.permute.xlu0 %792
    %v795 = vsel %vm212, %v791, 0
    %v798 = vsel %vm212, %v793, 0
    %800 = vmatpush.bf16.xpose.msra.mxu0 0
    %801 = vmatpush.bf16.xpose.msra.mxu0 0
    %802 = vmatpush.bf16.xpose.msra.mxu0 0
    %803 = vmatpush.bf16.xpose.msra.mxu0 0
    %804 = vmatpush.bf16.xpose.msra.mxu0 0
    %805 = vmatpush.bf16.xpose.msra.mxu0 0
    %806 = vmatpush.bf16.xpose.msra.mxu0 0
    %807 = vmatpush.bf16.xpose.msra.mxu0 %v798
    %808 = vmatmul.bf16.gmra.mxu0 %v795
    %v809 = vpop.f32.mrf.mxu0
    %v810 = vadd.f32 0.0, %v809
    %v811 = vpop.f32.mrf.mxu0
    %812 = vdwg.mxu0
    %813 = vrot.lane.b32.xlu0 %v375, 112
    %v814 = vpop.permute.xlu0 %813
    %815 = vrot.lane.b32.xlu0 %v380, 112
    %v816 = vpop.permute.xlu0 %815
    %v818 = vsel %vm212, %v814, 0
    %v821 = vsel %vm212, %v816, 0
    %823 = vmatpush.bf16.xpose.msra.mxu0 0
    %824 = vmatpush.bf16.xpose.msra.mxu0 0
    %825 = vmatpush.bf16.xpose.msra.mxu0 0
    %826 = vmatpush.bf16.xpose.msra.mxu0 0
    %827 = vmatpush.bf16.xpose.msra.mxu0 0
    %828 = vmatpush.bf16.xpose.msra.mxu0 0
    %829 = vmatpush.bf16.xpose.msra.mxu0 0
    %830 = vmatpush.bf16.xpose.msra.mxu0 %v821
    %831 = vmatmul.bf16.gmra.mxu0 %v818
    %v832 = vpop.f32.mrf.mxu0
    %v833 = vadd.f32 0.0, %v832
    %v834 = vpop.f32.mrf.mxu0
    %835 = vdwg.mxu0
    %v836 = vsel %vm251, %v810, -inf
    %837 = vmax.xlane.f32.xlu0 %v836
    %v838 = vpop.xlane.xlu0 %837
    %v839 = vsel %vm251, %v833, -inf
    %840 = vmax.xlane.f32.xlu0 %v839
    %v841 = vpop.xlane.xlu0 %840
    %v842 = vsub.f32 %v810, %v838
    %v843 = vsub.f32 %v833, %v841
    %v844 = vmul.f32 %v842, 1.442695
    %v845 = vpow.pop %v844
    %v846 = vmul.f32 %v843, 1.442695
    %v847 = vpow.pop %v846
    %v848 = vsel %vm251, %v845, 0.0
    %849 = vadd.xlane.f32.xlu0 %v848
    %v850 = vpop.xlane.xlu0 %849
    %v851 = vsel %vm251, %v847, 0.0
    %852 = vadd.xlane.f32.xlu0 %v851
    %v853 = vpop.xlane.xlu0 %852
    %v854 = vpack.c.bf16 %v845, %v845
    %v855 = vpack.c.bf16 %v847, %v847
    %856 = vrot.lane.b32.xlu0 %v424, 112
    %v857 = vpop.permute.xlu0 %856
    %v859 = vsel %vm251, %v854, 0
    %v862 = vsel %vm275, %v857, 0
    %864 = vmatpush.bf16.msra.mxu0 0
    %865 = vmatpush.bf16.msra.mxu0 0
    %866 = vmatpush.bf16.msra.mxu0 0
    %867 = vmatpush.bf16.msra.mxu0 0
    %868 = vmatpush.bf16.msra.mxu0 0
    %869 = vmatpush.bf16.msra.mxu0 0
    %870 = vmatpush.bf16.msra.mxu0 0
    %871 = vmatpush.bf16.msra.mxu0 %v862
    %872 = vmatmul.bf16.gmra.mxu0 %v859
    %v873 = vpop.f32.mrf.mxu0
    %v874 = vadd.f32 0.0, %v873
    %v875 = vpop.f32.mrf.mxu0
    %876 = vdwg.mxu0
    %877 = vrot.lane.b32.xlu0 %v448, 112
    %v878 = vpop.permute.xlu0 %877
    %v880 = vsel %vm251, %v855, 0
    %v883 = vsel %vm275, %v878, 0
    %885 = vmatpush.bf16.msra.mxu0 0
    %886 = vmatpush.bf16.msra.mxu0 0
    %887 = vmatpush.bf16.msra.mxu0 0
    %888 = vmatpush.bf16.msra.mxu0 0
    %889 = vmatpush.bf16.msra.mxu0 0
    %890 = vmatpush.bf16.msra.mxu0 0
    %891 = vmatpush.bf16.msra.mxu0 0
    %892 = vmatpush.bf16.msra.mxu0 %v883
    %893 = vmatmul.bf16.gmra.mxu0 %v880
    %v894 = vpop.f32.mrf.mxu0
    %v895 = vadd.f32 0.0, %v894
    %v896 = vpop.f32.mrf.mxu0
    %897 = vdwg.mxu0
    %v898 = vrcp.pop %v850
    %v899 = vrcp.pop %v853
    %v900 = vmul.f32 %v874, %v898
    %v901 = vmul.f32 %v895, %v899
    %v902 = vld [vmem:[#allocation2] sm:$0xff]
    %v903 = vld [vmem:[#allocation2 + $0x8] sm:$0xff]
    %v904 = vpack.c.bf16 %v901, %v900
    %v905 = vld [vmem:[#allocation11 + $0x8] sm:$0x3]
    %v907 = vsel %vm212, %v904, 0
    %v910 = vsel %vm322, %v905, 0
    %912 = vmatpush.bf16.msra.mxu0 0
    %913 = vmatpush.bf16.msra.mxu0 0
    %914 = vmatpush.bf16.msra.mxu0 0
    %915 = vmatpush.bf16.msra.mxu0 0
    %916 = vmatpush.bf16.msra.mxu0 0
    %917 = vmatpush.bf16.msra.mxu0 0
    %918 = vmatpush.bf16.msra.mxu0 0
    %919 = vmatpush.bf16.msra.mxu0 %v910
    %920 = vmatmul.bf16.gmra.mxu0 %v907
    %v921 = vpop.f32.mrf.mxu0
    %v922 = vadd.f32 0.0, %v921
    %v923 = vpop.f32.mrf.mxu0
    %v924 = vadd.f32 0.0, %v923
    %925 = vdwg.mxu0
    %v926 = vadd.f32 %v902, %v922
    %v927 = vadd.f32 %v903, %v924
    %928 = vst.msk [vmem:[#allocation2] sm:$0xff] %vm126, %v926
    %929 = vst.msk [vmem:[#allocation2 + $0x8] sm:$0xff] %vm126, %v927
    %930 = vrot.lane.b32.xlu0 %v346, 108
    %v931 = vpop.permute.xlu0 %930
    %932 = vrot.lane.b32.xlu0 %v351, 108
    %v933 = vpop.permute.xlu0 %932
    %v935 = vsel %vm212, %v931, 0
    %v938 = vsel %vm212, %v933, 0
    %940 = vmatpush.bf16.xpose.msra.mxu0 0
    %941 = vmatpush.bf16.xpose.msra.mxu0 0
    %942 = vmatpush.bf16.xpose.msra.mxu0 0
    %943 = vmatpush.bf16.xpose.msra.mxu0 0
    %944 = vmatpush.bf16.xpose.msra.mxu0 0
    %945 = vmatpush.bf16.xpose.msra.mxu0 0
    %946 = vmatpush.bf16.xpose.msra.mxu0 0
    %947 = vmatpush.bf16.xpose.msra.mxu0 %v938
    %948 = vmatmul.bf16.gmra.mxu0 %v935
    %v949 = vpop.f32.mrf.mxu0
    %v950 = vadd.f32 0.0, %v949
    %v951 = vpop.f32.mrf.mxu0
    %952 = vdwg.mxu0
    %953 = vrot.lane.b32.xlu0 %v375, 108
    %v954 = vpop.permute.xlu0 %953
    %955 = vrot.lane.b32.xlu0 %v380, 108
    %v956 = vpop.permute.xlu0 %955
    %v958 = vsel %vm212, %v954, 0
    %v961 = vsel %vm212, %v956, 0
    %963 = vmatpush.bf16.xpose.msra.mxu0 0
    %964 = vmatpush.bf16.xpose.msra.mxu0 0
    %965 = vmatpush.bf16.xpose.msra.mxu0 0
    %966 = vmatpush.bf16.xpose.msra.mxu0 0
    %967 = vmatpush.bf16.xpose.msra.mxu0 0
    %968 = vmatpush.bf16.xpose.msra.mxu0 0
    %969 = vmatpush.bf16.xpose.msra.mxu0 0
    %970 = vmatpush.bf16.xpose.msra.mxu0 %v961
    %971 = vmatmul.bf16.gmra.mxu0 %v958
    %v972 = vpop.f32.mrf.mxu0
    %v973 = vadd.f32 0.0, %v972
    %v974 = vpop.f32.mrf.mxu0
    %975 = vdwg.mxu0
    %v976 = vsel %vm251, %v950, -inf
    %977 = vmax.xlane.f32.xlu0 %v976
    %v978 = vpop.xlane.xlu0 %977
    %v979 = vsel %vm251, %v973, -inf
    %980 = vmax.xlane.f32.xlu0 %v979
    %v981 = vpop.xlane.xlu0 %980
    %v982 = vsub.f32 %v950, %v978
    %v983 = vsub.f32 %v973, %v981
    %v984 = vmul.f32 %v982, 1.442695
    %v985 = vpow.pop %v984
    %v986 = vmul.f32 %v983, 1.442695
    %v987 = vpow.pop %v986
    %v988 = vsel %vm251, %v985, 0.0
    %989 = vadd.xlane.f32.xlu0 %v988
    %v990 = vpop.xlane.xlu0 %989
    %v991 = vsel %vm251, %v987, 0.0
    %992 = vadd.xlane.f32.xlu0 %v991
    %v993 = vpop.xlane.xlu0 %992
    %v994 = vpack.c.bf16 %v985, %v985
    %v995 = vpack.c.bf16 %v987, %v987
    %996 = vrot.lane.b32.xlu0 %v424, 108
    %v997 = vpop.permute.xlu0 %996
    %v999 = vsel %vm251, %v994, 0
    %v1002 = vsel %vm275, %v997, 0
    %1004 = vmatpush.bf16.msra.mxu0 0
    %1005 = vmatpush.bf16.msra.mxu0 0
    %1006 = vmatpush.bf16.msra.mxu0 0
    %1007 = vmatpush.bf16.msra.mxu0 0
    %1008 = vmatpush.bf16.msra.mxu0 0
    %1009 = vmatpush.bf16.msra.mxu0 0
    %1010 = vmatpush.bf16.msra.mxu0 0
    %1011 = vmatpush.bf16.msra.mxu0 %v1002
    %1012 = vmatmul.bf16.gmra.mxu0 %v999
    %v1013 = vpop.f32.mrf.mxu0
    %v1014 = vadd.f32 0.0, %v1013
    %v1015 = vpop.f32.mrf.mxu0
    %1016 = vdwg.mxu0
    %1017 = vrot.lane.b32.xlu0 %v448, 108
    %v1018 = vpop.permute.xlu0 %1017
    %v1020 = vsel %vm251, %v995, 0
    %v1023 = vsel %vm275, %v1018, 0
    %1025 = vmatpush.bf16.msra.mxu0 0
    %1026 = vmatpush.bf16.msra.mxu0 0
    %1027 = vmatpush.bf16.msra.mxu0 0
    %1028 = vmatpush.bf16.msra.mxu0 0
    %1029 = vmatpush.bf16.msra.mxu0 0
    %1030 = vmatpush.bf16.msra.mxu0 0
    %1031 = vmatpush.bf16.msra.mxu0 0
    %1032 = vmatpush.bf16.msra.mxu0 %v1023
    %1033 = vmatmul.bf16.gmra.mxu0 %v1020
    %v1034 = vpop.f32.mrf.mxu0
    %v1035 = vadd.f32 0.0, %v1034
    %v1036 = vpop.f32.mrf.mxu0
    %1037 = vdwg.mxu0
    %v1038 = vrcp.pop %v990
    %v1039 = vrcp.pop %v993
    %v1040 = vmul.f32 %v1014, %v1038
    %v1041 = vmul.f32 %v1035, %v1039
    %v1042 = vld [vmem:[#allocation2] sm:$0xff]
    %v1043 = vld [vmem:[#allocation2 + $0x8] sm:$0xff]
    %v1044 = vpack.c.bf16 %v1041, %v1040
    %v1045 = vld [vmem:[#allocation11 + $0x8] sm:$0xc]
    %v1047 = vunpack.c.l.b16 %v1045
    %v1048 = vpack.c.b16 %v1047, %v1047
    %v1049 = vrot.slane %v1048, 2
    %v1051 = vsel %vm212, %v1044, 0
    %v1054 = vsel %vm322, %v1049, 0
    %1056 = vmatpush.bf16.msra.mxu0 0
    %1057 = vmatpush.bf16.msra.mxu0 0
    %1058 = vmatpush.bf16.msra.mxu0 0
    %1059 = vmatpush.bf16.msra.mxu0 0
    %1060 = vmatpush.bf16.msra.mxu0 0
    %1061 = vmatpush.bf16.msra.mxu0 0
    %1062 = vmatpush.bf16.msra.mxu0 0
    %1063 = vmatpush.bf16.msra.mxu0 %v1054
    %1064 = vmatmul.bf16.gmra.mxu0 %v1051
    %v1065 = vpop.f32.mrf.mxu0
    %v1066 = vadd.f32 0.0, %v1065
    %v1067 = vpop.f32.mrf.mxu0
    %v1068 = vadd.f32 0.0, %v1067
    %1069 = vdwg.mxu0
    %v1070 = vadd.f32 %v1042, %v1066
    %v1071 = vadd.f32 %v1043, %v1068
    %1072 = vst.msk [vmem:[#allocation2] sm:$0xff] %vm126, %v1070
    %1073 = vst.msk [vmem:[#allocation2 + $0x8] sm:$0xff] %vm126, %v1071
    %1074 = vrot.lane.b32.xlu0 %v346, 104
    %v1075 = vpop.permute.xlu0 %1074
    %1076 = vrot.lane.b32.xlu0 %v351, 104
    %v1077 = vpop.permute.xlu0 %1076
    %v1079 = vsel %vm212, %v1075, 0
    %v1082 = vsel %vm212, %v1077, 0
    %1084 = vmatpush.bf16.xpose.msra.mxu0 0
    %1085 = vmatpush.bf16.xpose.msra.mxu0 0
    %1086 = vmatpush.bf16.xpose.msra.mxu0 0
    %1087 = vmatpush.bf16.xpose.msra.mxu0 0
    %1088 = vmatpush.bf16.xpose.msra.mxu0 0
    %1089 = vmatpush.bf16.xpose.msra.mxu0 0
    %1090 = vmatpush.bf16.xpose.msra.mxu0 0
    %1091 = vmatpush.bf16.xpose.msra.mxu0 %v1082
    %1092 = vmatmul.bf16.gmra.mxu0 %v1079
    %v1093 = vpop.f32.mrf.mxu0
    %v1094 = vadd.f32 0.0, %v1093
    %v1095 = vpop.f32.mrf.mxu0
    %1096 = vdwg.mxu0
    %1097 = vrot.lane.b32.xlu0 %v375, 104
    %v1098 = vpop.permute.xlu0 %1097
    %1099 = vrot.lane.b32.xlu0 %v380, 104
    %v1100 = vpop.permute.xlu0 %1099
    %v1102 = vsel %vm212, %v1098, 0
    %v1105 = vsel %vm212, %v1100, 0
    %1107 = vmatpush.bf16.xpose.msra.mxu0 0
    %1108 = vmatpush.bf16.xpose.msra.mxu0 0
    %1109 = vmatpush.bf16.xpose.msra.mxu0 0
    %1110 = vmatpush.bf16.xpose.msra.mxu0 0
    %1111 = vmatpush.bf16.xpose.msra.mxu0 0
    %1112 = vmatpush.bf16.xpose.msra.mxu0 0
    %1113 = vmatpush.bf16.xpose.msra.mxu0 0
    %1114 = vmatpush.bf16.xpose.msra.mxu0 %v1105
    %1115 = vmatmul.bf16.gmra.mxu0 %v1102
    %v1116 = vpop.f32.mrf.mxu0
    %v1117 = vadd.f32 0.0, %v1116
    %v1118 = vpop.f32.mrf.mxu0
    %1119 = vdwg.mxu0
    %v1120 = vsel %vm251, %v1094, -inf
    %1121 = vmax.xlane.f32.xlu0 %v1120
    %v1122 = vpop.xlane.xlu0 %1121
    %v1123 = vsel %vm251, %v1117, -inf
    %1124 = vmax.xlane.f32.xlu0 %v1123
    %v1125 = vpop.xlane.xlu0 %1124
    %v1126 = vsub.f32 %v1094, %v1122
    %v1127 = vsub.f32 %v1117, %v1125
    %v1128 = vmul.f32 %v1126, 1.442695
    %v1129 = vpow.pop %v1128
    %v1130 = vmul.f32 %v1127, 1.442695
    %v1131 = vpow.pop %v1130
    %v1132 = vsel %vm251, %v1129, 0.0
    %1133 = vadd.xlane.f32.xlu0 %v1132
    %v1134 = vpop.xlane.xlu0 %1133
    %v1135 = vsel %vm251, %v1131, 0.0
    %1136 = vadd.xlane.f32.xlu0 %v1135
    %v1137 = vpop.xlane.xlu0 %1136
    %v1138 = vpack.c.bf16 %v1129, %v1129
    %v1139 = vpack.c.bf16 %v1131, %v1131
    %1140 = vrot.lane.b32.xlu0 %v424, 104
    %v1141 = vpop.permute.xlu0 %1140
    %v1143 = vsel %vm251, %v1138, 0
    %v1146 = vsel %vm275, %v1141, 0
    %1148 = vmatpush.bf16.msra.mxu0 0
    %1149 = vmatpush.bf16.msra.mxu0 0
    %1150 = vmatpush.bf16.msra.mxu0 0
    %1151 = vmatpush.bf16.msra.mxu0 0
    %1152 = vmatpush.bf16.msra.mxu0 0
    %1153 = vmatpush.bf16.msra.mxu0 0
    %1154 = vmatpush.bf16.msra.mxu0 0
    %1155 = vmatpush.bf16.msra.mxu0 %v1146
    %1156 = vmatmul.bf16.gmra.mxu0 %v1143
    %v1157 = vpop.f32.mrf.mxu0
    %v1158 = vadd.f32 0.0, %v1157
    %v1159 = vpop.f32.mrf.mxu0
    %1160 = vdwg.mxu0
    %1161 = vrot.lane.b32.xlu0 %v448, 104
    %v1162 = vpop.permute.xlu0 %1161
    %v1164 = vsel %vm251, %v1139, 0
    %v1167 = vsel %vm275, %v1162, 0
    %1169 = vmatpush.bf16.msra.mxu0 0
    %1170 = vmatpush.bf16.msra.mxu0 0
    %1171 = vmatpush.bf16.msra.mxu0 0
    %1172 = vmatpush.bf16.msra.mxu0 0
    %1173 = vmatpush.bf16.msra.mxu0 0
    %1174 = vmatpush.bf16.msra.mxu0 0
    %1175 = vmatpush.bf16.msra.mxu0 0
    %1176 = vmatpush.bf16.msra.mxu0 %v1167
    %1177 = vmatmul.bf16.gmra.mxu0 %v1164
    %v1178 = vpop.f32.mrf.mxu0
    %v1179 = vadd.f32 0.0, %v1178
    %v1180 = vpop.f32.mrf.mxu0
    %1181 = vdwg.mxu0
    %v1182 = vrcp.pop %v1134
    %v1183 = vrcp.pop %v1137
    %v1184 = vmul.f32 %v1158, %v1182
    %v1185 = vmul.f32 %v1179, %v1183
    %v1186 = vld [vmem:[#allocation2] sm:$0xff]
    %v1187 = vld [vmem:[#allocation2 + $0x8] sm:$0xff]
    %v1188 = vpack.c.bf16 %v1185, %v1184
    %v1189 = vld [vmem:[#allocation11 + $0xc] sm:$0x3]
    %v1191 = vsel %vm212, %v1188, 0
    %v1194 = vsel %vm322, %v1189, 0
    %1196 = vmatpush.bf16.msra.mxu0 0
    %1197 = vmatpush.bf16.msra.mxu0 0
    %1198 = vmatpush.bf16.msra.mxu0 0
    %1199 = vmatpush.bf16.msra.mxu0 0
    %1200 = vmatpush.bf16.msra.mxu0 0
    %1201 = vmatpush.bf16.msra.mxu0 0
    %1202 = vmatpush.bf16.msra.mxu0 0
    %1203 = vmatpush.bf16.msra.mxu0 %v1194
    %1204 = vmatmul.bf16.gmra.mxu0 %v1191
    %v1205 = vpop.f32.mrf.mxu0
    %v1206 = vadd.f32 0.0, %v1205
    %v1207 = vpop.f32.mrf.mxu0
    %v1208 = vadd.f32 0.0, %v1207
    %1209 = vdwg.mxu0
    %v1210 = vadd.f32 %v1186, %v1206
    %v1211 = vadd.f32 %v1187, %v1208
    %1212 = vst.msk [vmem:[#allocation2] sm:$0xff] %vm126, %v1210
    %1213 = vst.msk [vmem:[#allocation2 + $0x8] sm:$0xff] %vm126, %v1211
    %1214 = vrot.lane.b32.xlu0 %v346, 100
    %v1215 = vpop.permute.xlu0 %1214
    %1216 = vrot.lane.b32.xlu0 %v351, 100
    %v1217 = vpop.permute.xlu0 %1216
    %v1219 = vsel %vm212, %v1215, 0
    %v1222 = vsel %vm212, %v1217, 0
    %1224 = vmatpush.bf16.xpose.msra.mxu0 0
    %1225 = vmatpush.bf16.xpose.msra.mxu0 0
    %1226 = vmatpush.bf16.xpose.msra.mxu0 0
    %1227 = vmatpush.bf16.xpose.msra.mxu0 0
    %1228 = vmatpush.bf16.xpose.msra.mxu0 0
    %1229 = vmatpush.bf16.xpose.msra.mxu0 0
    %1230 = vmatpush.bf16.xpose.msra.mxu0 0
    %1231 = vmatpush.bf16.xpose.msra.mxu0 %v1222
    %1232 = vmatmul.bf16.gmra.mxu0 %v1219
    %v1233 = vpop.f32.mrf.mxu0
    %v1234 = vadd.f32 0.0, %v1233
    %v1235 = vpop.f32.mrf.mxu0
    %1236 = vdwg.mxu0
    %1237 = vrot.lane.b32.xlu0 %v375, 100
    %v1238 = vpop.permute.xlu0 %1237
    %1239 = vrot.lane.b32.xlu0 %v380, 100
    %v1240 = vpop.permute.xlu0 %1239
    %v1242 = vsel %vm212, %v1238, 0
    %v1245 = vsel %vm212, %v1240, 0
    %1247 = vmatpush.bf16.xpose.msra.mxu0 0
    %1248 = vmatpush.bf16.xpose.msra.mxu0 0
    %1249 = vmatpush.bf16.xpose.msra.mxu0 0
    %1250 = vmatpush.bf16.xpose.msra.mxu0 0
    %1251 = vmatpush.bf16.xpose.msra.mxu0 0
    %1252 = vmatpush.bf16.xpose.msra.mxu0 0
    %1253 = vmatpush.bf16.xpose.msra.mxu0 0
    %1254 = vmatpush.bf16.xpose.msra.mxu0 %v1245
    %1255 = vmatmul.bf16.gmra.mxu0 %v1242
    %v1256 = vpop.f32.mrf.mxu0
    %v1257 = vadd.f32 0.0, %v1256
    %v1258 = vpop.f32.mrf.mxu0
    %1259 = vdwg.mxu0
    %v1260 = vsel %vm251, %v1234, -inf
    %1261 = vmax.xlane.f32.xlu0 %v1260
    %v1262 = vpop.xlane.xlu0 %1261
    %v1263 = vsel %vm251, %v1257, -inf
    %1264 = vmax.xlane.f32.xlu0 %v1263
    %v1265 = vpop.xlane.xlu0 %1264
    %v1266 = vsub.f32 %v1234, %v1262
    %v1267 = vsub.f32 %v1257, %v1265
    %v1268 = vmul.f32 %v1266, 1.442695
    %v1269 = vpow.pop %v1268
    %v1270 = vmul.f32 %v1267, 1.442695
    %v1271 = vpow.pop %v1270
    %v1272 = vsel %vm251, %v1269, 0.0
    %1273 = vadd.xlane.f32.xlu0 %v1272
    %v1274 = vpop.xlane.xlu0 %1273
    %v1275 = vsel %vm251, %v1271, 0.0
    %1276 = vadd.xlane.f32.xlu0 %v1275
    %v1277 = vpop.xlane.xlu0 %1276
    %v1278 = vpack.c.bf16 %v1269, %v1269
    %v1279 = vpack.c.bf16 %v1271, %v1271
    %1280 = vrot.lane.b32.xlu0 %v424, 100
    %v1281 = vpop.permute.xlu0 %1280
    %v1283 = vsel %vm251, %v1278, 0
    %v1286 = vsel %vm275, %v1281, 0
    %1288 = vmatpush.bf16.msra.mxu0 0
    %1289 = vmatpush.bf16.msra.mxu0 0
    %1290 = vmatpush.bf16.msra.mxu0 0
    %1291 = vmatpush.bf16.msra.mxu0 0
    %1292 = vmatpush.bf16.msra.mxu0 0
    %1293 = vmatpush.bf16.msra.mxu0 0
    %1294 = vmatpush.bf16.msra.mxu0 0
    %1295 = vmatpush.bf16.msra.mxu0 %v1286
    %1296 = vmatmul.bf16.gmra.mxu0 %v1283
    %v1297 = vpop.f32.mrf.mxu0
    %v1298 = vadd.f32 0.0, %v1297
    %v1299 = vpop.f32.mrf.mxu0
    %1300 = vdwg.mxu0
    %1301 = vrot.lane.b32.xlu0 %v448, 100
    %v1302 = vpop.permute.xlu0 %1301
    %v1304 = vsel %vm251, %v1279, 0
    %v1307 = vsel %vm275, %v1302, 0
    %1309 = vmatpush.bf16.msra.mxu0 0
    %1310 = vmatpush.bf16.msra.mxu0 0
    %1311 = vmatpush.bf16.msra.mxu0 0
    %1312 = vmatpush.bf16.msra.mxu0 0
    %1313 = vmatpush.bf16.msra.mxu0 0
    %1314 = vmatpush.bf16.msra.mxu0 0
    %1315 = vmatpush.bf16.msra.mxu0 0
    %1316 = vmatpush.bf16.msra.mxu0 %v1307
    %1317 = vmatmul.bf16.gmra.mxu0 %v1304
    %v1318 = vpop.f32.mrf.mxu0
    %v1319 = vadd.f32 0.0, %v1318
    %v1320 = vpop.f32.mrf.mxu0
    %1321 = vdwg.mxu0
    %v1322 = vrcp.pop %v1274
    %v1323 = vrcp.pop %v1277
    %v1324 = vmul.f32 %v1298, %v1322
    %v1325 = vmul.f32 %v1319, %v1323
    %v1326 = vld [vmem:[#allocation2] sm:$0xff]
    %v1327 = vld [vmem:[#allocation2 + $0x8] sm:$0xff]
    %v1328 = vpack.c.bf16 %v1325, %v1324
    %v1329 = vld [vmem:[#allocation11 + $0xc] sm:$0xc]
    %v1331 = vunpack.c.l.b16 %v1329
    %v1332 = vpack.c.b16 %v1331, %v1331
    %v1333 = vrot.slane %v1332, 2
    %v1335 = vsel %vm212, %v1328, 0
    %v1338 = vsel %vm322, %v1333, 0
    %1340 = vmatpush.bf16.msra.mxu0 0
    %1341 = vmatpush.bf16.msra.mxu0 0
    %1342 = vmatpush.bf16.msra.mxu0 0
    %1343 = vmatpush.bf16.msra.mxu0 0
    %1344 = vmatpush.bf16.msra.mxu0 0
    %1345 = vmatpush.bf16.msra.mxu0 0
    %1346 = vmatpush.bf16.msra.mxu0 0
    %1347 = vmatpush.bf16.msra.mxu0 %v1338
    %1348 = vmatmul.bf16.gmra.mxu0 %v1335
    %v1349 = vpop.f32.mrf.mxu0
    %v1350 = vadd.f32 0.0, %v1349
    %v1351 = vpop.f32.mrf.mxu0
    %v1352 = vadd.f32 0.0, %v1351
    %1353 = vdwg.mxu0
    %v1354 = vadd.f32 %v1326, %v1350
    %v1355 = vadd.f32 %v1327, %v1352
    %1356 = vst.msk [vmem:[#allocation2] sm:$0xff] %vm126, %v1354
    %1357 = vst.msk [vmem:[#allocation2 + $0x8] sm:$0xff] %vm126, %v1355
    %v1358 = vld [vmem:[#allocation2] sm:$0xff]
    %v1359 = vld [vmem:[#allocation2 + $0x8] sm:$0xff]
    %v1360 = vld [vmem:[%s5] sm:$0x1]
    %v1362 = vperm.slane %v1360, 0
    %v1364 = vadd.f32 %v1358, %v1362
    %v1365 = vadd.f32 %v1359, %v1362
    %1366 = vst.msk [vmem:[#allocation12] sm:$0xff] %vm126, %v1364
    %1367 = vst.msk [vmem:[#allocation12 + $0x8] sm:$0xff] %vm126, %v1365
    // Predicated region
    $region46: #{tpu_custom_call.1} parent=1 // pred_check
      _
    $region47: #{tpu_custom_call.1} parent=1 // pred_check_branch
      %1369 = sbr.rel (0) target = $region49
    $region48: #{tpu_custom_call.1} parent=1 // pred_region
      %1371 = vsyncadd [#allocation5], 0
      %s1372 = sshll.u32 [#allocation12], 4
      %s1373 = int_to_ptr.vmem [resolvable:$true] %s1372
      %s1374 = sshll.u32 %s6, 4
      %s1375 = int_to_ptr.hbm [resolvable:$true] %s1374
      %1380 = dma.vmem_to_hbm [thread:$0]  %s1373, 256, %s1375, [#allocation5], 128, 128, 8
    $region49: #{tpu_custom_call.1} parent=1 // pred_fallthru
      _
    // Predicated region
    $region50: #{tpu_custom_call.1} parent=1 // pred_check
      _
    $region51: #{tpu_custom_call.1} parent=1 // pred_check_branch
      %1382 = sbr.rel (0) target = $region53
    $region52: #{tpu_custom_call.1} parent=1 // pred_region
      %1384 = dma.done [#allocation5], 256
    $region53: #{tpu_custom_call.1} parent=1 // pred_fallthru
      _
    %1385 = vsyncpa [#allocation4], 1
    %1386 = vsyncpa [#allocation7], 1
    %1387 = vsyncpa [#allocation10], 1
    %1388 = vsyncpa [#allocation5], 1

</llo_original>
